<compile_context>
chip_gen: v7x
topology: tpu7x:2x2x1
jax: 0.10.0
libtpu: 0.0.40
codegen_flags: <defaults>
</compile_context>

<pallas_src>
import jax
import jax.numpy as jnp
from jax.experimental import pallas as pl
from jax.experimental.pallas import tpu as pltpu

NEG_SLOPE = 0.01   # nn.LeakyReLU(negative_slope=0.01)
EPS = 1e-5         # nn.InstanceNorm2d default eps


# ---------------------------------------------------------------------------
# tiling helpers
# ---------------------------------------------------------------------------
def _pick_tile_m(total, cap):
    """Largest divisor of `total` that is a multiple of 8 and <= cap;
    falls back to the full extent (always legal w.r.t. the (8,128) rule)."""
    cap = max(8, min(total, cap))
    for t in range(cap, 7, -1):
        if total % t == 0 and t % 8 == 0:
            return t
    return total


def _conv_tile_rows(H, W, Cin, Cout, requested, budget_bytes=10 << 20):
    """Row tile for the conv kernel: a divisor of H that is a multiple of 8
    (or H itself), <= the requested cap, and whose estimated VMEM footprint
    (double-buffered bf16 strip + slab scratch + double-buffered bf16 output
    + f32 accumulator + weights) fits `budget_bytes`."""
    cap = requested if requested is not None else 32

    def vmem_need(th):
        strip = 2 * (th + 2) * (W + 2) * Cin * 2   # double-buffered bf16 strip
        slab = (th + 2) * W * 3 * Cin * 2          # dx-expanded VMEM scratch
        yout = 2 * th * W * Cout * 2               # double-buffered bf16 y
        accs = 2 * th * W * Cout * 4               # f32 accumulator + temps
        wgt = 2 * 9 * Cin * Cout * 2
        return strip + slab + yout + accs + wgt

    cands = [t for t in range(1, H + 1) if H % t == 0 and (t % 8 == 0 or t == H)]
    fitting = [t for t in cands if t <= cap and vmem_need(t) <= budget_bytes]
    if fitting:
        return max(fitting)
    fitting = [t for t in cands if vmem_need(t) <= budget_bytes]
    return min(fitting) if fitting else min(cands)


def _build_strips(x_nhwc, tile_rows):
    """(N, H, W, C) -> (N*S, TH+2, W+2, C) overlapping row strips with a
    1-pixel zero halo (S = H // TH).  Only the 2-row halo is duplicated
    (~1.06-1.25x), not the old 9x im2col expansion."""
    n, h, w, c = x_nhwc.shape
    s = h // tile_rows
    xp = jnp.pad(x_nhwc, ((0, 0), (1, 1), (1, 1), (0, 0)))
    windows = [xp[:, i * tile_rows:i * tile_rows + tile_rows + 2] for i in range(s)]
    st = jnp.stack(windows, axis=1)                    # (N, S, TH+2, W+2, C)
    return st.reshape(n * s, tile_rows + 2, w + 2, c)


# ---------------------------------------------------------------------------
# Pallas kernels
# ---------------------------------------------------------------------------
def _upconv_kernel(x_ref, w_ref, b_ref, o_ref):
    # x_ref: (TM, Cin) bf16, w_ref: (Cin, 4*Cout) bf16, b_ref: (1, 4*Cout) f32
    # o_ref: (TM, 4*Cout) bf16
    y = jnp.dot(x_ref[...], w_ref[...], preferred_element_type=jnp.float32)
    o_ref[...] = (y + b_ref[...]).astype(o_ref.dtype)


def _make_conv_kernel(TH, W, Cin, Cout):
    """3x3 conv (pad=1) + LeakyReLU on one row strip.
    K-folded MXU: 3 matmuls with K=3*Cin (one per dy) against a dx-expanded
    slab held in a pinned VMEM scratch.  Emits bf16 output plus per-strip
    f32 (sum, centred-M2) stats for the exact two-pass InstanceNorm."""
    inv_p = 1.0 / float(TH * W)

    def kernel(x_ref, w_ref, b_ref, y_ref, ssum_ref, m2_ref, slab_ref):
        # x_ref   : (1, TH+2, W+2, Cin) bf16   strip with 1-px halo
        # w_ref   : (3, 3*Cin, Cout)    bf16   [dy, dx*Cin+cin, cout]
        # b_ref   : (1, Cout)           f32
        # y_ref   : (1, TH*W, Cout)     bf16
        # ssum_ref, m2_ref : (1, 1, Cout) f32  per-strip stats
        # slab_ref: (TH+2, W, 3*Cin)    bf16   VMEM scratch (dx expansion)

        # dx expansion: 3 shifted copies (down from 9 windowed relayouts).
        for dx in range(3):
            slab_ref[:, :, dx * Cin:(dx + 1) * Cin] = x_ref[0, :, dx:dx + W, :]

        def dy_slab(dy):
            # Contiguous leading-dim slice; reshape is layout-free when W%8==0.
            return slab_ref[dy:dy + TH, :, :].reshape(TH * W, 3 * Cin)

        # 3 accumulating MXU matmuls with K = 3*Cin (MXU stays well fed).
        acc = jnp.dot(dy_slab(0), w_ref[0], preferred_element_type=jnp.float32)
        acc = acc + jnp.dot(dy_slab(1), w_ref[1], preferred_element_type=jnp.float32)
        acc = acc + jnp.dot(dy_slab(2), w_ref[2], preferred_element_type=jnp.float32)

        y = acc + b_ref[...]
        y = jnp.where(y > 0, y, NEG_SLOPE * y)          # LeakyReLU
        y_ref[0] = y.astype(y_ref.dtype)                # bf16 writeback

        # Per-strip stats in f32: raw sum + CENTRED second moment (no
        # E[x^2]-E[x]^2 cancellation); combined exactly in the wrapper.
        row_sum = jnp.sum(y, axis=0, keepdims=True)     # (1, Cout)
        d = y - row_sum * inv_p
        ssum_ref[0] = row_sum
        m2_ref[0] = jnp.sum(d * d, axis=0, keepdims=True)

    return kernel


# ---------------------------------------------------------------------------
# Wrappers around pallas_call
# ---------------------------------------------------------------------------
def upconv_transpose2x2(x_nhwc, w_iokk, bias, *, tile_m=None):
    """ConvTranspose2d(kernel=2, stride=2).  w_iokk: (Cin, Cout, 2, 2)."""
    N, H, W, Cin = x_nhwc.shape
    Cout = w_iokk.shape[1]
    M = N * H * W
    TM = _pick_tile_m(M, tile_m if tile_m is not None else 1024)

    x_flat = x_nhwc.reshape(M, Cin).astype(jnp.bfloat16)
    # (Cin, 2, 2, Cout) -> (Cin, 4*Cout); column index = (a*2 + b)*Cout + co
    w_mat = jnp.transpose(w_iokk, (0, 2, 3, 1)).reshape(Cin, 4 * Cout).astype(jnp.bfloat16)
    b_mat = jnp.tile(bias, 4)[None, :].astype(jnp.float32)

    y = pl.pallas_call(
        _upconv_kernel,
        out_shape=jax.ShapeDtypeStruct((M, 4 * Cout), jnp.bfloat16),
        grid=(M // TM,),
        in_specs=[
            pl.BlockSpec((TM, Cin), lambda i: (i, 0)),
            pl.BlockSpec((Cin, 4 * Cout), lambda i: (0, 0)),
            pl.BlockSpec((1, 4 * Cout), lambda i: (0, 0)),
        ],
        out_specs=pl.BlockSpec((TM, 4 * Cout), lambda i: (i, 0)),
        compiler_params=pltpu.CompilerParams(dimension_semantics=("parallel",)),
    )(x_flat, w_mat, b_mat)

    # TODO(synk): emit NHWC directly from the kernel (in-VMEM phase interleave)
    # to guarantee this rearrange never costs an HBM pass; currently left to
    # XLA, which fuses it into the strip build of the first conv.
    y = y.reshape(N, H, W, 2, 2, Cout).transpose(0, 1, 3, 2, 4, 5)
    return y.reshape(N, 2 * H, 2 * W, Cout)


def conv3x3_leaky_inorm(x_nhwc, w_oihw, bias, gamma, beta, *,
                        tile_rows=None, out_dtype=jnp.float32):
    """Conv2d(3x3, pad=1) + LeakyReLU + InstanceNorm2d(affine).
    Exact two-pass IN from per-strip (sum, centred M2) stats."""
    N, H, W, Cin = x_nhwc.shape
    Cout = w_oihw.shape[0]
    TH = _conv_tile_rows(H, W, Cin, Cout, tile_rows)
    S = H // TH
    P = TH * W
    HW = H * W

    # Overlapping halo strips (bf16); the channel concat / padding fuse into
    # this materialization on the XLA side.
    strips = _build_strips(x_nhwc.astype(jnp.bfloat16), TH)      # (N*S, TH+2, W+2, Cin)
    # (Cout, Cin, 3, 3) -> (dy, dx, cin, cout) -> (3, 3*Cin, Cout), col = dx*Cin+cin
    w3 = jnp.transpose(w_oihw, (2, 3, 1, 0)).reshape(3, 3 * Cin, Cout).astype(jnp.bfloat16)
    b2 = bias.astype(jnp.float32)[None, :]

    y, ssum, m2 = pl.pallas_call(
        _make_conv_kernel(TH, W, Cin, Cout),
        out_shape=(
            jax.ShapeDtypeStruct((N * S, P, Cout), jnp.bfloat16),
            jax.ShapeDtypeStruct((N * S, 1, Cout), jnp.float32),
            jax.ShapeDtypeStruct((N * S, 1, Cout), jnp.float32),
        ),
        grid=(N * S,),
        in_specs=[
            pl.BlockSpec((1, TH + 2, W + 2, Cin), lambda i: (i, 0, 0, 0)),
            pl.BlockSpec((3, 3 * Cin, Cout), lambda i: (0, 0, 0)),
            pl.BlockSpec((1, Cout), lambda i: (0, 0)),
        ],
        out_specs=(
            pl.BlockSpec((1, P, Cout), lambda i: (i, 0, 0)),
            pl.BlockSpec((1, 1, Cout), lambda i: (i, 0, 0)),
            pl.BlockSpec((1, 1, Cout), lambda i: (i, 0, 0)),
        ),
        scratch_shapes=[pltpu.VMEM((TH + 2, W, 3 * Cin), jnp.bfloat16)],
        # No cross-step accumulation -> the single grid axis is fully parallel
        # (keeps both v7x TensorCores busy even at batch 1).
        compiler_params=pltpu.CompilerParams(dimension_semantics=("parallel",)),
    )(strips, w3, b2)

    # Exact combine of per-strip stats (Chan et al.): no cancellation.
    sums = ssum.reshape(N, S, Cout)
    m2s = m2.reshape(N, S, Cout)
    mean = jnp.sum(sums, axis=1) / HW                              # (N, Cout)
    m_j = sums / P                                                 # per-strip means
    M2 = jnp.sum(m2s, axis=1) + P * jnp.sum((m_j - mean[:, None, :]) ** 2, axis=1)
    var = M2 / HW

    scale = gamma[None, :] * jax.lax.rsqrt(var + EPS)              # (N, Cout)
    shift = beta[None, :] - mean * scale
    y = y.reshape(N, H, W, Cout).astype(jnp.float32)               # free reshape, bf16 read
    out = y * scale[:, None, None, :] + shift[:, None, None, :]
    return out.astype(out_dtype)


# ---------------------------------------------------------------------------
# UNetUpBlock module (Pallas version)
# ---------------------------------------------------------------------------
class UNetUpBlockPallas:
    def __init__(self, in_size, out_size, key, *, conv_tile_rows=None, up_tile_m=None):
        self.conv_tile_rows = conv_tile_rows
        self.up_tile_m = up_tile_m
        k = jax.random.split(key, 6)
        f32 = jnp.float32
        # ConvTranspose2d(in_size, out_size, 2, stride=2): weight (Cin, Cout, 2, 2)
        self.Wt = (0.1 * jax.random.normal(k[0], (in_size, out_size, 2, 2))).astype(f32)
        self.bt = (0.1 * jax.random.normal(k[1], (out_size,))).astype(f32)
        # UNetConvBlock: Conv2d(in_size, out_size, 3, pad=1) x2 with IN(affine)
        self.W1 = (0.1 * jax.random.normal(k[2], (out_size, in_size, 3, 3))).astype(f32)
        self.b1 = (0.1 * jax.random.normal(k[3], (out_size,))).astype(f32)
        self.g1 = jnp.ones((out_size,), f32)
        self.be1 = jnp.zeros((out_size,), f32)
        self.W2 = (0.1 * jax.random.normal(k[4], (out_size, out_size, 3, 3))).astype(f32)
        self.b2 = (0.1 * jax.random.normal(k[5], (out_size,))).astype(f32)
        self.g2 = jnp.ones((out_size,), f32)
        self.be2 = jnp.zeros((out_size,), f32)
        self._fwd = jax.jit(self._forward)

    def _forward(self, x_nchw, bridge_nchw):
        bf16 = jnp.bfloat16
        # up = self.up(x)   (ConvTranspose2d k=2 s=2), bf16 activations
        x = jnp.transpose(x_nchw, (0, 2, 3, 1))                        # NHWC
        up = upconv_transpose2x2(x, self.Wt, self.bt, tile_m=self.up_tile_m)

        # crop1 = tensor_center_crop(bridge, up.shape[2:])
        th, tw = up.shape[1], up.shape[2]
        Hb, Wb = bridge_nchw.shape[2], bridge_nchw.shape[3]
        sh, sw = (Hb - th) // 2, (Wb - tw) // 2
        crop = jnp.transpose(bridge_nchw[:, :, sh:sh + th, sw:sw + tw],
                             (0, 2, 3, 1)).astype(bf16)                # NHWC bf16

        # out = torch.cat([up, crop1], 1)  (channel concat; fuses into strip build)
        cat = jnp.concatenate([up, crop], axis=-1)

        # out = self.conv_block(out)
        out = conv3x3_leaky_inorm(cat, self.W1, self.b1, self.g1, self.be1,
                                  tile_rows=self.conv_tile_rows, out_dtype=bf16)
        out = conv3x3_leaky_inorm(out, self.W2, self.b2, self.g2, self.be2,
                                  tile_rows=self.conv_tile_rows, out_dtype=jnp.float32)

        return jnp.transpose(out, (0, 3, 1, 2))                        # back to NCHW

    def __call__(self, x_nchw, bridge_nchw):
        return self._fwd(x_nchw, bridge_nchw)


# ---------------------------------------------------------------------------
# Pure-JAX reference (mirrors the bf16 storage policy of the Pallas pipeline
# so the comparison isolates kernel correctness, not dtype policy).
# ---------------------------------------------------------------------------
def _ref_forward(m: UNetUpBlockPallas, x_nchw, bridge_nchw):
    f32, bf16 = jnp.float32, jnp.bfloat16
    q = lambda a: a.astype(bf16).astype(f32)      # bf16 round-trip

    x = q(jnp.transpose(x_nchw, (0, 2, 3, 1)))
    up = jnp.einsum("nhwi,ioab->nhawbo", x, q(m.Wt))
    N, H, Wd = x.shape[0], x.shape[1], x.shape[2]
    Co = m.Wt.shape[1]
    up = q(up.reshape(N, 2 * H, 2 * Wd, Co) + m.bt)

    th, tw = up.shape[1], up.shape[2]
    Hb, Wb = bridge_nchw.shape[2], bridge_nchw.shape[3]
    sh, sw = (Hb - th) // 2, (Wb - tw) // 2
    crop = q(jnp.transpose(bridge_nchw[:, :, sh:sh + th, sw:sw + tw], (0, 2, 3, 1)))
    out = jnp.concatenate([up, crop], axis=-1)

    def conv_block(y, Wc, b, g, be):
        z = jax.lax.conv_general_dilated(
            q(y), q(jnp.transpose(Wc, (2, 3, 1, 0))), (1, 1), ((1, 1), (1, 1)),
            dimension_numbers=("NHWC", "HWIO", "NHWC")) + b
        z = jnp.where(z > 0, z, NEG_SLOPE * z)
        mu = z.mean(axis=(1, 2), keepdims=True)
        var = ((z - mu) ** 2).mean(axis=(1, 2), keepdims=True)
        zq = q(z)   # mirror the kernel's bf16 conv-output storage (stats in f32)
        return (zq - mu) * jax.lax.rsqrt(var + EPS) * g + be

    out1 = q(conv_block(out, m.W1, m.b1, m.g1, m.be1))   # stored bf16 in pipeline
    out2 = conv_block(out1, m.W2, m.b2, m.g2, m.be2)
    return jnp.transpose(out2, (0, 3, 1, 2))


# ---------------------------------------------------------------------------
if __name__ == "__main__":
    key = jax.random.PRNGKey(0)
    k_x, k_b, k_p = jax.random.split(key, 3)

    in_size, out_size = 8, 4          # concat channels: out_size(up) + (in_size-out_size)(bridge)
    N, H, W = 2, 8, 8                 # x spatial 8x8 -> up spatial 16x16
    x = jax.random.normal(k_x, (N, in_size, H, W), jnp.float32)            # NCHW
    bridge = jax.random.normal(k_b, (N, in_size - out_size, 18, 18), jnp.float32)

    # Small tiles so the test exercises multi-step grids and the per-strip
    # InstanceNorm stat combine (2 strips / image, 2 upconv M-tiles).
    block = UNetUpBlockPallas(in_size, out_size, k_p, conv_tile_rows=8, up_tile_m=64)

    out = jax.block_until_ready(block(x, bridge))
    assert out.shape == (N, out_size, 2 * H, 2 * W), out.shape

    ref = jax.block_until_ready(_ref_forward(block, x, bridge))
    max_err = float(jnp.max(jnp.abs(out - ref)))
    assert jnp.allclose(out, ref, atol=1e-2, rtol=1e-2), max_err

    print("KERNEL_OK")
</pallas_src>

<mosaic_0001>
module attributes {stable_mosaic.version = 11 : i64} {
  func.func @_upconv_kernel(%arg0: i32, %arg1: memref<64x8xbf16, #tpu.memory_space<vmem>>, %arg2: memref<8x16xbf16, #tpu.memory_space<vmem>>, %arg3: memref<1x16xf32, #tpu.memory_space<vmem>>, %arg4: memref<64x16xbf16, #tpu.memory_space<vmem>>) attributes {dimension_semantics = [#tpu.dimension_semantics<parallel>], iteration_bounds = array<i64: 2>, scalar_prefetch = 0 : i64, scratch_operands = 0 : i64, tpu.core_type = #tpu.core_type<tc>, window_params = [{transform_indices = @transform_0, window_bounds = array<i64: 64, 8>}, {pipeline_mode = #tpu.pipeline_mode<synchronous>, transform_indices = @transform_1, window_bounds = array<i64: 8, 16>}, {pipeline_mode = #tpu.pipeline_mode<synchronous>, transform_indices = @transform_2, window_bounds = array<i64: 1, 16>}, {transform_indices = @transform_3, window_bounds = array<i64: 64, 16>}]} {
    %c0 = arith.constant 0 : index
    %c0_0 = arith.constant 0 : index
    %0 = vector.load %arg1[%c0, %c0_0] : memref<64x8xbf16, #tpu.memory_space<vmem>>, vector<64x8xbf16>
    %c0_1 = arith.constant 0 : index
    %c0_2 = arith.constant 0 : index
    %1 = vector.load %arg2[%c0_1, %c0_2] : memref<8x16xbf16, #tpu.memory_space<vmem>>, vector<8x16xbf16>
    %cst = arith.constant dense<0.000000e+00> : vector<64x16xf32>
    %2 = tpu.matmul %0, %1, %cst {dimension_numbers = #tpu.dot_dimension_numbers<[1], [0], [0], [1], [0, 0, 1, 1], [], []>} : vector<64x8xbf16>, vector<8x16xbf16>, vector<64x16xf32> -> vector<64x16xf32>
    %c0_3 = arith.constant 0 : index
    %c0_4 = arith.constant 0 : index
    %3 = vector.load %arg3[%c0_3, %c0_4] : memref<1x16xf32, #tpu.memory_space<vmem>>, vector<1x16xf32>
    %4 = vector.broadcast %3 : vector<1x16xf32> to vector<64x16xf32>
    %5 = arith.addf %2, %4 : vector<64x16xf32>
    %6 = arith.truncf %5 : vector<64x16xf32> to vector<64x16xbf16>
    %c0_5 = arith.constant 0 : index
    %c0_6 = arith.constant 0 : index
    %7 = vector.load %arg4[%c0_5, %c0_6] : memref<64x16xbf16, #tpu.memory_space<vmem>>, vector<64x16xbf16>
    tpu.vector_store %arg4[%c0_5, %c0_6], %6 {strides = array<i32>} : memref<64x16xbf16, #tpu.memory_space<vmem>>, vector<64x16xbf16>,
    return
  }
  func.func @transform_0(%arg0: i32) -> (i32, i32) {
    %c0_i32 = arith.constant 0 : i32
    %c0_i32_0 = arith.constant 0 : i32
    return %arg0, %c0_i32 : i32, i32
  }
  func.func @transform_1(%arg0: i32) -> (i32, i32) {
    %c0_i32 = arith.constant 0 : i32
    %c0_i32_0 = arith.constant 0 : i32
    %c0_i32_1 = arith.constant 0 : i32
    return %c0_i32, %c0_i32_0 : i32, i32
  }
  func.func @transform_2(%arg0: i32) -> (i32, i32) {
    %c0_i32 = arith.constant 0 : i32
    %c0_i32_0 = arith.constant 0 : i32
    %c0_i32_1 = arith.constant 0 : i32
    return %c0_i32, %c0_i32_0 : i32, i32
  }
  func.func @transform_3(%arg0: i32) -> (i32, i32) {
    %c0_i32 = arith.constant 0 : i32
    %c0_i32_0 = arith.constant 0 : i32
    return %arg0, %c0_i32 : i32, i32
  }
}

module attributes {stable_mosaic.version = 11 : i64} {
  func.func @kernel(%arg0: i32, %arg1: memref<1x10x18x8xbf16, #tpu.memory_space<vmem>>, %arg2: memref<3x24x4xbf16, #tpu.memory_space<vmem>>, %arg3: memref<1x4xf32, #tpu.memory_space<vmem>>, %arg4: memref<1x128x4xbf16, #tpu.memory_space<vmem>>, %arg5: memref<1x1x4xf32, #tpu.memory_space<vmem>>, %arg6: memref<1x1x4xf32, #tpu.memory_space<vmem>>, %arg7: memref<10x16x24xbf16, #tpu.memory_space<vmem>>) attributes {dimension_semantics = [#tpu.dimension_semantics<parallel>], iteration_bounds = array<i64: 4>, scalar_prefetch = 0 : i64, scratch_operands = 1 : i64, tpu.core_type = #tpu.core_type<tc>, window_params = [{transform_indices = @transform_0, window_bounds = array<i64: 1, 10, 18, 8>}, {pipeline_mode = #tpu.pipeline_mode<synchronous>, transform_indices = @transform_1, window_bounds = array<i64: 3, 24, 4>}, {pipeline_mode = #tpu.pipeline_mode<synchronous>, transform_indices = @transform_2, window_bounds = array<i64: 1, 4>}, {transform_indices = @transform_3, window_bounds = array<i64: 1, 128, 4>}, {transform_indices = @transform_4, window_bounds = array<i64: 1, 1, 4>}, {transform_indices = @transform_5, window_bounds = array<i64: 1, 1, 4>}]} {
    %c0 = arith.constant 0 : index
    %c0_0 = arith.constant 0 : index
    %c0_1 = arith.constant 0 : index
    %c0_2 = arith.constant 0 : index
    %0 = vector.load %arg1[%c0, %c0_0, %c0_1, %c0_2] : memref<1x10x18x8xbf16, #tpu.memory_space<vmem>>, vector<1x10x16x8xbf16>
    %1 = vector.shape_cast %0 : vector<1x10x16x8xbf16> to vector<10x16x8xbf16>
    %c0_3 = arith.constant 0 : index
    %c0_4 = arith.constant 0 : index
    %c0_5 = arith.constant 0 : index
    %2 = vector.load %arg7[%c0_3, %c0_4, %c0_5] : memref<10x16x24xbf16, #tpu.memory_space<vmem>>, vector<10x16x8xbf16>
    tpu.vector_store %arg7[%c0_3, %c0_4, %c0_5], %1 {strides = array<i32>} : memref<10x16x24xbf16, #tpu.memory_space<vmem>>, vector<10x16x8xbf16>,
    %c0_6 = arith.constant 0 : index
    %c0_7 = arith.constant 0 : index
    %c1 = arith.constant 1 : index
    %c0_8 = arith.constant 0 : index
    %3 = vector.load %arg1[%c0_6, %c0_7, %c1, %c0_8] : memref<1x10x18x8xbf16, #tpu.memory_space<vmem>>, vector<1x10x16x8xbf16>
    %4 = vector.shape_cast %3 : vector<1x10x16x8xbf16> to vector<10x16x8xbf16>
    %c0_9 = arith.constant 0 : index
    %c0_10 = arith.constant 0 : index
    %c8 = arith.constant 8 : index
    %5 = vector.load %arg7[%c0_9, %c0_10, %c8] : memref<10x16x24xbf16, #tpu.memory_space<vmem>>, vector<10x16x8xbf16>
    tpu.vector_store %arg7[%c0_9, %c0_10, %c8], %4 {strides = array<i32>} : memref<10x16x24xbf16, #tpu.memory_space<vmem>>, vector<10x16x8xbf16>,
    %c0_11 = arith.constant 0 : index
    %c0_12 = arith.constant 0 : index
    %c2 = arith.constant 2 : index
    %c0_13 = arith.constant 0 : index
    %6 = vector.load %arg1[%c0_11, %c0_12, %c2, %c0_13] : memref<1x10x18x8xbf16, #tpu.memory_space<vmem>>, vector<1x10x16x8xbf16>
    %7 = vector.shape_cast %6 : vector<1x10x16x8xbf16> to vector<10x16x8xbf16>
    %c0_14 = arith.constant 0 : index
    %c0_15 = arith.constant 0 : index
    %c16 = arith.constant 16 : index
    %8 = vector.load %arg7[%c0_14, %c0_15, %c16] : memref<10x16x24xbf16, #tpu.memory_space<vmem>>, vector<10x16x8xbf16>
    tpu.vector_store %arg7[%c0_14, %c0_15, %c16], %7 {strides = array<i32>} : memref<10x16x24xbf16, #tpu.memory_space<vmem>>, vector<10x16x8xbf16>,
    %c0_16 = arith.constant 0 : index
    %c0_17 = arith.constant 0 : index
    %c0_18 = arith.constant 0 : index
    %9 = vector.load %arg7[%c0_16, %c0_17, %c0_18] : memref<10x16x24xbf16, #tpu.memory_space<vmem>>, vector<8x16x24xbf16>
    %10 = vector.shape_cast %9 : vector<8x16x24xbf16> to vector<128x24xbf16>
    %c0_19 = arith.constant 0 : index
    %c0_20 = arith.constant 0 : index
    %c0_21 = arith.constant 0 : index
    %11 = vector.load %arg2[%c0_19, %c0_20, %c0_21] : memref<3x24x4xbf16, #tpu.memory_space<vmem>>, vector<1x24x4xbf16>
    %12 = vector.shape_cast %11 : vector<1x24x4xbf16> to vector<24x4xbf16>
    %cst = arith.constant dense<0.000000e+00> : vector<128x4xf32>
    %13 = tpu.matmul %10, %12, %cst {dimension_numbers = #tpu.dot_dimension_numbers<[1], [0], [0], [1], [0, 0, 1, 1], [], []>} : vector<128x24xbf16>, vector<24x4xbf16>, vector<128x4xf32> -> vector<128x4xf32>
    %c1_22 = arith.constant 1 : index
    %c0_23 = arith.constant 0 : index
    %c0_24 = arith.constant 0 : index
    %14 = vector.load %arg7[%c1_22, %c0_23, %c0_24] : memref<10x16x24xbf16, #tpu.memory_space<vmem>>, vector<8x16x24xbf16>
    %15 = vector.shape_cast %14 : vector<8x16x24xbf16> to vector<128x24xbf16>
    %c1_25 = arith.constant 1 : index
    %c0_26 = arith.constant 0 : index
    %c0_27 = arith.constant 0 : index
    %16 = vector.load %arg2[%c1_25, %c0_26, %c0_27] : memref<3x24x4xbf16, #tpu.memory_space<vmem>>, vector<1x24x4xbf16>
    %17 = vector.shape_cast %16 : vector<1x24x4xbf16> to vector<24x4xbf16>
    %cst_28 = arith.constant dense<0.000000e+00> : vector<128x4xf32>
    %18 = tpu.matmul %15, %17, %cst_28 {dimension_numbers = #tpu.dot_dimension_numbers<[1], [0], [0], [1], [0, 0, 1, 1], [], []>} : vector<128x24xbf16>, vector<24x4xbf16>, vector<128x4xf32> -> vector<128x4xf32>
    %19 = arith.addf %13, %18 : vector<128x4xf32>
    %c2_29 = arith.constant 2 : index
    %c0_30 = arith.constant 0 : index
    %c0_31 = arith.constant 0 : index
    %20 = vector.load %arg7[%c2_29, %c0_30, %c0_31] : memref<10x16x24xbf16, #tpu.memory_space<vmem>>, vector<8x16x24xbf16>
    %21 = vector.shape_cast %20 : vector<8x16x24xbf16> to vector<128x24xbf16>
    %c2_32 = arith.constant 2 : index
    %c0_33 = arith.constant 0 : index
    %c0_34 = arith.constant 0 : index
    %22 = vector.load %arg2[%c2_32, %c0_33, %c0_34] : memref<3x24x4xbf16, #tpu.memory_space<vmem>>, vector<1x24x4xbf16>
    %23 = vector.shape_cast %22 : vector<1x24x4xbf16> to vector<24x4xbf16>
    %cst_35 = arith.constant dense<0.000000e+00> : vector<128x4xf32>
    %24 = tpu.matmul %21, %23, %cst_35 {dimension_numbers = #tpu.dot_dimension_numbers<[1], [0], [0], [1], [0, 0, 1, 1], [], []>} : vector<128x24xbf16>, vector<24x4xbf16>, vector<128x4xf32> -> vector<128x4xf32>
    %25 = arith.addf %19, %24 : vector<128x4xf32>
    %c0_36 = arith.constant 0 : index
    %c0_37 = arith.constant 0 : index
    %26 = vector.load %arg3[%c0_36, %c0_37] : memref<1x4xf32, #tpu.memory_space<vmem>>, vector<1x4xf32>
    %27 = vector.broadcast %26 : vector<1x4xf32> to vector<128x4xf32>
    %28 = arith.addf %25, %27 : vector<128x4xf32>
    %cst_38 = arith.constant 0.000000e+00 : f32
    %29 = vector.broadcast %cst_38 : f32 to vector<128x4xf32>
    %30 = arith.cmpf ogt, %28, %29 : vector<128x4xf32>
    %cst_39 = arith.constant 0.00999999977 : f32
    %31 = vector.broadcast %cst_39 : f32 to vector<128x4xf32>
    %32 = arith.mulf %31, %28 : vector<128x4xf32>
    %33 = arith.select %30, %28, %32 : vector<128x4xi1>, vector<128x4xf32>
    %34 = arith.truncf %33 : vector<128x4xf32> to vector<128x4xbf16>
    %c0_40 = arith.constant 0 : index
    %c0_41 = arith.constant 0 : index
    %c0_42 = arith.constant 0 : index
    %35 = vector.load %arg4[%c0_40, %c0_41, %c0_42] : memref<1x128x4xbf16, #tpu.memory_space<vmem>>, vector<1x128x4xbf16>
    %36 = vector.shape_cast %35 : vector<1x128x4xbf16> to vector<128x4xbf16>
    %37 = vector.shape_cast %34 : vector<128x4xbf16> to vector<1x128x4xbf16>
    tpu.vector_store %arg4[%c0_40, %c0_41, %c0_42], %37 {strides = array<i32>} : memref<1x128x4xbf16, #tpu.memory_space<vmem>>, vector<1x128x4xbf16>,
    %cst_43 = arith.constant dense<0.000000e+00> : vector<4xf32>
    %38 = vector.multi_reduction <add>, %33, %cst_43 [0] : vector<128x4xf32> to vector<4xf32>
    %39 = vector.shape_cast %38 : vector<4xf32> to vector<1x4xf32>
    %cst_44 = arith.constant 7.812500e-03 : f32
    %40 = vector.broadcast %cst_44 : f32 to vector<1x4xf32>
    %41 = arith.mulf %39, %40 : vector<1x4xf32>
    %42 = vector.broadcast %41 : vector<1x4xf32> to vector<128x4xf32>
    %43 = arith.subf %33, %42 : vector<128x4xf32>
    %c0_45 = arith.constant 0 : index
    %c0_46 = arith.constant 0 : index
    %c0_47 = arith.constant 0 : index
    %44 = vector.load %arg5[%c0_45, %c0_46, %c0_47] : memref<1x1x4xf32, #tpu.memory_space<vmem>>, vector<1x1x4xf32>
    %45 = vector.shape_cast %44 : vector<1x1x4xf32> to vector<1x4xf32>
    %46 = vector.shape_cast %39 : vector<1x4xf32> to vector<1x1x4xf32>
    tpu.vector_store %arg5[%c0_45, %c0_46, %c0_47], %46 {strides = array<i32>} : memref<1x1x4xf32, #tpu.memory_space<vmem>>, vector<1x1x4xf32>,
    %47 = arith.mulf %43, %43 : vector<128x4xf32>
    %cst_48 = arith.constant dense<0.000000e+00> : vector<4xf32>
    %48 = vector.multi_reduction <add>, %47, %cst_48 [0] : vector<128x4xf32> to vector<4xf32>
    %49 = vector.shape_cast %48 : vector<4xf32> to vector<1x4xf32>
    %c0_49 = arith.constant 0 : index
    %c0_50 = arith.constant 0 : index
    %c0_51 = arith.constant 0 : index
    %50 = vector.load %arg6[%c0_49, %c0_50, %c0_51] : memref<1x1x4xf32, #tpu.memory_space<vmem>>, vector<1x1x4xf32>
    %51 = vector.shape_cast %50 : vector<1x1x4xf32> to vector<1x4xf32>
    %52 = vector.shape_cast %49 : vector<1x4xf32> to vector<1x1x4xf32>
    tpu.vector_store %arg6[%c0_49, %c0_50, %c0_51], %52 {strides = array<i32>} : memref<1x1x4xf32, #tpu.memory_space<vmem>>, vector<1x1x4xf32>,
    return
  }
  func.func @transform_0(%arg0: i32) -> (i32, i32, i32, i32) {
    %c0_i32 = arith.constant 0 : i32
    %c0_i32_0 = arith.constant 0 : i32
    %c0_i32_1 = arith.constant 0 : i32
    %c0_i32_2 = arith.constant 0 : i32
    return %arg0, %c0_i32, %c0_i32_0, %c0_i32_1 : i32, i32, i32, i32
  }
  func.func @transform_1(%arg0: i32) -> (i32, i32, i32) {
    %c0_i32 = arith.constant 0 : i32
    %c0_i32_0 = arith.constant 0 : i32
    %c0_i32_1 = arith.constant 0 : i32
    %c0_i32_2 = arith.constant 0 : i32
    return %c0_i32, %c0_i32_0, %c0_i32_1 : i32, i32, i32
  }
  func.func @transform_2(%arg0: i32) -> (i32, i32) {
    %c0_i32 = arith.constant 0 : i32
    %c0_i32_0 = arith.constant 0 : i32
    %c0_i32_1 = arith.constant 0 : i32
    return %c0_i32, %c0_i32_0 : i32, i32
  }
  func.func @transform_3(%arg0: i32) -> (i32, i32, i32) {
    %c0_i32 = arith.constant 0 : i32
    %c0_i32_0 = arith.constant 0 : i32
    %c0_i32_1 = arith.constant 0 : i32
    return %arg0, %c0_i32, %c0_i32_0 : i32, i32, i32
  }
  func.func @transform_4(%arg0: i32) -> (i32, i32, i32) {
    %c0_i32 = arith.constant 0 : i32
    %c0_i32_0 = arith.constant 0 : i32
    %c0_i32_1 = arith.constant 0 : i32
    return %arg0, %c0_i32, %c0_i32_0 : i32, i32, i32
  }
  func.func @transform_5(%arg0: i32) -> (i32, i32, i32) {
    %c0_i32 = arith.constant 0 : i32
    %c0_i32_0 = arith.constant 0 : i32
    %c0_i32_1 = arith.constant 0 : i32
    return %arg0, %c0_i32, %c0_i32_0 : i32, i32, i32
  }
}

module attributes {stable_mosaic.version = 11 : i64} {
  func.func @kernel(%arg0: i32, %arg1: memref<1x10x18x4xbf16, #tpu.memory_space<vmem>>, %arg2: memref<3x12x4xbf16, #tpu.memory_space<vmem>>, %arg3: memref<1x4xf32, #tpu.memory_space<vmem>>, %arg4: memref<1x128x4xbf16, #tpu.memory_space<vmem>>, %arg5: memref<1x1x4xf32, #tpu.memory_space<vmem>>, %arg6: memref<1x1x4xf32, #tpu.memory_space<vmem>>, %arg7: memref<10x16x12xbf16, #tpu.memory_space<vmem>>) attributes {dimension_semantics = [#tpu.dimension_semantics<parallel>], iteration_bounds = array<i64: 4>, scalar_prefetch = 0 : i64, scratch_operands = 1 : i64, tpu.core_type = #tpu.core_type<tc>, window_params = [{transform_indices = @transform_0, window_bounds = array<i64: 1, 10, 18, 4>}, {pipeline_mode = #tpu.pipeline_mode<synchronous>, transform_indices = @transform_1, window_bounds = array<i64: 3, 12, 4>}, {pipeline_mode = #tpu.pipeline_mode<synchronous>, transform_indices = @transform_2, window_bounds = array<i64: 1, 4>}, {transform_indices = @transform_3, window_bounds = array<i64: 1, 128, 4>}, {transform_indices = @transform_4, window_bounds = array<i64: 1, 1, 4>}, {transform_indices = @transform_5, window_bounds = array<i64: 1, 1, 4>}]} {
    %c0 = arith.constant 0 : index
    %c0_0 = arith.constant 0 : index
    %c0_1 = arith.constant 0 : index
    %c0_2 = arith.constant 0 : index
    %0 = vector.load %arg1[%c0, %c0_0, %c0_1, %c0_2] : memref<1x10x18x4xbf16, #tpu.memory_space<vmem>>, vector<1x10x16x4xbf16>
    %1 = vector.shape_cast %0 : vector<1x10x16x4xbf16> to vector<10x16x4xbf16>
    %c0_3 = arith.constant 0 : index
    %c0_4 = arith.constant 0 : index
    %c0_5 = arith.constant 0 : index
    %2 = vector.load %arg7[%c0_3, %c0_4, %c0_5] : memref<10x16x12xbf16, #tpu.memory_space<vmem>>, vector<10x16x4xbf16>
    tpu.vector_store %arg7[%c0_3, %c0_4, %c0_5], %1 {strides = array<i32>} : memref<10x16x12xbf16, #tpu.memory_space<vmem>>, vector<10x16x4xbf16>,
    %c0_6 = arith.constant 0 : index
    %c0_7 = arith.constant 0 : index
    %c1 = arith.constant 1 : index
    %c0_8 = arith.constant 0 : index
    %3 = vector.load %arg1[%c0_6, %c0_7, %c1, %c0_8] : memref<1x10x18x4xbf16, #tpu.memory_space<vmem>>, vector<1x10x16x4xbf16>
    %4 = vector.shape_cast %3 : vector<1x10x16x4xbf16> to vector<10x16x4xbf16>
    %c0_9 = arith.constant 0 : index
    %c0_10 = arith.constant 0 : index
    %c4 = arith.constant 4 : index
    %5 = vector.load %arg7[%c0_9, %c0_10, %c4] : memref<10x16x12xbf16, #tpu.memory_space<vmem>>, vector<10x16x4xbf16>
    tpu.vector_store %arg7[%c0_9, %c0_10, %c4], %4 {strides = array<i32>} : memref<10x16x12xbf16, #tpu.memory_space<vmem>>, vector<10x16x4xbf16>,
    %c0_11 = arith.constant 0 : index
    %c0_12 = arith.constant 0 : index
    %c2 = arith.constant 2 : index
    %c0_13 = arith.constant 0 : index
    %6 = vector.load %arg1[%c0_11, %c0_12, %c2, %c0_13] : memref<1x10x18x4xbf16, #tpu.memory_space<vmem>>, vector<1x10x16x4xbf16>
    %7 = vector.shape_cast %6 : vector<1x10x16x4xbf16> to vector<10x16x4xbf16>
    %c0_14 = arith.constant 0 : index
    %c0_15 = arith.constant 0 : index
    %c8 = arith.constant 8 : index
    %8 = vector.load %arg7[%c0_14, %c0_15, %c8] : memref<10x16x12xbf16, #tpu.memory_space<vmem>>, vector<10x16x4xbf16>
    tpu.vector_store %arg7[%c0_14, %c0_15, %c8], %7 {strides = array<i32>} : memref<10x16x12xbf16, #tpu.memory_space<vmem>>, vector<10x16x4xbf16>,
    %c0_16 = arith.constant 0 : index
    %c0_17 = arith.constant 0 : index
    %c0_18 = arith.constant 0 : index
    %9 = vector.load %arg7[%c0_16, %c0_17, %c0_18] : memref<10x16x12xbf16, #tpu.memory_space<vmem>>, vector<8x16x12xbf16>
    %10 = vector.shape_cast %9 : vector<8x16x12xbf16> to vector<128x12xbf16>
    %c0_19 = arith.constant 0 : index
    %c0_20 = arith.constant 0 : index
    %c0_21 = arith.constant 0 : index
    %11 = vector.load %arg2[%c0_19, %c0_20, %c0_21] : memref<3x12x4xbf16, #tpu.memory_space<vmem>>, vector<1x12x4xbf16>
    %12 = vector.shape_cast %11 : vector<1x12x4xbf16> to vector<12x4xbf16>
    %cst = arith.constant dense<0.000000e+00> : vector<128x4xf32>
    %13 = tpu.matmul %10, %12, %cst {dimension_numbers = #tpu.dot_dimension_numbers<[1], [0], [0], [1], [0, 0, 1, 1], [], []>} : vector<128x12xbf16>, vector<12x4xbf16>, vector<128x4xf32> -> vector<128x4xf32>
    %c1_22 = arith.constant 1 : index
    %c0_23 = arith.constant 0 : index
    %c0_24 = arith.constant 0 : index
    %14 = vector.load %arg7[%c1_22, %c0_23, %c0_24] : memref<10x16x12xbf16, #tpu.memory_space<vmem>>, vector<8x16x12xbf16>
    %15 = vector.shape_cast %14 : vector<8x16x12xbf16> to vector<128x12xbf16>
    %c1_25 = arith.constant 1 : index
    %c0_26 = arith.constant 0 : index
    %c0_27 = arith.constant 0 : index
    %16 = vector.load %arg2[%c1_25, %c0_26, %c0_27] : memref<3x12x4xbf16, #tpu.memory_space<vmem>>, vector<1x12x4xbf16>
    %17 = vector.shape_cast %16 : vector<1x12x4xbf16> to vector<12x4xbf16>
    %cst_28 = arith.constant dense<0.000000e+00> : vector<128x4xf32>
    %18 = tpu.matmul %15, %17, %cst_28 {dimension_numbers = #tpu.dot_dimension_numbers<[1], [0], [0], [1], [0, 0, 1, 1], [], []>} : vector<128x12xbf16>, vector<12x4xbf16>, vector<128x4xf32> -> vector<128x4xf32>
    %19 = arith.addf %13, %18 : vector<128x4xf32>
    %c2_29 = arith.constant 2 : index
    %c0_30 = arith.constant 0 : index
    %c0_31 = arith.constant 0 : index
    %20 = vector.load %arg7[%c2_29, %c0_30, %c0_31] : memref<10x16x12xbf16, #tpu.memory_space<vmem>>, vector<8x16x12xbf16>
    %21 = vector.shape_cast %20 : vector<8x16x12xbf16> to vector<128x12xbf16>
    %c2_32 = arith.constant 2 : index
    %c0_33 = arith.constant 0 : index
    %c0_34 = arith.constant 0 : index
    %22 = vector.load %arg2[%c2_32, %c0_33, %c0_34] : memref<3x12x4xbf16, #tpu.memory_space<vmem>>, vector<1x12x4xbf16>
    %23 = vector.shape_cast %22 : vector<1x12x4xbf16> to vector<12x4xbf16>
    %cst_35 = arith.constant dense<0.000000e+00> : vector<128x4xf32>
    %24 = tpu.matmul %21, %23, %cst_35 {dimension_numbers = #tpu.dot_dimension_numbers<[1], [0], [0], [1], [0, 0, 1, 1], [], []>} : vector<128x12xbf16>, vector<12x4xbf16>, vector<128x4xf32> -> vector<128x4xf32>
    %25 = arith.addf %19, %24 : vector<128x4xf32>
    %c0_36 = arith.constant 0 : index
    %c0_37 = arith.constant 0 : index
    %26 = vector.load %arg3[%c0_36, %c0_37] : memref<1x4xf32, #tpu.memory_space<vmem>>, vector<1x4xf32>
    %27 = vector.broadcast %26 : vector<1x4xf32> to vector<128x4xf32>
    %28 = arith.addf %25, %27 : vector<128x4xf32>
    %cst_38 = arith.constant 0.000000e+00 : f32
    %29 = vector.broadcast %cst_38 : f32 to vector<128x4xf32>
    %30 = arith.cmpf ogt, %28, %29 : vector<128x4xf32>
    %cst_39 = arith.constant 0.00999999977 : f32
    %31 = vector.broadcast %cst_39 : f32 to vector<128x4xf32>
    %32 = arith.mulf %31, %28 : vector<128x4xf32>
    %33 = arith.select %30, %28, %32 : vector<128x4xi1>, vector<128x4xf32>
    %34 = arith.truncf %33 : vector<128x4xf32> to vector<128x4xbf16>
    %c0_40 = arith.constant 0 : index
    %c0_41 = arith.constant 0 : index
    %c0_42 = arith.constant 0 : index
    %35 = vector.load %arg4[%c0_40, %c0_41, %c0_42] : memref<1x128x4xbf16, #tpu.memory_space<vmem>>, vector<1x128x4xbf16>
    %36 = vector.shape_cast %35 : vector<1x128x4xbf16> to vector<128x4xbf16>
    %37 = vector.shape_cast %34 : vector<128x4xbf16> to vector<1x128x4xbf16>
    tpu.vector_store %arg4[%c0_40, %c0_41, %c0_42], %37 {strides = array<i32>} : memref<1x128x4xbf16, #tpu.memory_space<vmem>>, vector<1x128x4xbf16>,
    %cst_43 = arith.constant dense<0.000000e+00> : vector<4xf32>
    %38 = vector.multi_reduction <add>, %33, %cst_43 [0] : vector<128x4xf32> to vector<4xf32>
    %39 = vector.shape_cast %38 : vector<4xf32> to vector<1x4xf32>
    %cst_44 = arith.constant 7.812500e-03 : f32
    %40 = vector.broadcast %cst_44 : f32 to vector<1x4xf32>
    %41 = arith.mulf %39, %40 : vector<1x4xf32>
    %42 = vector.broadcast %41 : vector<1x4xf32> to vector<128x4xf32>
    %43 = arith.subf %33, %42 : vector<128x4xf32>
    %c0_45 = arith.constant 0 : index
    %c0_46 = arith.constant 0 : index
    %c0_47 = arith.constant 0 : index
    %44 = vector.load %arg5[%c0_45, %c0_46, %c0_47] : memref<1x1x4xf32, #tpu.memory_space<vmem>>, vector<1x1x4xf32>
    %45 = vector.shape_cast %44 : vector<1x1x4xf32> to vector<1x4xf32>
    %46 = vector.shape_cast %39 : vector<1x4xf32> to vector<1x1x4xf32>
    tpu.vector_store %arg5[%c0_45, %c0_46, %c0_47], %46 {strides = array<i32>} : memref<1x1x4xf32, #tpu.memory_space<vmem>>, vector<1x1x4xf32>,
    %47 = arith.mulf %43, %43 : vector<128x4xf32>
    %cst_48 = arith.constant dense<0.000000e+00> : vector<4xf32>
    %48 = vector.multi_reduction <add>, %47, %cst_48 [0] : vector<128x4xf32> to vector<4xf32>
    %49 = vector.shape_cast %48 : vector<4xf32> to vector<1x4xf32>
    %c0_49 = arith.constant 0 : index
    %c0_50 = arith.constant 0 : index
    %c0_51 = arith.constant 0 : index
    %50 = vector.load %arg6[%c0_49, %c0_50, %c0_51] : memref<1x1x4xf32, #tpu.memory_space<vmem>>, vector<1x1x4xf32>
    %51 = vector.shape_cast %50 : vector<1x1x4xf32> to vector<1x4xf32>
    %52 = vector.shape_cast %49 : vector<1x4xf32> to vector<1x1x4xf32>
    tpu.vector_store %arg6[%c0_49, %c0_50, %c0_51], %52 {strides = array<i32>} : memref<1x1x4xf32, #tpu.memory_space<vmem>>, vector<1x1x4xf32>,
    return
  }
  func.func @transform_0(%arg0: i32) -> (i32, i32, i32, i32) {
    %c0_i32 = arith.constant 0 : i32
    %c0_i32_0 = arith.constant 0 : i32
    %c0_i32_1 = arith.constant 0 : i32
    %c0_i32_2 = arith.constant 0 : i32
    return %arg0, %c0_i32, %c0_i32_0, %c0_i32_1 : i32, i32, i32, i32
  }
  func.func @transform_1(%arg0: i32) -> (i32, i32, i32) {
    %c0_i32 = arith.constant 0 : i32
    %c0_i32_0 = arith.constant 0 : i32
    %c0_i32_1 = arith.constant 0 : i32
    %c0_i32_2 = arith.constant 0 : i32
    return %c0_i32, %c0_i32_0, %c0_i32_1 : i32, i32, i32
  }
  func.func @transform_2(%arg0: i32) -> (i32, i32) {
    %c0_i32 = arith.constant 0 : i32
    %c0_i32_0 = arith.constant 0 : i32
    %c0_i32_1 = arith.constant 0 : i32
    return %c0_i32, %c0_i32_0 : i32, i32
  }
  func.func @transform_3(%arg0: i32) -> (i32, i32, i32) {
    %c0_i32 = arith.constant 0 : i32
    %c0_i32_0 = arith.constant 0 : i32
    %c0_i32_1 = arith.constant 0 : i32
    return %arg0, %c0_i32, %c0_i32_0 : i32, i32, i32
  }
  func.func @transform_4(%arg0: i32) -> (i32, i32, i32) {
    %c0_i32 = arith.constant 0 : i32
    %c0_i32_0 = arith.constant 0 : i32
    %c0_i32_1 = arith.constant 0 : i32
    return %arg0, %c0_i32, %c0_i32_0 : i32, i32, i32
  }
  func.func @transform_5(%arg0: i32) -> (i32, i32, i32) {
    %c0_i32 = arith.constant 0 : i32
    %c0_i32_0 = arith.constant 0 : i32
    %c0_i32_1 = arith.constant 0 : i32
    return %arg0, %c0_i32, %c0_i32_0 : i32, i32, i32
  }
}

</mosaic_0001>

<llo_original>
// kernel: tile.6
$region0: #{tile.6}
  #allocation0 [shape = 's32[1]{0}', space=sflag, size = 0x4, scoped, tag = 'scoped memory for tile.6']
  %s0 = inlined_call_operand.vmem [shape: f32[4], index: 0, kind: input, shape index: {}]
  %s1 = inlined_call_operand.vmem [shape: f32[4,4], index: 1, kind: output, shape index: {}]
  // Predicated region
  $region2: #{tile.6} parent=0 // pred_check
    _
  $region3: #{tile.6} parent=0 // pred_check_branch
    %3 = sbr.rel (0) target = $region5
  $region4: #{tile.6} parent=0 // pred_region
    _
  $region5: #{tile.6} parent=0 // pred_fallthru
    _
  %v4 = vld [vmem:[%s0] ss:$0 sm:$0xff]
  %5 = vst [vmem:[%s1] sm:$0xf] %v4

// kernel: tile.7
$region0: #{tile.7}
  %s0 = inlined_call_operand.vmem [shape: f32[4,4], index: 0, kind: input, shape index: {}]
  %s1 = inlined_call_operand.vmem [shape: f32[1,16], index: 1, kind: output, shape index: {}]
  $region1: #{tile.7} parent=0
    #allocation0 [shape = 'u8[4096]{0}', space=vmem, size = 0x1000, scoped, tag = 'scoped mem for output reshape']
    #allocation1 [shape = 'u8[4096]{0}', space=vmem, size = 0x1000, scoped, tag = 'scoped mem for input reshape']
    %s3 = sshllo.u32 0, 4
    %v4 = vld [vmem:[%s0] sm:%s3]
    %5 = vst [vmem:[#allocation1] sm:%s3] %v4
    %v6 = vld [vmem:[#allocation1] sm:$0x1]
    %vm7 = vcmask 31744
    %8 = vst.msk [vmem:[#allocation0] sm:$0x1] %vm7, %v6
    %s9 = scalar_lea.vmem [#allocation1], 3
    %v10 = vld [vmem:[%s9] sm:$0x1]
    %11 = vrot.lane.b32.xlu0 %v10, 12
    %v12 = vpop.permute.xlu0 %11
    %vm13 = vcmask 130144
    %14 = vst.msk [vmem:[#allocation0] sm:$0x1] %vm13, %v12
    %s15 = scalar_lea.vmem [#allocation1], 2
    %v16 = vld [vmem:[%s15] sm:$0x1]
    %17 = vrot.lane.b32.xlu0 %v16, 8
    %v18 = vpop.permute.xlu0 %17
    %vm19 = vcmask 97344
    %20 = vst.msk [vmem:[#allocation0] sm:$0x1] %vm19, %v18
    %s21 = scalar_lea.vmem [#allocation1], 1
    %v22 = vld [vmem:[%s21] sm:$0x1]
    %23 = vrot.lane.b32.xlu0 %v22, 4
    %v24 = vpop.permute.xlu0 %23
    %vm25 = vcmask 64544
    %26 = vst.msk [vmem:[#allocation0] sm:$0x1] %vm25, %v24
    %s28 = sshllo.u32 0, 1
    %v30 = vld [vmem:[#allocation0] sm:%s28]
    %s31 = sshllo.u32 0, 1
    %32 = vst [vmem:[%s1] sm:%s31] %v30

// kernel: _forward.3
$region0: #{_forward.3}
  #allocation0 [shape = 'u32[]', space=smem, size = 0x4, offset = 0x4, fixed_abs, tag = 'smem constant byte address 0x4 - core index']
  #allocation1 [shape = 'u32[144,128]{1,0:T(1,128)}', space=vmem, size = 0x12000, scoped, tag = 'internal scratch']
  %s0 = inlined_call_operand.vmem [shape: bf16[128,8], index: 0, kind: input, shape index: {}]
  %s1 = inlined_call_operand.vmem [shape: bf16[8,16], index: 1, kind: input, shape index: {}]
  %s2 = inlined_call_operand.vmem [shape: f32[1,16], index: 2, kind: input, shape index: {}]
  %s3 = inlined_call_operand.vmem [shape: bf16[128,16], index: 3, kind: output, shape index: {}]
  %s4 = sld [smem:[#allocation0]]
  $region45: #{_forward.3} parent=0
    _
  %s6 = ssub.s32 1, %s4
  %s7 = scalar_select 0, %s6, %s4
  loop: start=0, step=1, limit=4
  $region2: #{_forward.3} parent=0 // loop_pre_header
    _
  $region3: #{_forward.3} parent=0 // loop_header
    %s9 = sphi 0, %s13
    %p10 = scmp.ge.s32.totalorder %s9, 4
    %s19 = sphi 0, %s21
    %s22 = sphi 0, %s19
    %s23 = sphi 0, %s22
    %s39 = sphi 0, %s23
    %s43 = sphi 0, %s43
    %s45 = sphi 0, %s43
    %s46 = sphi 0, %s45
    %s60 = sphi 0, %s46
    %s64 = sphi 0, %s64
    %s66 = sphi 0, %s64
    %s67 = sphi 0, %s66
    %s81 = sphi 0, %s67
    %s87 = sphi 0, %s89
    %s90 = sphi 0, %s87
    %s91 = sphi 0, %s90
    %s107 = sphi 0, %s91
  $region4: #{_forward.3} parent=0 // loop_header_branch
    %12 = sbr.rel (%p10) target = $region8
  $region5: #{_forward.3} parent=0 // loop_body
    %s14 = ssub.s32 %s9, 1
    %s15 = ssub.s32 %s9, 2
    %s16 = sadd.s32 %s9, 1
    %s17 = ssub.s32 %s9, %s16
    %p18 = scmp.eq.s32.totalorder %s17, 0
    %s20 = sadd.s32 %s19, 1
    %s21 = scalar_select %p18, %s19, %s20
    %p24 = pneg %p18
    %p25 = scmp.eq.s32.totalorder %s9, 1
    %p26 = por %p24, %p25
    %p27 = scmp.ne.s32.totalorder %s19, %s22
    %p28 = scmp.eq.s32.totalorder %s9, 0
    %p29 = por %p27, %p28
    %p30 = scmp.ne.s32.totalorder %s19, %s22
    %p31 = scmp.eq.s32.totalorder %s14, 1
    %p32 = por %p30, %p31
    %p33 = scmp.ne.s32.totalorder %s22, %s23
    %p34 = scmp.eq.s32.totalorder %s14, 0
    %p35 = por %p33, %p34
    %p36 = scmp.ne.s32.totalorder %s22, %s23
    %p37 = scmp.eq.s32.totalorder %s15, 1
    %p38 = por %p36, %p37
    %p40 = scmp.ne.s32.totalorder %s23, %s39
    %p41 = scmp.eq.s32.totalorder %s15, 0
    %p42 = por %p40, %p41
    %s44 = sadd.s32 %s43, 1
    %p47 = scmp.eq.s32.totalorder %s9, 1
    %p48 = scmp.ne.s32.totalorder %s43, %s45
    %p49 = scmp.eq.s32.totalorder %s9, 0
    %p50 = por %p48, %p49
    %p51 = scmp.ne.s32.totalorder %s43, %s45
    %p52 = scmp.eq.s32.totalorder %s14, 1
    %p53 = por %p51, %p52
    %p54 = scmp.ne.s32.totalorder %s45, %s46
    %p55 = scmp.eq.s32.totalorder %s14, 0
    %p56 = por %p54, %p55
    %p57 = scmp.ne.s32.totalorder %s45, %s46
    %p58 = scmp.eq.s32.totalorder %s15, 1
    %p59 = por %p57, %p58
    %p61 = scmp.ne.s32.totalorder %s46, %s60
    %p62 = scmp.eq.s32.totalorder %s15, 0
    %p63 = por %p61, %p62
    %s65 = sadd.s32 %s64, 1
    %p68 = scmp.eq.s32.totalorder %s9, 1
    %p69 = scmp.ne.s32.totalorder %s64, %s66
    %p70 = scmp.eq.s32.totalorder %s9, 0
    %p71 = por %p69, %p70
    %p72 = scmp.ne.s32.totalorder %s64, %s66
    %p73 = scmp.eq.s32.totalorder %s14, 1
    %p74 = por %p72, %p73
    %p75 = scmp.ne.s32.totalorder %s66, %s67
    %p76 = scmp.eq.s32.totalorder %s14, 0
    %p77 = por %p75, %p76
    %p78 = scmp.ne.s32.totalorder %s66, %s67
    %p79 = scmp.eq.s32.totalorder %s15, 1
    %p80 = por %p78, %p79
    %p82 = scmp.ne.s32.totalorder %s67, %s81
    %p83 = scmp.eq.s32.totalorder %s15, 0
    %p84 = por %p82, %p83
    %s85 = ssub.s32 %s9, %s16
    %p86 = scmp.eq.s32.totalorder %s85, 0
    %s88 = sadd.s32 %s87, 1
    %s89 = scalar_select %p86, %s87, %s88
    %p92 = pneg %p86
    %p93 = scmp.eq.s32.totalorder %s9, 1
    %p94 = por %p92, %p93
    %p95 = scmp.ne.s32.totalorder %s87, %s90
    %p96 = scmp.eq.s32.totalorder %s9, 0
    %p97 = por %p95, %p96
    %p98 = scmp.ne.s32.totalorder %s87, %s90
    %p99 = scmp.eq.s32.totalorder %s14, 1
    %p100 = por %p98, %p99
    %p101 = scmp.ne.s32.totalorder %s90, %s91
    %p102 = scmp.eq.s32.totalorder %s14, 0
    %p103 = por %p101, %p102
    %p104 = scmp.ne.s32.totalorder %s90, %s91
    %p105 = scmp.eq.s32.totalorder %s15, 1
    %p106 = por %p104, %p105
    %p108 = scmp.ne.s32.totalorder %s91, %s107
    %p109 = scmp.eq.s32.totalorder %s15, 0
    %p110 = por %p108, %p109
    %p111 = scmp.le.s32.totalorder 1, %s9
    %p112 = scmp.lt.s32.totalorder %s9, 3
    %p113 = pnand %p111, %p112
    %p114 = pneg %p113
    // Predicated region
    $region9: #{_forward.3} parent=5 // pred_check
      _
    $region10: #{_forward.3} parent=5 // pred_check_branch
      %116 = sbr.rel (%p113) target = $region12
    $region11: #{_forward.3} parent=5 // pred_region
      %s117 = ssub.s32 %s9, 1
      // Predicated region
      $region13: #{_forward.3} parent=11 // pred_check
        %p118 = pneg %p56
      $region14: #{_forward.3} parent=11 // pred_check_branch
        %120 = sbr.rel (%p118) target = $region16
      $region15: #{_forward.3} parent=11 // pred_region
        _
      $region16: #{_forward.3} parent=11 // pred_fallthru
        _
      // Predicated region
      $region17: #{_forward.3} parent=11 // pred_check
        %p121 = pneg %p77
      $region18: #{_forward.3} parent=11 // pred_check_branch
        %123 = sbr.rel (%p121) target = $region20
      $region19: #{_forward.3} parent=11 // pred_region
        _
      $region20: #{_forward.3} parent=11 // pred_fallthru
        _
    $region12: #{_forward.3} parent=5 // pred_fallthru
      _
    %p124 = scmp.lt.s32.totalorder %s9, 2
    // Predicated region
    $region21: #{_forward.3} parent=5 // pred_check
      %p125 = pneg %p124
    $region22: #{_forward.3} parent=5 // pred_check_branch
      %127 = sbr.rel (%p125) target = $region24
    $region23: #{_forward.3} parent=5 // pred_region
      // Predicated region
      $region25: #{_forward.3} parent=23 // pred_check
        %p128 = pneg %p29
      $region26: #{_forward.3} parent=23 // pred_check_branch
        %130 = sbr.rel (%p128) target = $region28
      $region27: #{_forward.3} parent=23 // pred_region
        %s131 = smul.u32 8, %s9
        %p132 = scmp.lt.s32.totalorder %s131, 15
        %s133 = scalar_select %p132, %s131, 15
        %s134 = smul.addr %s133, 4
        %s135 = scalar_lea.vmem %s0, %s134
        %s136 = smul.u32 8, %s9
      $region28: #{_forward.3} parent=23 // pred_fallthru
        _
    $region24: #{_forward.3} parent=5 // pred_fallthru
      _
    %p137 = scmp.le.s32.totalorder 1, %s9
    %p138 = scmp.lt.s32.totalorder %s9, 3
    %p139 = pnand %p137, %p138
    %p140 = pneg %p139
    // Predicated region
    $region29: #{_forward.3} parent=5 // pred_check
      _
    $region30: #{_forward.3} parent=5 // pred_check_branch
      %142 = sbr.rel (%p139) target = $region32
    $region31: #{_forward.3} parent=5 // pred_region
      %s143 = ssub.s32 %s9, 1
      %s144 = smul.u32 8, %s14
      %p145 = scmp.lt.s32.totalorder %s144, 15
      %s146 = scalar_select %p145, %s144, 15
      %s147 = smul.addr %s146, 4
      %s148 = scalar_lea.vmem %s0, %s147
      %p149 = pneg %p35
      %p150 = pneg %p32
      %p151 = pneg %p56
      %p152 = pneg %p53
      %p153 = pneg %p77
      %p154 = pneg %p74
      %p155 = pneg %p103
      %p156 = pneg %p100
      %s157 = smul.u32 8, %s14
      %p158 = scmp.lt.s32.totalorder %s157, 15
      %s159 = scalar_select %p158, %s157, 15
      %s160 = smul.addr %s159, 4
      %s161 = scalar_lea.vmem %s3, %s160
      %s162 = smul.u32 8, %s14
      %p163 = scmp.lt.s32.totalorder %s162, 15
      %s164 = scalar_select %p163, %s162, 15
      %s165 = smul.addr %s164, 4
      %s166 = scalar_lea.vmem %s0, %s165
      %s167 = smul.u32 8, %s14
      %s168 = smul.u32 8, %s14
      %p169 = scmp.lt.s32.totalorder %s168, 15
      %s170 = scalar_select %p169, %s168, 15
      %s171 = smul.addr %s170, 4
      %s172 = scalar_lea.vmem %s3, %s171
      %s173 = smul.u32 8, %s14
      %v175 = vld [vmem:[%s166] sm:$0xf]
      %v176 = vld [vmem:[%s166 + $0x4] sm:$0xf]
      %v177 = vld [vmem:[%s166 + $0x8] sm:$0xf]
      %v178 = vld [vmem:[%s166 + $0xc] sm:$0xf]
      %v179 = vld [vmem:[%s166 + $0x10] sm:$0xf]
      %v180 = vld [vmem:[%s166 + $0x14] sm:$0xf]
      %v181 = vld [vmem:[%s166 + $0x18] sm:$0xf]
      %v182 = vld [vmem:[%s166 + $0x1c] sm:$0xf]
      %v183 = vld [vmem:[%s1] sm:$0xf]
      %v184 = vld [vmem:[%s2] sm:$0x1]
      %v186 = vlaneseq
      %v187 = vshrl.u32 %v186, 7
      %v188 = vsub.s32 0, %v187
      %v189 = vrot.slane %v184, %v188
      %v199 = vunpack.c.l.b16 %v175
      %v200 = vunpack.c.l.b16 %v176
      %v201 = vunpack.c.l.b16 %v177
      %v202 = vunpack.c.l.b16 %v178
      %v203 = vunpack.c.l.b16 %v179
      %v204 = vunpack.c.l.b16 %v180
      %v205 = vunpack.c.l.b16 %v181
      %v206 = vunpack.c.l.b16 %v182
      %v207 = vpack.c.b16 %v200, %v199
      %v208 = vpack.c.b16 %v202, %v201
      %v209 = vpack.c.b16 %v204, %v203
      %v210 = vpack.c.b16 %v206, %v205
      %vm211 = vcmask 64512
      %v213 = vsel %vm211, %v207, 0
      %v216 = vsel %vm211, %v208, 0
      %v219 = vsel %vm211, %v209, 0
      %v222 = vsel %vm211, %v210, 0
      %vm224 = vcmask 1043456
      %v226 = vsel %vm224, %v183, 0
      %228 = vmatprep.subr.bf16.mxu0 0
      %229 = vmatpush1.bf16.msra.mxu0 %v226
      %230 = vmatprep.subr.bf16.mxu0 0
      %231 = vmatpush1.bf16.msra.mxu0 0
      %232 = vmatprep.subr.bf16.mxu0 0
      %233 = vmatpush1.bf16.msra.mxu0 0
      %234 = vmatprep.subr.bf16.mxu0 0
      %235 = vmatpush1.bf16.msra.mxu0 0
      %236 = vmatprep.subr.bf16.mxu0 0
      %237 = vmatpush1.bf16.msra.mxu0 0
      %238 = vmatprep.subr.bf16.mxu0 0
      %239 = vmatpush1.bf16.msra.mxu0 0
      %240 = vmatprep.subr.bf16.mxu0 0
      %241 = vmatpush1.bf16.msra.mxu0 0
      %242 = vmatprep.subr.bf16.mxu0 0
      %243 = vmatpush1.bf16.msra.mxu0 0
      %244 = vmatprep.subr.bf16.mxu0 0
      %245 = vmatpush1.bf16.msra.mxu0 0
      %246 = vmatprep.subr.bf16.mxu0 0
      %247 = vmatpush1.bf16.msra.mxu0 0
      %248 = vmatprep.subr.bf16.mxu0 0
      %249 = vmatpush1.bf16.msra.mxu0 0
      %250 = vmatprep.subr.bf16.mxu0 0
      %251 = vmatpush1.bf16.msra.mxu0 0
      %252 = vmatprep.subr.bf16.mxu0 0
      %253 = vmatpush1.bf16.msra.mxu0 0
      %254 = vmatprep.subr.bf16.mxu0 0
      %255 = vmatpush1.bf16.msra.mxu0 0
      %256 = vmatprep.subr.bf16.mxu0 0
      %257 = vmatpush1.bf16.msra.mxu0 0
      %258 = vmatprep.subr.bf16.mxu0 0
      %259 = vmatpush1.bf16.msra.mxu0 0
      %260 = vmatprep.mubr.bf16.mxu0 0
      %261 = vmatmul.mubr.bf16.gmra.mrb[0].mxu0 %v213
      %v262 = vpop.f32.mrb[0].mxu0
      %v263 = vadd.f32 %v189, %v262
      %v264 = vpop.f32.mrb[0].mxu0
      %v265 = vpop.f32.mrb[0].mxu0
      %v266 = vadd.f32 %v189, %v265
      %v267 = vpop.f32.mrb[0].mxu0
      %268 = vmatprep.mubr.bf16.mxu0 0
      %269 = vmatmul.mubr.bf16.gmra.mrb[0].mxu0 %v216
      %v270 = vpop.f32.mrb[0].mxu0
      %v271 = vadd.f32 %v189, %v270
      %v272 = vpop.f32.mrb[0].mxu0
      %v273 = vpop.f32.mrb[0].mxu0
      %v274 = vadd.f32 %v189, %v273
      %v275 = vpop.f32.mrb[0].mxu0
      %276 = vmatprep.mubr.bf16.mxu0 0
      %277 = vmatmul.mubr.bf16.gmra.mrb[0].mxu0 %v219
      %v278 = vpop.f32.mrb[0].mxu0
      %v279 = vadd.f32 %v189, %v278
      %v280 = vpop.f32.mrb[0].mxu0
      %v281 = vpop.f32.mrb[0].mxu0
      %v282 = vadd.f32 %v189, %v281
      %v283 = vpop.f32.mrb[0].mxu0
      %284 = vmatprep.mubr.bf16.mxu0 0
      %285 = vmatmul.mubr.bf16.gmra.mrb[0].mxu0 %v222
      %v286 = vpop.f32.mrb[0].mxu0
      %v287 = vadd.f32 %v189, %v286
      %v288 = vpop.f32.mrb[0].mxu0
      %v289 = vpop.f32.mrb[0].mxu0
      %v290 = vadd.f32 %v189, %v289
      %v291 = vpop.f32.mrb[0].mxu0
      %292 = vdwg.mxu0
      %v293 = vpack.c.bf16 %v266, %v263
      %v294 = vpack.c.bf16 %v274, %v271
      %v295 = vpack.c.bf16 %v282, %v279
      %v296 = vpack.c.bf16 %v290, %v287
      %v301 = vunpack.c.l.b16 %v293
      %v302 = vunpack.c.h.b16 %v293
      %v303 = vunpack.c.l.b16 %v294
      %v304 = vunpack.c.h.b16 %v294
      %v305 = vunpack.c.l.b16 %v295
      %v306 = vunpack.c.h.b16 %v295
      %v307 = vunpack.c.l.b16 %v296
      %v308 = vunpack.c.h.b16 %v296
      %v309 = vpack.c.b16 %v301, %v301
      %v310 = vpack.c.b16 %v302, %v302
      %v311 = vpack.c.b16 %v303, %v303
      %v312 = vpack.c.b16 %v304, %v304
      %v313 = vpack.c.b16 %v305, %v305
      %v314 = vpack.c.b16 %v306, %v306
      %v315 = vpack.c.b16 %v307, %v307
      %v316 = vpack.c.b16 %v308, %v308
      %vm325 = vcmask 125952
      %326 = vst.msk [vmem:[%s172] sm:$0xf] %vm325, %v309
      %327 = vst.msk [vmem:[%s172 + $0x4] sm:$0xf] %vm325, %v310
      %328 = vst.msk [vmem:[%s172 + $0x8] sm:$0xf] %vm325, %v311
      %329 = vst.msk [vmem:[%s172 + $0xc] sm:$0xf] %vm325, %v312
      %330 = vst.msk [vmem:[%s172 + $0x10] sm:$0xf] %vm325, %v313
      %331 = vst.msk [vmem:[%s172 + $0x14] sm:$0xf] %vm325, %v314
      %332 = vst.msk [vmem:[%s172 + $0x18] sm:$0xf] %vm325, %v315
      %333 = vst.msk [vmem:[%s172 + $0x1c] sm:$0xf] %vm325, %v316
      %s334 = smul.u32 8, %s14
      %p335 = scmp.lt.s32.totalorder %s334, 15
      %s336 = scalar_select %p335, %s334, 15
      %s337 = smul.addr %s336, 4
      %s338 = scalar_lea.vmem %s3, %s337
      // Predicated region
      $region33: #{_forward.3} parent=31 // pred_check
        %p339 = pneg %p100
      $region34: #{_forward.3} parent=31 // pred_check_branch
        %341 = sbr.rel (%p339) target = $region36
      $region35: #{_forward.3} parent=31 // pred_region
        %s342 = smul.u32 8, %s14
      $region36: #{_forward.3} parent=31 // pred_fallthru
        _
    $region32: #{_forward.3} parent=5 // pred_fallthru
      _
    %p343 = scmp.le.s32.totalorder 2, %s9
    // Predicated region
    $region37: #{_forward.3} parent=5 // pred_check
      %p344 = pneg %p343
    $region38: #{_forward.3} parent=5 // pred_check_branch
      %346 = sbr.rel (%p344) target = $region40
    $region39: #{_forward.3} parent=5 // pred_region
      %s347 = ssub.s32 %s9, 2
      // Predicated region
      $region41: #{_forward.3} parent=39 // pred_check
        %p348 = pneg %p106
      $region42: #{_forward.3} parent=39 // pred_check_branch
        %350 = sbr.rel (%p348) target = $region44
      $region43: #{_forward.3} parent=39 // pred_region
        %s351 = smul.u32 8, %s15
        %p352 = scmp.lt.s32.totalorder %s351, 15
        %s353 = scalar_select %p352, %s351, 15
        %s354 = smul.addr %s353, 4
        %s355 = scalar_lea.vmem %s3, %s354
      $region44: #{_forward.3} parent=39 // pred_fallthru
        _
    $region40: #{_forward.3} parent=5 // pred_fallthru
      _
  $region6: #{_forward.3} parent=0 // loop_footer
    %s13 = sadd.s32 1, %s9
  $region7: #{_forward.3} parent=0 // loop_footer_branch
    %8 = sbr.rel target = $region3
  $region8: #{_forward.3} parent=0 // loop_exit
    _

// kernel: _forward.4
$region0: #{_forward.4}
  #allocation0 [shape = 'u32[]', space=smem, size = 0x4, offset = 0x4, fixed_abs, tag = 'smem constant byte address 0x4 - core index']
  #allocation1 [shape = 'u32[144,128]{1,0:T(1,128)}', space=vmem, size = 0x12000, scoped, tag = 'internal scratch']
  #allocation2 [shape = 'bf16[10,16,24]{2,1,0:T(16,128)(2,1)}', space=vmem, size = 0xa000, scoped, tag = 'scratch operand']
  %s0 = inlined_call_operand.vmem [shape: bf16[4,10,18,8], index: 0, kind: input, shape index: {}]
  %s1 = inlined_call_operand.vmem [shape: bf16[3,24,4], index: 1, kind: input, shape index: {}]
  %s2 = inlined_call_operand.vmem [shape: f32[1,4], index: 2, kind: input, shape index: {}]
  %s3 = inlined_call_operand.vmem [shape: bf16[4,128,4], index: 3, kind: output, shape index: {0}]
  %s4 = inlined_call_operand.vmem [shape: f32[4,1,4], index: 4, kind: output, shape index: {1}]
  %s5 = inlined_call_operand.vmem [shape: f32[4,1,4], index: 5, kind: output, shape index: {2}]
  %6 = xla_tuple %s3, %s4, %s5
  %s7 = sld [smem:[#allocation0]]
  $region61: #{_forward.4} parent=0
    _
  %s9 = ssub.s32 1, %s7
  %s10 = scalar_select 0, %s9, %s7
  loop: start=0, step=1, limit=6
  $region2: #{_forward.4} parent=0 // loop_pre_header
    _
  $region3: #{_forward.4} parent=0 // loop_header
    %s12 = sphi 0, %s16
    %p13 = scmp.ge.s32.totalorder %s12, 6
    %s22 = sphi 0, %s24
    %s25 = sphi 0, %s22
    %s26 = sphi 0, %s25
    %s42 = sphi 0, %s26
    %s46 = sphi 0, %s46
    %s48 = sphi 0, %s46
    %s49 = sphi 0, %s48
    %s63 = sphi 0, %s49
    %s67 = sphi 0, %s67
    %s69 = sphi 0, %s67
    %s70 = sphi 0, %s69
    %s84 = sphi 0, %s70
    %s90 = sphi 0, %s92
    %s93 = sphi 0, %s90
    %s94 = sphi 0, %s93
    %s110 = sphi 0, %s94
    %s116 = sphi 0, %s118
    %s119 = sphi 0, %s116
    %s120 = sphi 0, %s119
    %s136 = sphi 0, %s120
    %s142 = sphi 0, %s144
    %s145 = sphi 0, %s142
    %s146 = sphi 0, %s145
    %s162 = sphi 0, %s146
  $region4: #{_forward.4} parent=0 // loop_header_branch
    %15 = sbr.rel (%p13) target = $region8
  $region5: #{_forward.4} parent=0 // loop_body
    %s17 = ssub.s32 %s12, 1
    %s18 = ssub.s32 %s12, 2
    %s19 = sadd.s32 %s12, 1
    %s20 = ssub.s32 %s12, %s19
    %p21 = scmp.eq.s32.totalorder %s20, 0
    %s23 = sadd.s32 %s22, 1
    %s24 = scalar_select %p21, %s22, %s23
    %p27 = pneg %p21
    %p28 = scmp.eq.s32.totalorder %s12, 3
    %p29 = por %p27, %p28
    %p30 = scmp.ne.s32.totalorder %s22, %s25
    %p31 = scmp.eq.s32.totalorder %s12, 0
    %p32 = por %p30, %p31
    %p33 = scmp.ne.s32.totalorder %s22, %s25
    %p34 = scmp.eq.s32.totalorder %s17, 3
    %p35 = por %p33, %p34
    %p36 = scmp.ne.s32.totalorder %s25, %s26
    %p37 = scmp.eq.s32.totalorder %s17, 0
    %p38 = por %p36, %p37
    %p39 = scmp.ne.s32.totalorder %s25, %s26
    %p40 = scmp.eq.s32.totalorder %s18, 3
    %p41 = por %p39, %p40
    %p43 = scmp.ne.s32.totalorder %s26, %s42
    %p44 = scmp.eq.s32.totalorder %s18, 0
    %p45 = por %p43, %p44
    %s47 = sadd.s32 %s46, 1
    %p50 = scmp.eq.s32.totalorder %s12, 3
    %p51 = scmp.ne.s32.totalorder %s46, %s48
    %p52 = scmp.eq.s32.totalorder %s12, 0
    %p53 = por %p51, %p52
    %p54 = scmp.ne.s32.totalorder %s46, %s48
    %p55 = scmp.eq.s32.totalorder %s17, 3
    %p56 = por %p54, %p55
    %p57 = scmp.ne.s32.totalorder %s48, %s49
    %p58 = scmp.eq.s32.totalorder %s17, 0
    %p59 = por %p57, %p58
    %p60 = scmp.ne.s32.totalorder %s48, %s49
    %p61 = scmp.eq.s32.totalorder %s18, 3
    %p62 = por %p60, %p61
    %p64 = scmp.ne.s32.totalorder %s49, %s63
    %p65 = scmp.eq.s32.totalorder %s18, 0
    %p66 = por %p64, %p65
    %s68 = sadd.s32 %s67, 1
    %p71 = scmp.eq.s32.totalorder %s12, 3
    %p72 = scmp.ne.s32.totalorder %s67, %s69
    %p73 = scmp.eq.s32.totalorder %s12, 0
    %p74 = por %p72, %p73
    %p75 = scmp.ne.s32.totalorder %s67, %s69
    %p76 = scmp.eq.s32.totalorder %s17, 3
    %p77 = por %p75, %p76
    %p78 = scmp.ne.s32.totalorder %s69, %s70
    %p79 = scmp.eq.s32.totalorder %s17, 0
    %p80 = por %p78, %p79
    %p81 = scmp.ne.s32.totalorder %s69, %s70
    %p82 = scmp.eq.s32.totalorder %s18, 3
    %p83 = por %p81, %p82
    %p85 = scmp.ne.s32.totalorder %s70, %s84
    %p86 = scmp.eq.s32.totalorder %s18, 0
    %p87 = por %p85, %p86
    %s88 = ssub.s32 %s12, %s19
    %p89 = scmp.eq.s32.totalorder %s88, 0
    %s91 = sadd.s32 %s90, 1
    %s92 = scalar_select %p89, %s90, %s91
    %p95 = pneg %p89
    %p96 = scmp.eq.s32.totalorder %s12, 3
    %p97 = por %p95, %p96
    %p98 = scmp.ne.s32.totalorder %s90, %s93
    %p99 = scmp.eq.s32.totalorder %s12, 0
    %p100 = por %p98, %p99
    %p101 = scmp.ne.s32.totalorder %s90, %s93
    %p102 = scmp.eq.s32.totalorder %s17, 3
    %p103 = por %p101, %p102
    %p104 = scmp.ne.s32.totalorder %s93, %s94
    %p105 = scmp.eq.s32.totalorder %s17, 0
    %p106 = por %p104, %p105
    %p107 = scmp.ne.s32.totalorder %s93, %s94
    %p108 = scmp.eq.s32.totalorder %s18, 3
    %p109 = por %p107, %p108
    %p111 = scmp.ne.s32.totalorder %s94, %s110
    %p112 = scmp.eq.s32.totalorder %s18, 0
    %p113 = por %p111, %p112
    %s114 = ssub.s32 %s12, %s19
    %p115 = scmp.eq.s32.totalorder %s114, 0
    %s117 = sadd.s32 %s116, 1
    %s118 = scalar_select %p115, %s116, %s117
    %p121 = pneg %p115
    %p122 = scmp.eq.s32.totalorder %s12, 3
    %p123 = por %p121, %p122
    %p124 = scmp.ne.s32.totalorder %s116, %s119
    %p125 = scmp.eq.s32.totalorder %s12, 0
    %p126 = por %p124, %p125
    %p127 = scmp.ne.s32.totalorder %s116, %s119
    %p128 = scmp.eq.s32.totalorder %s17, 3
    %p129 = por %p127, %p128
    %p130 = scmp.ne.s32.totalorder %s119, %s120
    %p131 = scmp.eq.s32.totalorder %s17, 0
    %p132 = por %p130, %p131
    %p133 = scmp.ne.s32.totalorder %s119, %s120
    %p134 = scmp.eq.s32.totalorder %s18, 3
    %p135 = por %p133, %p134
    %p137 = scmp.ne.s32.totalorder %s120, %s136
    %p138 = scmp.eq.s32.totalorder %s18, 0
    %p139 = por %p137, %p138
    %s140 = ssub.s32 %s12, %s19
    %p141 = scmp.eq.s32.totalorder %s140, 0
    %s143 = sadd.s32 %s142, 1
    %s144 = scalar_select %p141, %s142, %s143
    %p147 = pneg %p141
    %p148 = scmp.eq.s32.totalorder %s12, 3
    %p149 = por %p147, %p148
    %p150 = scmp.ne.s32.totalorder %s142, %s145
    %p151 = scmp.eq.s32.totalorder %s12, 0
    %p152 = por %p150, %p151
    %p153 = scmp.ne.s32.totalorder %s142, %s145
    %p154 = scmp.eq.s32.totalorder %s17, 3
    %p155 = por %p153, %p154
    %p156 = scmp.ne.s32.totalorder %s145, %s146
    %p157 = scmp.eq.s32.totalorder %s17, 0
    %p158 = por %p156, %p157
    %p159 = scmp.ne.s32.totalorder %s145, %s146
    %p160 = scmp.eq.s32.totalorder %s18, 3
    %p161 = por %p159, %p160
    %p163 = scmp.ne.s32.totalorder %s146, %s162
    %p164 = scmp.eq.s32.totalorder %s18, 0
    %p165 = por %p163, %p164
    %p166 = scmp.le.s32.totalorder 1, %s12
    %p167 = scmp.lt.s32.totalorder %s12, 5
    %p168 = pnand %p166, %p167
    %p169 = pneg %p168
    // Predicated region
    $region9: #{_forward.4} parent=5 // pred_check
      _
    $region10: #{_forward.4} parent=5 // pred_check_branch
      %171 = sbr.rel (%p168) target = $region12
    $region11: #{_forward.4} parent=5 // pred_region
      %s172 = ssub.s32 %s12, 1
      // Predicated region
      $region13: #{_forward.4} parent=11 // pred_check
        %p173 = pneg %p59
      $region14: #{_forward.4} parent=11 // pred_check_branch
        %175 = sbr.rel (%p173) target = $region16
      $region15: #{_forward.4} parent=11 // pred_region
        _
      $region16: #{_forward.4} parent=11 // pred_fallthru
        _
      // Predicated region
      $region17: #{_forward.4} parent=11 // pred_check
        %p176 = pneg %p80
      $region18: #{_forward.4} parent=11 // pred_check_branch
        %178 = sbr.rel (%p176) target = $region20
      $region19: #{_forward.4} parent=11 // pred_region
        _
      $region20: #{_forward.4} parent=11 // pred_fallthru
        _
    $region12: #{_forward.4} parent=5 // pred_fallthru
      _
    %p179 = scmp.lt.s32.totalorder %s12, 4
    // Predicated region
    $region21: #{_forward.4} parent=5 // pred_check
      %p180 = pneg %p179
    $region22: #{_forward.4} parent=5 // pred_check_branch
      %182 = sbr.rel (%p180) target = $region24
    $region23: #{_forward.4} parent=5 // pred_region
      // Predicated region
      $region25: #{_forward.4} parent=23 // pred_check
        %p183 = pneg %p32
      $region26: #{_forward.4} parent=23 // pred_check_branch
        %185 = sbr.rel (%p183) target = $region28
      $region27: #{_forward.4} parent=23 // pred_region
        %p186 = scmp.lt.s32.totalorder %s12, 3
        %s187 = scalar_select %p186, %s12, 3
        %s188 = smul.addr %s187, 30
        %s189 = smul.addr %s188, 4
        %s190 = scalar_lea.vmem %s0, %s189
      $region28: #{_forward.4} parent=23 // pred_fallthru
        _
    $region24: #{_forward.4} parent=5 // pred_fallthru
      _
    %p191 = scmp.le.s32.totalorder 1, %s12
    %p192 = scmp.lt.s32.totalorder %s12, 5
    %p193 = pnand %p191, %p192
    %p194 = pneg %p193
    // Predicated region
    $region29: #{_forward.4} parent=5 // pred_check
      _
    $region30: #{_forward.4} parent=5 // pred_check_branch
      %196 = sbr.rel (%p193) target = $region32
    $region31: #{_forward.4} parent=5 // pred_region
      %s197 = ssub.s32 %s12, 1
      %p198 = scmp.lt.s32.totalorder %s17, 3
      %s199 = scalar_select %p198, %s17, 3
      %s200 = smul.addr %s199, 30
      %s201 = smul.addr %s200, 4
      %s202 = scalar_lea.vmem %s0, %s201
      %p203 = pneg %p38
      %p204 = pneg %p35
      %p205 = pneg %p59
      %p206 = pneg %p56
      %p207 = pneg %p80
      %p208 = pneg %p77
      %p209 = pneg %p106
      %p210 = pneg %p103
      %p211 = scmp.lt.s32.totalorder %s17, 3
      %s212 = scalar_select %p211, %s17, 3
      %s213 = smul.addr %s212, 16
      %s214 = smul.addr %s213, 4
      %s215 = scalar_lea.vmem %s3, %s214
      %p216 = pneg %p132
      %p217 = pneg %p129
      %p218 = scmp.lt.s32.totalorder %s17, 3
      %s219 = scalar_select %p218, %s17, 3
      %s220 = scalar_lea.vmem %s4, %s219
      %p221 = pneg %p158
      %p222 = pneg %p155
      %p223 = scmp.lt.s32.totalorder %s17, 3
      %s224 = scalar_select %p223, %s17, 3
      %s225 = scalar_lea.vmem %s5, %s224
      %p226 = scmp.lt.s32.totalorder %s17, 3
      %s227 = scalar_select %p226, %s17, 3
      %s228 = smul.addr %s227, 30
      %s229 = smul.addr %s228, 4
      %s230 = scalar_lea.vmem %s0, %s229
      %p231 = scmp.lt.s32.totalorder %s17, 3
      %s232 = scalar_select %p231, %s17, 3
      %s233 = smul.addr %s232, 16
      %s234 = smul.addr %s233, 4
      %s235 = scalar_lea.vmem %s3, %s234
      %p236 = scmp.lt.s32.totalorder %s17, 3
      %s237 = scalar_select %p236, %s17, 3
      %s238 = scalar_lea.vmem %s4, %s237
      %p239 = scmp.lt.s32.totalorder %s17, 3
      %s240 = scalar_select %p239, %s17, 3
      %s241 = scalar_lea.vmem %s5, %s240
      %v243 = vld [vmem:[%s230] sm:$0xf]
      %v244 = vld [vmem:[%s230 + $0x4] sm:$0xf]
      %v245 = vld [vmem:[%s230 + $0xc] sm:$0xf]
      %v246 = vld [vmem:[%s230 + $0x10] sm:$0xf]
      %v247 = vld [vmem:[%s230 + $0x18] sm:$0xf]
      %v248 = vld [vmem:[%s230 + $0x1c] sm:$0xf]
      %v249 = vld [vmem:[%s230 + $0x24] sm:$0xf]
      %v250 = vld [vmem:[%s230 + $0x28] sm:$0xf]
      %v251 = vld [vmem:[%s230 + $0x30] sm:$0xf]
      %v252 = vld [vmem:[%s230 + $0x34] sm:$0xf]
      %v253 = vld [vmem:[%s230 + $0x3c] sm:$0xf]
      %v254 = vld [vmem:[%s230 + $0x40] sm:$0xf]
      %v255 = vld [vmem:[%s230 + $0x48] sm:$0xf]
      %v256 = vld [vmem:[%s230 + $0x4c] sm:$0xf]
      %v257 = vld [vmem:[%s230 + $0x54] sm:$0xf]
      %v258 = vld [vmem:[%s230 + $0x58] sm:$0xf]
      %v259 = vld [vmem:[%s230 + $0x60] sm:$0xf]
      %v260 = vld [vmem:[%s230 + $0x64] sm:$0xf]
      %v261 = vld [vmem:[%s230 + $0x6c] sm:$0xf]
      %v262 = vld [vmem:[%s230 + $0x70] sm:$0xf]
      %v283 = vunpack.c.l.b16 %v243
      %v284 = vunpack.c.l.b16 %v244
      %v285 = vunpack.c.l.b16 %v245
      %v286 = vunpack.c.l.b16 %v246
      %v287 = vunpack.c.l.b16 %v247
      %v288 = vunpack.c.l.b16 %v248
      %v289 = vunpack.c.l.b16 %v249
      %v290 = vunpack.c.l.b16 %v250
      %v291 = vunpack.c.l.b16 %v251
      %v292 = vunpack.c.l.b16 %v252
      %v293 = vunpack.c.l.b16 %v253
      %v294 = vunpack.c.l.b16 %v254
      %v295 = vunpack.c.l.b16 %v255
      %v296 = vunpack.c.l.b16 %v256
      %v297 = vunpack.c.l.b16 %v257
      %v298 = vunpack.c.l.b16 %v258
      %v299 = vunpack.c.l.b16 %v259
      %v300 = vunpack.c.l.b16 %v260
      %v301 = vunpack.c.l.b16 %v261
      %v302 = vunpack.c.l.b16 %v262
      %v303 = vpack.c.b16 %v284, %v283
      %v304 = vpack.c.b16 %v286, %v285
      %v305 = vpack.c.b16 %v288, %v287
      %v306 = vpack.c.b16 %v290, %v289
      %v307 = vpack.c.b16 %v292, %v291
      %v308 = vpack.c.b16 %v294, %v293
      %v309 = vpack.c.b16 %v296, %v295
      %v310 = vpack.c.b16 %v298, %v297
      %v311 = vpack.c.b16 %v300, %v299
      %v312 = vpack.c.b16 %v302, %v301
      %vm323 = vcmask 64512
      %324 = vst.msk [vmem:[#allocation2] sm:$0xff] %vm323, %v303
      %325 = vst.msk [vmem:[#allocation2 + $0x8] sm:$0xff] %vm323, %v304
      %326 = vst.msk [vmem:[#allocation2 + $0x10] sm:$0xff] %vm323, %v305
      %327 = vst.msk [vmem:[#allocation2 + $0x18] sm:$0xff] %vm323, %v306
      %328 = vst.msk [vmem:[#allocation2 + $0x20] sm:$0xff] %vm323, %v307
      %329 = vst.msk [vmem:[#allocation2 + $0x28] sm:$0xff] %vm323, %v308
      %330 = vst.msk [vmem:[#allocation2 + $0x30] sm:$0xff] %vm323, %v309
      %331 = vst.msk [vmem:[#allocation2 + $0x38] sm:$0xff] %vm323, %v310
      %332 = vst.msk [vmem:[#allocation2 + $0x40] sm:$0xff] %vm323, %v311
      %333 = vst.msk [vmem:[#allocation2 + $0x48] sm:$0xff] %vm323, %v312
      %v334 = vld [vmem:[%s230] sm:$0xf]
      %v335 = vld [vmem:[%s230 + $0x4] sm:$0xf]
      %v336 = vld [vmem:[%s230 + $0x8] sm:$0x1]
      %v337 = vld [vmem:[%s230 + $0xc] sm:$0xf]
      %v338 = vld [vmem:[%s230 + $0x10] sm:$0xf]
      %v339 = vld [vmem:[%s230 + $0x14] sm:$0x1]
      %v340 = vld [vmem:[%s230 + $0x18] sm:$0xf]
      %v341 = vld [vmem:[%s230 + $0x1c] sm:$0xf]
      %v342 = vld [vmem:[%s230 + $0x20] sm:$0x1]
      %v343 = vld [vmem:[%s230 + $0x24] sm:$0xf]
      %v344 = vld [vmem:[%s230 + $0x28] sm:$0xf]
      %v345 = vld [vmem:[%s230 + $0x2c] sm:$0x1]
      %v346 = vld [vmem:[%s230 + $0x30] sm:$0xf]
      %v347 = vld [vmem:[%s230 + $0x34] sm:$0xf]
      %v348 = vld [vmem:[%s230 + $0x38] sm:$0x1]
      %v349 = vld [vmem:[%s230 + $0x3c] sm:$0xf]
      %v350 = vld [vmem:[%s230 + $0x40] sm:$0xf]
      %v351 = vld [vmem:[%s230 + $0x44] sm:$0x1]
      %v352 = vld [vmem:[%s230 + $0x48] sm:$0xf]
      %v353 = vld [vmem:[%s230 + $0x4c] sm:$0xf]
      %v354 = vld [vmem:[%s230 + $0x50] sm:$0x1]
      %v355 = vld [vmem:[%s230 + $0x54] sm:$0xf]
      %v356 = vld [vmem:[%s230 + $0x58] sm:$0xf]
      %v357 = vld [vmem:[%s230 + $0x5c] sm:$0x1]
      %v358 = vld [vmem:[%s230 + $0x60] sm:$0xf]
      %v359 = vld [vmem:[%s230 + $0x64] sm:$0xf]
      %v360 = vld [vmem:[%s230 + $0x68] sm:$0x1]
      %v361 = vld [vmem:[%s230 + $0x6c] sm:$0xf]
      %v362 = vld [vmem:[%s230 + $0x70] sm:$0xf]
      %v363 = vld [vmem:[%s230 + $0x74] sm:$0x1]
      %v394 = vunpack.c.l.b16 %v334
      %v395 = vunpack.c.l.b16 %v335
      %v396 = vunpack.c.l.b16 %v336
      %v397 = vunpack.c.l.b16 %v337
      %v398 = vunpack.c.l.b16 %v338
      %v399 = vunpack.c.l.b16 %v339
      %v400 = vunpack.c.l.b16 %v340
      %v401 = vunpack.c.l.b16 %v341
      %v402 = vunpack.c.l.b16 %v342
      %v403 = vunpack.c.l.b16 %v343
      %v404 = vunpack.c.l.b16 %v344
      %v405 = vunpack.c.l.b16 %v345
      %v406 = vunpack.c.l.b16 %v346
      %v407 = vunpack.c.l.b16 %v347
      %v408 = vunpack.c.l.b16 %v348
      %v409 = vunpack.c.l.b16 %v349
      %v410 = vunpack.c.l.b16 %v350
      %v411 = vunpack.c.l.b16 %v351
      %v412 = vunpack.c.l.b16 %v352
      %v413 = vunpack.c.l.b16 %v353
      %v414 = vunpack.c.l.b16 %v354
      %v415 = vunpack.c.l.b16 %v355
      %v416 = vunpack.c.l.b16 %v356
      %v417 = vunpack.c.l.b16 %v357
      %v418 = vunpack.c.l.b16 %v358
      %v419 = vunpack.c.l.b16 %v359
      %v420 = vunpack.c.l.b16 %v360
      %v421 = vunpack.c.l.b16 %v361
      %v422 = vunpack.c.l.b16 %v362
      %v423 = vunpack.c.l.b16 %v363
      %v424 = vpack.c.b16 %v395, %v394
      %v425 = vpack.c.b16 %v396, %v396
      %v426 = vpack.c.b16 %v398, %v397
      %v427 = vpack.c.b16 %v399, %v399
      %v428 = vpack.c.b16 %v401, %v400
      %v429 = vpack.c.b16 %v402, %v402
      %v430 = vpack.c.b16 %v404, %v403
      %v431 = vpack.c.b16 %v405, %v405
      %v432 = vpack.c.b16 %v407, %v406
      %v433 = vpack.c.b16 %v408, %v408
      %v434 = vpack.c.b16 %v410, %v409
      %v435 = vpack.c.b16 %v411, %v411
      %v436 = vpack.c.b16 %v413, %v412
      %v437 = vpack.c.b16 %v414, %v414
      %v438 = vpack.c.b16 %v416, %v415
      %v439 = vpack.c.b16 %v417, %v417
      %v440 = vpack.c.b16 %v419, %v418
      %v441 = vpack.c.b16 %v420, %v420
      %v442 = vpack.c.b16 %v422, %v421
      %v443 = vpack.c.b16 %v423, %v423
      %vm444 = vsmask.f32 7424
      %v446 = vshrl.u32 %v424, 16
      %v448 = vshll.u32 %v424, 16
      %v450 = vrot.slane %v448, 1
      %v451 = vor.u32 %v446, %v450
      %v453 = vshll.u32 %v425, 16
      %v455 = vrot.slane %v453, 1
      %v456 = vsel %vm444, %v451, %v455
      %v458 = vshrl.u32 %v426, 16
      %v460 = vshll.u32 %v426, 16
      %v462 = vrot.slane %v460, 1
      %v463 = vor.u32 %v458, %v462
      %v465 = vshll.u32 %v427, 16
      %v467 = vrot.slane %v465, 1
      %v468 = vsel %vm444, %v463, %v467
      %v470 = vshrl.u32 %v428, 16
      %v472 = vshll.u32 %v428, 16
      %v474 = vrot.slane %v472, 1
      %v475 = vor.u32 %v470, %v474
      %v477 = vshll.u32 %v429, 16
      %v479 = vrot.slane %v477, 1
      %v480 = vsel %vm444, %v475, %v479
      %v482 = vshrl.u32 %v430, 16
      %v484 = vshll.u32 %v430, 16
      %v486 = vrot.slane %v484, 1
      %v487 = vor.u32 %v482, %v486
      %v489 = vshll.u32 %v431, 16
      %v491 = vrot.slane %v489, 1
      %v492 = vsel %vm444, %v487, %v491
      %v494 = vshrl.u32 %v432, 16
      %v496 = vshll.u32 %v432, 16
      %v498 = vrot.slane %v496, 1
      %v499 = vor.u32 %v494, %v498
      %v501 = vshll.u32 %v433, 16
      %v503 = vrot.slane %v501, 1
      %v504 = vsel %vm444, %v499, %v503
      %v506 = vshrl.u32 %v434, 16
      %v508 = vshll.u32 %v434, 16
      %v510 = vrot.slane %v508, 1
      %v511 = vor.u32 %v506, %v510
      %v513 = vshll.u32 %v435, 16
      %v515 = vrot.slane %v513, 1
      %v516 = vsel %vm444, %v511, %v515
      %v518 = vshrl.u32 %v436, 16
      %v520 = vshll.u32 %v436, 16
      %v522 = vrot.slane %v520, 1
      %v523 = vor.u32 %v518, %v522
      %v525 = vshll.u32 %v437, 16
      %v527 = vrot.slane %v525, 1
      %v528 = vsel %vm444, %v523, %v527
      %v530 = vshrl.u32 %v438, 16
      %v532 = vshll.u32 %v438, 16
      %v534 = vrot.slane %v532, 1
      %v535 = vor.u32 %v530, %v534
      %v537 = vshll.u32 %v439, 16
      %v539 = vrot.slane %v537, 1
      %v540 = vsel %vm444, %v535, %v539
      %v542 = vshrl.u32 %v440, 16
      %v544 = vshll.u32 %v440, 16
      %v546 = vrot.slane %v544, 1
      %v547 = vor.u32 %v542, %v546
      %v549 = vshll.u32 %v441, 16
      %v551 = vrot.slane %v549, 1
      %v552 = vsel %vm444, %v547, %v551
      %v554 = vshrl.u32 %v442, 16
      %v556 = vshll.u32 %v442, 16
      %v558 = vrot.slane %v556, 1
      %v559 = vor.u32 %v554, %v558
      %v561 = vshll.u32 %v443, 16
      %v563 = vrot.slane %v561, 1
      %v564 = vsel %vm444, %v559, %v563
      %565 = vrot.lane.b32.xlu0 %v456, 8
      %v566 = vpop.permute.xlu0 %565
      %567 = vrot.lane.b32.xlu0 %v468, 8
      %v568 = vpop.permute.xlu0 %567
      %569 = vrot.lane.b32.xlu0 %v480, 8
      %v570 = vpop.permute.xlu0 %569
      %571 = vrot.lane.b32.xlu0 %v492, 8
      %v572 = vpop.permute.xlu0 %571
      %573 = vrot.lane.b32.xlu0 %v504, 8
      %v574 = vpop.permute.xlu0 %573
      %575 = vrot.lane.b32.xlu0 %v516, 8
      %v576 = vpop.permute.xlu0 %575
      %577 = vrot.lane.b32.xlu0 %v528, 8
      %v578 = vpop.permute.xlu0 %577
      %579 = vrot.lane.b32.xlu0 %v540, 8
      %v580 = vpop.permute.xlu0 %579
      %581 = vrot.lane.b32.xlu0 %v552, 8
      %v582 = vpop.permute.xlu0 %581
      %583 = vrot.lane.b32.xlu0 %v564, 8
      %v584 = vpop.permute.xlu0 %583
      %vm595 = vcmask 130112
      %596 = vst.msk [vmem:[#allocation2] sm:$0xff] %vm595, %v566
      %597 = vst.msk [vmem:[#allocation2 + $0x8] sm:$0xff] %vm595, %v568
      %598 = vst.msk [vmem:[#allocation2 + $0x10] sm:$0xff] %vm595, %v570
      %599 = vst.msk [vmem:[#allocation2 + $0x18] sm:$0xff] %vm595, %v572
      %600 = vst.msk [vmem:[#allocation2 + $0x20] sm:$0xff] %vm595, %v574
      %601 = vst.msk [vmem:[#allocation2 + $0x28] sm:$0xff] %vm595, %v576
      %602 = vst.msk [vmem:[#allocation2 + $0x30] sm:$0xff] %vm595, %v578
      %603 = vst.msk [vmem:[#allocation2 + $0x38] sm:$0xff] %vm595, %v580
      %604 = vst.msk [vmem:[#allocation2 + $0x40] sm:$0xff] %vm595, %v582
      %605 = vst.msk [vmem:[#allocation2 + $0x48] sm:$0xff] %vm595, %v584
      %v606 = vld [vmem:[%s230] sm:$0xe]
      %v607 = vld [vmem:[%s230 + $0x4] sm:$0xf]
      %v608 = vld [vmem:[%s230 + $0x8] sm:$0x1]
      %v609 = vld [vmem:[%s230 + $0xc] sm:$0xe]
      %v610 = vld [vmem:[%s230 + $0x10] sm:$0xf]
      %v611 = vld [vmem:[%s230 + $0x14] sm:$0x1]
      %v612 = vld [vmem:[%s230 + $0x18] sm:$0xe]
      %v613 = vld [vmem:[%s230 + $0x1c] sm:$0xf]
      %v614 = vld [vmem:[%s230 + $0x20] sm:$0x1]
      %v615 = vld [vmem:[%s230 + $0x24] sm:$0xe]
      %v616 = vld [vmem:[%s230 + $0x28] sm:$0xf]
      %v617 = vld [vmem:[%s230 + $0x2c] sm:$0x1]
      %v618 = vld [vmem:[%s230 + $0x30] sm:$0xe]
      %v619 = vld [vmem:[%s230 + $0x34] sm:$0xf]
      %v620 = vld [vmem:[%s230 + $0x38] sm:$0x1]
      %v621 = vld [vmem:[%s230 + $0x3c] sm:$0xe]
      %v622 = vld [vmem:[%s230 + $0x40] sm:$0xf]
      %v623 = vld [vmem:[%s230 + $0x44] sm:$0x1]
      %v624 = vld [vmem:[%s230 + $0x48] sm:$0xe]
      %v625 = vld [vmem:[%s230 + $0x4c] sm:$0xf]
      %v626 = vld [vmem:[%s230 + $0x50] sm:$0x1]
      %v627 = vld [vmem:[%s230 + $0x54] sm:$0xe]
      %v628 = vld [vmem:[%s230 + $0x58] sm:$0xf]
      %v629 = vld [vmem:[%s230 + $0x5c] sm:$0x1]
      %v630 = vld [vmem:[%s230 + $0x60] sm:$0xe]
      %v631 = vld [vmem:[%s230 + $0x64] sm:$0xf]
      %v632 = vld [vmem:[%s230 + $0x68] sm:$0x1]
      %v633 = vld [vmem:[%s230 + $0x6c] sm:$0xe]
      %v634 = vld [vmem:[%s230 + $0x70] sm:$0xf]
      %v635 = vld [vmem:[%s230 + $0x74] sm:$0x1]
      %v666 = vunpack.c.l.b16 %v606
      %v667 = vunpack.c.l.b16 %v607
      %v668 = vunpack.c.l.b16 %v608
      %v669 = vunpack.c.l.b16 %v609
      %v670 = vunpack.c.l.b16 %v610
      %v671 = vunpack.c.l.b16 %v611
      %v672 = vunpack.c.l.b16 %v612
      %v673 = vunpack.c.l.b16 %v613
      %v674 = vunpack.c.l.b16 %v614
      %v675 = vunpack.c.l.b16 %v615
      %v676 = vunpack.c.l.b16 %v616
      %v677 = vunpack.c.l.b16 %v617
      %v678 = vunpack.c.l.b16 %v618
      %v679 = vunpack.c.l.b16 %v619
      %v680 = vunpack.c.l.b16 %v620
      %v681 = vunpack.c.l.b16 %v621
      %v682 = vunpack.c.l.b16 %v622
      %v683 = vunpack.c.l.b16 %v623
      %v684 = vunpack.c.l.b16 %v624
      %v685 = vunpack.c.l.b16 %v625
      %v686 = vunpack.c.l.b16 %v626
      %v687 = vunpack.c.l.b16 %v627
      %v688 = vunpack.c.l.b16 %v628
      %v689 = vunpack.c.l.b16 %v629
      %v690 = vunpack.c.l.b16 %v630
      %v691 = vunpack.c.l.b16 %v631
      %v692 = vunpack.c.l.b16 %v632
      %v693 = vunpack.c.l.b16 %v633
      %v694 = vunpack.c.l.b16 %v634
      %v695 = vunpack.c.l.b16 %v635
      %v696 = vpack.c.b16 %v667, %v666
      %v697 = vpack.c.b16 %v668, %v668
      %v698 = vpack.c.b16 %v670, %v669
      %v699 = vpack.c.b16 %v671, %v671
      %v700 = vpack.c.b16 %v673, %v672
      %v701 = vpack.c.b16 %v674, %v674
      %v702 = vpack.c.b16 %v676, %v675
      %v703 = vpack.c.b16 %v677, %v677
      %v704 = vpack.c.b16 %v679, %v678
      %v705 = vpack.c.b16 %v680, %v680
      %v706 = vpack.c.b16 %v682, %v681
      %v707 = vpack.c.b16 %v683, %v683
      %v708 = vpack.c.b16 %v685, %v684
      %v709 = vpack.c.b16 %v686, %v686
      %v710 = vpack.c.b16 %v688, %v687
      %v711 = vpack.c.b16 %v689, %v689
      %v712 = vpack.c.b16 %v691, %v690
      %v713 = vpack.c.b16 %v692, %v692
      %v714 = vpack.c.b16 %v694, %v693
      %v715 = vpack.c.b16 %v695, %v695
      %vm716 = vcmask 1046528
      %v717 = vrot.slane %v696, 1
      %v718 = vrot.slane %v697, 1
      %v719 = vsel %vm716, %v717, %v718
      %v720 = vrot.slane %v698, 1
      %v721 = vrot.slane %v699, 1
      %v722 = vsel %vm716, %v720, %v721
      %v723 = vrot.slane %v700, 1
      %v724 = vrot.slane %v701, 1
      %v725 = vsel %vm716, %v723, %v724
      %v726 = vrot.slane %v702, 1
      %v727 = vrot.slane %v703, 1
      %v728 = vsel %vm716, %v726, %v727
      %v729 = vrot.slane %v704, 1
      %v730 = vrot.slane %v705, 1
      %v731 = vsel %vm716, %v729, %v730
      %v732 = vrot.slane %v706, 1
      %v733 = vrot.slane %v707, 1
      %v734 = vsel %vm716, %v732, %v733
      %v735 = vrot.slane %v708, 1
      %v736 = vrot.slane %v709, 1
      %v737 = vsel %vm716, %v735, %v736
      %v738 = vrot.slane %v710, 1
      %v739 = vrot.slane %v711, 1
      %v740 = vsel %vm716, %v738, %v739
      %v741 = vrot.slane %v712, 1
      %v742 = vrot.slane %v713, 1
      %v743 = vsel %vm716, %v741, %v742
      %v744 = vrot.slane %v714, 1
      %v745 = vrot.slane %v715, 1
      %v746 = vsel %vm716, %v744, %v745
      %747 = vrot.lane.b32.xlu0 %v719, 16
      %v748 = vpop.permute.xlu0 %747
      %749 = vrot.lane.b32.xlu0 %v722, 16
      %v750 = vpop.permute.xlu0 %749
      %751 = vrot.lane.b32.xlu0 %v725, 16
      %v752 = vpop.permute.xlu0 %751
      %753 = vrot.lane.b32.xlu0 %v728, 16
      %v754 = vpop.permute.xlu0 %753
      %755 = vrot.lane.b32.xlu0 %v731, 16
      %v756 = vpop.permute.xlu0 %755
      %757 = vrot.lane.b32.xlu0 %v734, 16
      %v758 = vpop.permute.xlu0 %757
      %759 = vrot.lane.b32.xlu0 %v737, 16
      %v760 = vpop.permute.xlu0 %759
      %761 = vrot.lane.b32.xlu0 %v740, 16
      %v762 = vpop.permute.xlu0 %761
      %763 = vrot.lane.b32.xlu0 %v743, 16
      %v764 = vpop.permute.xlu0 %763
      %765 = vrot.lane.b32.xlu0 %v746, 16
      %v766 = vpop.permute.xlu0 %765
      %vm777 = vcmask 195712
      %778 = vst.msk [vmem:[#allocation2] sm:$0xff] %vm777, %v748
      %779 = vst.msk [vmem:[#allocation2 + $0x8] sm:$0xff] %vm777, %v750
      %780 = vst.msk [vmem:[#allocation2 + $0x10] sm:$0xff] %vm777, %v752
      %781 = vst.msk [vmem:[#allocation2 + $0x18] sm:$0xff] %vm777, %v754
      %782 = vst.msk [vmem:[#allocation2 + $0x20] sm:$0xff] %vm777, %v756
      %783 = vst.msk [vmem:[#allocation2 + $0x28] sm:$0xff] %vm777, %v758
      %784 = vst.msk [vmem:[#allocation2 + $0x30] sm:$0xff] %vm777, %v760
      %785 = vst.msk [vmem:[#allocation2 + $0x38] sm:$0xff] %vm777, %v762
      %786 = vst.msk [vmem:[#allocation2 + $0x40] sm:$0xff] %vm777, %v764
      %787 = vst.msk [vmem:[#allocation2 + $0x48] sm:$0xff] %vm777, %v766
      %v788 = vld [vmem:[#allocation2] sm:$0xff]
      %v789 = vld [vmem:[#allocation2 + $0x8] sm:$0xff]
      %v790 = vld [vmem:[#allocation2 + $0x10] sm:$0xff]
      %v791 = vld [vmem:[#allocation2 + $0x18] sm:$0xff]
      %v792 = vld [vmem:[#allocation2 + $0x20] sm:$0xff]
      %v793 = vld [vmem:[#allocation2 + $0x28] sm:$0xff]
      %v794 = vld [vmem:[#allocation2 + $0x30] sm:$0xff]
      %v795 = vld [vmem:[#allocation2 + $0x38] sm:$0xff]
      %v796 = vld [vmem:[%s1] sm:$0xf]
      %v797 = vld [vmem:[%s1 + $0x4] sm:$0xf]
      %v798 = vld [vmem:[%s1 + $0x8] sm:$0xf]
      %s799 = scalar_lea.vmem [#allocation2], 8
      %v800 = vld [vmem:[%s799] sm:$0xff]
      %v801 = vld [vmem:[%s799 + $0x8] sm:$0xff]
      %v802 = vld [vmem:[%s799 + $0x10] sm:$0xff]
      %v803 = vld [vmem:[%s799 + $0x18] sm:$0xff]
      %v804 = vld [vmem:[%s799 + $0x20] sm:$0xff]
      %v805 = vld [vmem:[%s799 + $0x28] sm:$0xff]
      %v806 = vld [vmem:[%s799 + $0x30] sm:$0xff]
      %v807 = vld [vmem:[%s799 + $0x38] sm:$0xff]
      %s808 = scalar_lea.vmem %s1, 12
      %v809 = vld [vmem:[%s808] sm:$0xf]
      %v810 = vld [vmem:[%s808 + $0x4] sm:$0xf]
      %v811 = vld [vmem:[%s808 + $0x8] sm:$0xf]
      %v815 = vunpack.c.l.b16 %v809
      %v816 = vunpack.c.l.b16 %v810
      %v817 = vunpack.c.l.b16 %v811
      %v818 = vpack.c.b16 %v816, %v815
      %v819 = vpack.c.b16 %v817, %v817
      %vm821 = vcmask 195584
      %v823 = vsel %vm821, %v800, 0
      %v826 = vsel %vm821, %v801, 0
      %v829 = vsel %vm821, %v802, 0
      %v832 = vsel %vm821, %v803, 0
      %v835 = vsel %vm821, %v804, 0
      %v838 = vsel %vm821, %v805, 0
      %v841 = vsel %vm821, %v806, 0
      %v844 = vsel %vm821, %v807, 0
      %vm846 = vcmask 1043456
      %v848 = vsel %vm846, %v819, 0
      %850 = vmatprep.subr.bf16.mxu0 0
      %851 = vmatpush1.bf16.msra.mxu0 %v818
      %852 = vmatprep.subr.bf16.mxu0 0
      %853 = vmatpush1.bf16.msra.mxu0 %v848
      %854 = vmatprep.subr.bf16.mxu0 0
      %855 = vmatpush1.bf16.msra.mxu0 0
      %856 = vmatprep.subr.bf16.mxu0 0
      %857 = vmatpush1.bf16.msra.mxu0 0
      %858 = vmatprep.subr.bf16.mxu0 0
      %859 = vmatpush1.bf16.msra.mxu0 0
      %860 = vmatprep.subr.bf16.mxu0 0
      %861 = vmatpush1.bf16.msra.mxu0 0
      %862 = vmatprep.subr.bf16.mxu0 0
      %863 = vmatpush1.bf16.msra.mxu0 0
      %864 = vmatprep.subr.bf16.mxu0 0
      %865 = vmatpush1.bf16.msra.mxu0 0
      %866 = vmatprep.subr.bf16.mxu0 0
      %867 = vmatpush1.bf16.msra.mxu0 0
      %868 = vmatprep.subr.bf16.mxu0 0
      %869 = vmatpush1.bf16.msra.mxu0 0
      %870 = vmatprep.subr.bf16.mxu0 0
      %871 = vmatpush1.bf16.msra.mxu0 0
      %872 = vmatprep.subr.bf16.mxu0 0
      %873 = vmatpush1.bf16.msra.mxu0 0
      %874 = vmatprep.subr.bf16.mxu0 0
      %875 = vmatpush1.bf16.msra.mxu0 0
      %876 = vmatprep.subr.bf16.mxu0 0
      %877 = vmatpush1.bf16.msra.mxu0 0
      %878 = vmatprep.subr.bf16.mxu0 0
      %879 = vmatpush1.bf16.msra.mxu0 0
      %880 = vmatprep.subr.bf16.mxu0 0
      %881 = vmatpush1.bf16.msra.mxu0 0
      %882 = vmatprep.mubr.bf16.mxu0 0
      %883 = vmatmul.mubr.bf16.gmra.mrb[0].mxu0 %v823
      %v884 = vpop.f32.mrb[0].mxu0
      %v885 = vadd.f32 0.0, %v884
      %v886 = vpop.f32.mrb[0].mxu0
      %v887 = vpop.f32.mrb[0].mxu0
      %v888 = vadd.f32 0.0, %v887
      %v889 = vpop.f32.mrb[0].mxu0
      %890 = vmatprep.mubr.bf16.mxu0 0
      %891 = vmatmul.mubr.bf16.gmra.mrb[0].mxu0 %v826
      %v892 = vpop.f32.mrb[0].mxu0
      %v893 = vadd.f32 0.0, %v892
      %v894 = vpop.f32.mrb[0].mxu0
      %v895 = vpop.f32.mrb[0].mxu0
      %v896 = vadd.f32 0.0, %v895
      %v897 = vpop.f32.mrb[0].mxu0
      %898 = vmatprep.mubr.bf16.mxu0 0
      %899 = vmatmul.mubr.bf16.gmra.mrb[0].mxu0 %v829
      %v900 = vpop.f32.mrb[0].mxu0
      %v901 = vadd.f32 0.0, %v900
      %v902 = vpop.f32.mrb[0].mxu0
      %v903 = vpop.f32.mrb[0].mxu0
      %v904 = vadd.f32 0.0, %v903
      %v905 = vpop.f32.mrb[0].mxu0
      %906 = vmatprep.mubr.bf16.mxu0 0
      %907 = vmatmul.mubr.bf16.gmra.mrb[0].mxu0 %v832
      %v908 = vpop.f32.mrb[0].mxu0
      %v909 = vadd.f32 0.0, %v908
      %v910 = vpop.f32.mrb[0].mxu0
      %v911 = vpop.f32.mrb[0].mxu0
      %v912 = vadd.f32 0.0, %v911
      %v913 = vpop.f32.mrb[0].mxu0
      %914 = vmatprep.mubr.bf16.mxu0 0
      %915 = vmatmul.mubr.bf16.gmra.mrb[0].mxu0 %v835
      %v916 = vpop.f32.mrb[0].mxu0
      %v917 = vadd.f32 0.0, %v916
      %v918 = vpop.f32.mrb[0].mxu0
      %v919 = vpop.f32.mrb[0].mxu0
      %v920 = vadd.f32 0.0, %v919
      %v921 = vpop.f32.mrb[0].mxu0
      %922 = vmatprep.mubr.bf16.mxu0 0
      %923 = vmatmul.mubr.bf16.gmra.mrb[0].mxu0 %v838
      %v924 = vpop.f32.mrb[0].mxu0
      %v925 = vadd.f32 0.0, %v924
      %v926 = vpop.f32.mrb[0].mxu0
      %v927 = vpop.f32.mrb[0].mxu0
      %v928 = vadd.f32 0.0, %v927
      %v929 = vpop.f32.mrb[0].mxu0
      %930 = vmatprep.mubr.bf16.mxu0 0
      %931 = vmatmul.mubr.bf16.gmra.mrb[0].mxu0 %v841
      %v932 = vpop.f32.mrb[0].mxu0
      %v933 = vadd.f32 0.0, %v932
      %v934 = vpop.f32.mrb[0].mxu0
      %v935 = vpop.f32.mrb[0].mxu0
      %v936 = vadd.f32 0.0, %v935
      %v937 = vpop.f32.mrb[0].mxu0
      %938 = vmatprep.mubr.bf16.mxu0 0
      %939 = vmatmul.mubr.bf16.gmra.mrb[0].mxu0 %v844
      %v940 = vpop.f32.mrb[0].mxu0
      %v941 = vadd.f32 0.0, %v940
      %v942 = vpop.f32.mrb[0].mxu0
      %v943 = vpop.f32.mrb[0].mxu0
      %v944 = vadd.f32 0.0, %v943
      %v945 = vpop.f32.mrb[0].mxu0
      %946 = vdwg.mxu0
      %v950 = vunpack.c.l.b16 %v796
      %v951 = vunpack.c.l.b16 %v797
      %v952 = vunpack.c.l.b16 %v798
      %v953 = vpack.c.b16 %v951, %v950
      %v954 = vpack.c.b16 %v952, %v952
      %v957 = vsel %vm821, %v788, 0
      %v960 = vsel %vm821, %v789, 0
      %v963 = vsel %vm821, %v790, 0
      %v966 = vsel %vm821, %v791, 0
      %v969 = vsel %vm821, %v792, 0
      %v972 = vsel %vm821, %v793, 0
      %v975 = vsel %vm821, %v794, 0
      %v978 = vsel %vm821, %v795, 0
      %v981 = vsel %vm846, %v954, 0
      %983 = vmatprep.subr.bf16.mxu0 0
      %984 = vmatpush1.bf16.msra.mxu0 %v953
      %985 = vmatprep.subr.bf16.mxu0 0
      %986 = vmatpush1.bf16.msra.mxu0 %v981
      %987 = vmatprep.subr.bf16.mxu0 0
      %988 = vmatpush1.bf16.msra.mxu0 0
      %989 = vmatprep.subr.bf16.mxu0 0
      %990 = vmatpush1.bf16.msra.mxu0 0
      %991 = vmatprep.subr.bf16.mxu0 0
      %992 = vmatpush1.bf16.msra.mxu0 0
      %993 = vmatprep.subr.bf16.mxu0 0
      %994 = vmatpush1.bf16.msra.mxu0 0
      %995 = vmatprep.subr.bf16.mxu0 0
      %996 = vmatpush1.bf16.msra.mxu0 0
      %997 = vmatprep.subr.bf16.mxu0 0
      %998 = vmatpush1.bf16.msra.mxu0 0
      %999 = vmatprep.subr.bf16.mxu0 0
      %1000 = vmatpush1.bf16.msra.mxu0 0
      %1001 = vmatprep.subr.bf16.mxu0 0
      %1002 = vmatpush1.bf16.msra.mxu0 0
      %1003 = vmatprep.subr.bf16.mxu0 0
      %1004 = vmatpush1.bf16.msra.mxu0 0
      %1005 = vmatprep.subr.bf16.mxu0 0
      %1006 = vmatpush1.bf16.msra.mxu0 0
      %1007 = vmatprep.subr.bf16.mxu0 0
      %1008 = vmatpush1.bf16.msra.mxu0 0
      %1009 = vmatprep.subr.bf16.mxu0 0
      %1010 = vmatpush1.bf16.msra.mxu0 0
      %1011 = vmatprep.subr.bf16.mxu0 0
      %1012 = vmatpush1.bf16.msra.mxu0 0
      %1013 = vmatprep.subr.bf16.mxu0 0
      %1014 = vmatpush1.bf16.msra.mxu0 0
      %1015 = vmatprep.mubr.bf16.mxu0 0
      %1016 = vmatmul.mubr.bf16.gmra.mrb[0].mxu0 %v957
      %v1017 = vpop.f32.mrb[0].mxu0
      %v1018 = vadd.f32 %v885, %v1017
      %v1019 = vpop.f32.mrb[0].mxu0
      %v1020 = vpop.f32.mrb[0].mxu0
      %v1021 = vadd.f32 %v888, %v1020
      %v1022 = vpop.f32.mrb[0].mxu0
      %1023 = vmatprep.mubr.bf16.mxu0 0
      %1024 = vmatmul.mubr.bf16.gmra.mrb[0].mxu0 %v960
      %v1025 = vpop.f32.mrb[0].mxu0
      %v1026 = vadd.f32 %v893, %v1025
      %v1027 = vpop.f32.mrb[0].mxu0
      %v1028 = vpop.f32.mrb[0].mxu0
      %v1029 = vadd.f32 %v896, %v1028
      %v1030 = vpop.f32.mrb[0].mxu0
      %1031 = vmatprep.mubr.bf16.mxu0 0
      %1032 = vmatmul.mubr.bf16.gmra.mrb[0].mxu0 %v963
      %v1033 = vpop.f32.mrb[0].mxu0
      %v1034 = vadd.f32 %v901, %v1033
      %v1035 = vpop.f32.mrb[0].mxu0
      %v1036 = vpop.f32.mrb[0].mxu0
      %v1037 = vadd.f32 %v904, %v1036
      %v1038 = vpop.f32.mrb[0].mxu0
      %1039 = vmatprep.mubr.bf16.mxu0 0
      %1040 = vmatmul.mubr.bf16.gmra.mrb[0].mxu0 %v966
      %v1041 = vpop.f32.mrb[0].mxu0
      %v1042 = vadd.f32 %v909, %v1041
      %v1043 = vpop.f32.mrb[0].mxu0
      %v1044 = vpop.f32.mrb[0].mxu0
      %v1045 = vadd.f32 %v912, %v1044
      %v1046 = vpop.f32.mrb[0].mxu0
      %1047 = vmatprep.mubr.bf16.mxu0 0
      %1048 = vmatmul.mubr.bf16.gmra.mrb[0].mxu0 %v969
      %v1049 = vpop.f32.mrb[0].mxu0
      %v1050 = vadd.f32 %v917, %v1049
      %v1051 = vpop.f32.mrb[0].mxu0
      %v1052 = vpop.f32.mrb[0].mxu0
      %v1053 = vadd.f32 %v920, %v1052
      %v1054 = vpop.f32.mrb[0].mxu0
      %1055 = vmatprep.mubr.bf16.mxu0 0
      %1056 = vmatmul.mubr.bf16.gmra.mrb[0].mxu0 %v972
      %v1057 = vpop.f32.mrb[0].mxu0
      %v1058 = vadd.f32 %v925, %v1057
      %v1059 = vpop.f32.mrb[0].mxu0
      %v1060 = vpop.f32.mrb[0].mxu0
      %v1061 = vadd.f32 %v928, %v1060
      %v1062 = vpop.f32.mrb[0].mxu0
      %1063 = vmatprep.mubr.bf16.mxu0 0
      %1064 = vmatmul.mubr.bf16.gmra.mrb[0].mxu0 %v975
      %v1065 = vpop.f32.mrb[0].mxu0
      %v1066 = vadd.f32 %v933, %v1065
      %v1067 = vpop.f32.mrb[0].mxu0
      %v1068 = vpop.f32.mrb[0].mxu0
      %v1069 = vadd.f32 %v936, %v1068
      %v1070 = vpop.f32.mrb[0].mxu0
      %1071 = vmatprep.mubr.bf16.mxu0 0
      %1072 = vmatmul.mubr.bf16.gmra.mrb[0].mxu0 %v978
      %v1073 = vpop.f32.mrb[0].mxu0
      %v1074 = vadd.f32 %v941, %v1073
      %v1075 = vpop.f32.mrb[0].mxu0
      %v1076 = vpop.f32.mrb[0].mxu0
      %v1077 = vadd.f32 %v944, %v1076
      %v1078 = vpop.f32.mrb[0].mxu0
      %1079 = vdwg.mxu0
      %s1080 = scalar_lea.vmem [#allocation2], 16
      %v1081 = vld [vmem:[%s1080] sm:$0xff]
      %v1082 = vld [vmem:[%s1080 + $0x8] sm:$0xff]
      %v1083 = vld [vmem:[%s1080 + $0x10] sm:$0xff]
      %v1084 = vld [vmem:[%s1080 + $0x18] sm:$0xff]
      %v1085 = vld [vmem:[%s1080 + $0x20] sm:$0xff]
      %v1086 = vld [vmem:[%s1080 + $0x28] sm:$0xff]
      %v1087 = vld [vmem:[%s1080 + $0x30] sm:$0xff]
      %v1088 = vld [vmem:[%s1080 + $0x38] sm:$0xff]
      %s1089 = scalar_lea.vmem %s1, 24
      %v1090 = vld [vmem:[%s1089] sm:$0xf]
      %v1091 = vld [vmem:[%s1089 + $0x4] sm:$0xf]
      %v1092 = vld [vmem:[%s1089 + $0x8] sm:$0xf]
      %v1096 = vunpack.c.l.b16 %v1090
      %v1097 = vunpack.c.l.b16 %v1091
      %v1098 = vunpack.c.l.b16 %v1092
      %v1099 = vpack.c.b16 %v1097, %v1096
      %v1100 = vpack.c.b16 %v1098, %v1098
      %v1103 = vsel %vm821, %v1081, 0
      %v1106 = vsel %vm821, %v1082, 0
      %v1109 = vsel %vm821, %v1083, 0
      %v1112 = vsel %vm821, %v1084, 0
      %v1115 = vsel %vm821, %v1085, 0
      %v1118 = vsel %vm821, %v1086, 0
      %v1121 = vsel %vm821, %v1087, 0
      %v1124 = vsel %vm821, %v1088, 0
      %v1127 = vsel %vm846, %v1100, 0
      %1129 = vmatprep.subr.bf16.mxu0 0
      %1130 = vmatpush1.bf16.msra.mxu0 %v1099
      %1131 = vmatprep.subr.bf16.mxu0 0
      %1132 = vmatpush1.bf16.msra.mxu0 %v1127
      %1133 = vmatprep.subr.bf16.mxu0 0
      %1134 = vmatpush1.bf16.msra.mxu0 0
      %1135 = vmatprep.subr.bf16.mxu0 0
      %1136 = vmatpush1.bf16.msra.mxu0 0
      %1137 = vmatprep.subr.bf16.mxu0 0
      %1138 = vmatpush1.bf16.msra.mxu0 0
      %1139 = vmatprep.subr.bf16.mxu0 0
      %1140 = vmatpush1.bf16.msra.mxu0 0
      %1141 = vmatprep.subr.bf16.mxu0 0
      %1142 = vmatpush1.bf16.msra.mxu0 0
      %1143 = vmatprep.subr.bf16.mxu0 0
      %1144 = vmatpush1.bf16.msra.mxu0 0
      %1145 = vmatprep.subr.bf16.mxu0 0
      %1146 = vmatpush1.bf16.msra.mxu0 0
      %1147 = vmatprep.subr.bf16.mxu0 0
      %1148 = vmatpush1.bf16.msra.mxu0 0
      %1149 = vmatprep.subr.bf16.mxu0 0
      %1150 = vmatpush1.bf16.msra.mxu0 0
      %1151 = vmatprep.subr.bf16.mxu0 0
      %1152 = vmatpush1.bf16.msra.mxu0 0
      %1153 = vmatprep.subr.bf16.mxu0 0
      %1154 = vmatpush1.bf16.msra.mxu0 0
      %1155 = vmatprep.subr.bf16.mxu0 0
      %1156 = vmatpush1.bf16.msra.mxu0 0
      %1157 = vmatprep.subr.bf16.mxu0 0
      %1158 = vmatpush1.bf16.msra.mxu0 0
      %1159 = vmatprep.subr.bf16.mxu0 0
      %1160 = vmatpush1.bf16.msra.mxu0 0
      %1161 = vmatprep.mubr.bf16.mxu0 0
      %1162 = vmatmul.mubr.bf16.gmra.mrb[0].mxu0 %v1103
      %v1163 = vpop.f32.mrb[0].mxu0
      %v1164 = vadd.f32 0.0, %v1163
      %v1165 = vpop.f32.mrb[0].mxu0
      %v1166 = vpop.f32.mrb[0].mxu0
      %v1167 = vadd.f32 0.0, %v1166
      %v1168 = vpop.f32.mrb[0].mxu0
      %1169 = vmatprep.mubr.bf16.mxu0 0
      %1170 = vmatmul.mubr.bf16.gmra.mrb[0].mxu0 %v1106
      %v1171 = vpop.f32.mrb[0].mxu0
      %v1172 = vadd.f32 0.0, %v1171
      %v1173 = vpop.f32.mrb[0].mxu0
      %v1174 = vpop.f32.mrb[0].mxu0
      %v1175 = vadd.f32 0.0, %v1174
      %v1176 = vpop.f32.mrb[0].mxu0
      %1177 = vmatprep.mubr.bf16.mxu0 0
      %1178 = vmatmul.mubr.bf16.gmra.mrb[0].mxu0 %v1109
      %v1179 = vpop.f32.mrb[0].mxu0
      %v1180 = vadd.f32 0.0, %v1179
      %v1181 = vpop.f32.mrb[0].mxu0
      %v1182 = vpop.f32.mrb[0].mxu0
      %v1183 = vadd.f32 0.0, %v1182
      %v1184 = vpop.f32.mrb[0].mxu0
      %1185 = vmatprep.mubr.bf16.mxu0 0
      %1186 = vmatmul.mubr.bf16.gmra.mrb[0].mxu0 %v1112
      %v1187 = vpop.f32.mrb[0].mxu0
      %v1188 = vadd.f32 0.0, %v1187
      %v1189 = vpop.f32.mrb[0].mxu0
      %v1190 = vpop.f32.mrb[0].mxu0
      %v1191 = vadd.f32 0.0, %v1190
      %v1192 = vpop.f32.mrb[0].mxu0
      %1193 = vmatprep.mubr.bf16.mxu0 0
      %1194 = vmatmul.mubr.bf16.gmra.mrb[0].mxu0 %v1115
      %v1195 = vpop.f32.mrb[0].mxu0
      %v1196 = vadd.f32 0.0, %v1195
      %v1197 = vpop.f32.mrb[0].mxu0
      %v1198 = vpop.f32.mrb[0].mxu0
      %v1199 = vadd.f32 0.0, %v1198
      %v1200 = vpop.f32.mrb[0].mxu0
      %1201 = vmatprep.mubr.bf16.mxu0 0
      %1202 = vmatmul.mubr.bf16.gmra.mrb[0].mxu0 %v1118
      %v1203 = vpop.f32.mrb[0].mxu0
      %v1204 = vadd.f32 0.0, %v1203
      %v1205 = vpop.f32.mrb[0].mxu0
      %v1206 = vpop.f32.mrb[0].mxu0
      %v1207 = vadd.f32 0.0, %v1206
      %v1208 = vpop.f32.mrb[0].mxu0
      %1209 = vmatprep.mubr.bf16.mxu0 0
      %1210 = vmatmul.mubr.bf16.gmra.mrb[0].mxu0 %v1121
      %v1211 = vpop.f32.mrb[0].mxu0
      %v1212 = vadd.f32 0.0, %v1211
      %v1213 = vpop.f32.mrb[0].mxu0
      %v1214 = vpop.f32.mrb[0].mxu0
      %v1215 = vadd.f32 0.0, %v1214
      %v1216 = vpop.f32.mrb[0].mxu0
      %1217 = vmatprep.mubr.bf16.mxu0 0
      %1218 = vmatmul.mubr.bf16.gmra.mrb[0].mxu0 %v1124
      %v1219 = vpop.f32.mrb[0].mxu0
      %v1220 = vadd.f32 0.0, %v1219
      %v1221 = vpop.f32.mrb[0].mxu0
      %v1222 = vpop.f32.mrb[0].mxu0
      %v1223 = vadd.f32 0.0, %v1222
      %v1224 = vpop.f32.mrb[0].mxu0
      %1225 = vdwg.mxu0
      %v1226 = vadd.f32 %v1018, %v1164
      %v1227 = vadd.f32 %v1021, %v1167
      %v1228 = vadd.f32 %v1026, %v1172
      %v1229 = vadd.f32 %v1029, %v1175
      %v1230 = vadd.f32 %v1034, %v1180
      %v1231 = vadd.f32 %v1037, %v1183
      %v1232 = vadd.f32 %v1042, %v1188
      %v1233 = vadd.f32 %v1045, %v1191
      %v1234 = vadd.f32 %v1050, %v1196
      %v1235 = vadd.f32 %v1053, %v1199
      %v1236 = vadd.f32 %v1058, %v1204
      %v1237 = vadd.f32 %v1061, %v1207
      %v1238 = vadd.f32 %v1066, %v1212
      %v1239 = vadd.f32 %v1069, %v1215
      %v1240 = vadd.f32 %v1074, %v1220
      %v1241 = vadd.f32 %v1077, %v1223
      %v1242 = vld [vmem:[%s2] sm:$0x1]
      %v1244 = vlaneseq
      %v1245 = vshrl.u32 %v1244, 7
      %v1246 = vsub.s32 0, %v1245
      %v1247 = vrot.slane %v1242, %v1246
      %v1249 = vadd.f32 %v1226, %v1247
      %v1250 = vadd.f32 %v1227, %v1247
      %v1251 = vadd.f32 %v1228, %v1247
      %v1252 = vadd.f32 %v1229, %v1247
      %v1253 = vadd.f32 %v1230, %v1247
      %v1254 = vadd.f32 %v1231, %v1247
      %v1255 = vadd.f32 %v1232, %v1247
      %v1256 = vadd.f32 %v1233, %v1247
      %v1257 = vadd.f32 %v1234, %v1247
      %v1258 = vadd.f32 %v1235, %v1247
      %v1259 = vadd.f32 %v1236, %v1247
      %v1260 = vadd.f32 %v1237, %v1247
      %v1261 = vadd.f32 %v1238, %v1247
      %v1262 = vadd.f32 %v1239, %v1247
      %v1263 = vadd.f32 %v1240, %v1247
      %v1264 = vadd.f32 %v1241, %v1247
      %vm1265 = vcmp.gt.f32.partialorder %v1249, 0.0
      %vm1266 = vcmp.gt.f32.partialorder %v1250, 0.0
      %vm1267 = vcmp.gt.f32.partialorder %v1251, 0.0
      %vm1268 = vcmp.gt.f32.partialorder %v1252, 0.0
      %vm1269 = vcmp.gt.f32.partialorder %v1253, 0.0
      %vm1270 = vcmp.gt.f32.partialorder %v1254, 0.0
      %vm1271 = vcmp.gt.f32.partialorder %v1255, 0.0
      %vm1272 = vcmp.gt.f32.partialorder %v1256, 0.0
      %vm1273 = vcmp.gt.f32.partialorder %v1257, 0.0
      %vm1274 = vcmp.gt.f32.partialorder %v1258, 0.0
      %vm1275 = vcmp.gt.f32.partialorder %v1259, 0.0
      %vm1276 = vcmp.gt.f32.partialorder %v1260, 0.0
      %vm1277 = vcmp.gt.f32.partialorder %v1261, 0.0
      %vm1278 = vcmp.gt.f32.partialorder %v1262, 0.0
      %vm1279 = vcmp.gt.f32.partialorder %v1263, 0.0
      %vm1280 = vcmp.gt.f32.partialorder %v1264, 0.0
      %v1281 = vmul.f32 %v1249, 0.01
      %v1282 = vmul.f32 %v1250, 0.01
      %v1283 = vmul.f32 %v1251, 0.01
      %v1284 = vmul.f32 %v1252, 0.01
      %v1285 = vmul.f32 %v1253, 0.01
      %v1286 = vmul.f32 %v1254, 0.01
      %v1287 = vmul.f32 %v1255, 0.01
      %v1288 = vmul.f32 %v1256, 0.01
      %v1289 = vmul.f32 %v1257, 0.01
      %v1290 = vmul.f32 %v1258, 0.01
      %v1291 = vmul.f32 %v1259, 0.01
      %v1292 = vmul.f32 %v1260, 0.01
      %v1293 = vmul.f32 %v1261, 0.01
      %v1294 = vmul.f32 %v1262, 0.01
      %v1295 = vmul.f32 %v1263, 0.01
      %v1296 = vmul.f32 %v1264, 0.01
      %v1297 = vsel %vm1265, %v1249, %v1281
      %v1298 = vsel %vm1266, %v1250, %v1282
      %v1299 = vsel %vm1267, %v1251, %v1283
      %v1300 = vsel %vm1268, %v1252, %v1284
      %v1301 = vsel %vm1269, %v1253, %v1285
      %v1302 = vsel %vm1270, %v1254, %v1286
      %v1303 = vsel %vm1271, %v1255, %v1287
      %v1304 = vsel %vm1272, %v1256, %v1288
      %v1305 = vsel %vm1273, %v1257, %v1289
      %v1306 = vsel %vm1274, %v1258, %v1290
      %v1307 = vsel %vm1275, %v1259, %v1291
      %v1308 = vsel %vm1276, %v1260, %v1292
      %v1309 = vsel %vm1277, %v1261, %v1293
      %v1310 = vsel %vm1278, %v1262, %v1294
      %v1311 = vsel %vm1279, %v1263, %v1295
      %v1312 = vsel %vm1280, %v1264, %v1296
      %v1313 = vpack.c.bf16 %v1298, %v1297
      %v1314 = vpack.c.bf16 %v1300, %v1299
      %v1315 = vpack.c.bf16 %v1302, %v1301
      %v1316 = vpack.c.bf16 %v1304, %v1303
      %v1317 = vpack.c.bf16 %v1306, %v1305
      %v1318 = vpack.c.bf16 %v1308, %v1307
      %v1319 = vpack.c.bf16 %v1310, %v1309
      %v1320 = vpack.c.bf16 %v1312, %v1311
      %v1329 = vunpack.c.l.b16 %v1313
      %v1330 = vunpack.c.h.b16 %v1313
      %v1331 = vunpack.c.l.b16 %v1314
      %v1332 = vunpack.c.h.b16 %v1314
      %v1333 = vunpack.c.l.b16 %v1315
      %v1334 = vunpack.c.h.b16 %v1315
      %v1335 = vunpack.c.l.b16 %v1316
      %v1336 = vunpack.c.h.b16 %v1316
      %v1337 = vunpack.c.l.b16 %v1317
      %v1338 = vunpack.c.h.b16 %v1317
      %v1339 = vunpack.c.l.b16 %v1318
      %v1340 = vunpack.c.h.b16 %v1318
      %v1341 = vunpack.c.l.b16 %v1319
      %v1342 = vunpack.c.h.b16 %v1319
      %v1343 = vunpack.c.l.b16 %v1320
      %v1344 = vunpack.c.h.b16 %v1320
      %v1345 = vpack.c.b16 %v1329, %v1329
      %v1346 = vpack.c.b16 %v1330, %v1330
      %v1347 = vpack.c.b16 %v1331, %v1331
      %v1348 = vpack.c.b16 %v1332, %v1332
      %v1349 = vpack.c.b16 %v1333, %v1333
      %v1350 = vpack.c.b16 %v1334, %v1334
      %v1351 = vpack.c.b16 %v1335, %v1335
      %v1352 = vpack.c.b16 %v1336, %v1336
      %v1353 = vpack.c.b16 %v1337, %v1337
      %v1354 = vpack.c.b16 %v1338, %v1338
      %v1355 = vpack.c.b16 %v1339, %v1339
      %v1356 = vpack.c.b16 %v1340, %v1340
      %v1357 = vpack.c.b16 %v1341, %v1341
      %v1358 = vpack.c.b16 %v1342, %v1342
      %v1359 = vpack.c.b16 %v1343, %v1343
      %v1360 = vpack.c.b16 %v1344, %v1344
      %vm1377 = vcmask 27648
      %1378 = vst.msk [vmem:[%s235] sm:$0xf] %vm1377, %v1345
      %1379 = vst.msk [vmem:[%s235 + $0x4] sm:$0xf] %vm1377, %v1346
      %1380 = vst.msk [vmem:[%s235 + $0x8] sm:$0xf] %vm1377, %v1347
      %1381 = vst.msk [vmem:[%s235 + $0xc] sm:$0xf] %vm1377, %v1348
      %1382 = vst.msk [vmem:[%s235 + $0x10] sm:$0xf] %vm1377, %v1349
      %1383 = vst.msk [vmem:[%s235 + $0x14] sm:$0xf] %vm1377, %v1350
      %1384 = vst.msk [vmem:[%s235 + $0x18] sm:$0xf] %vm1377, %v1351
      %1385 = vst.msk [vmem:[%s235 + $0x1c] sm:$0xf] %vm1377, %v1352
      %1386 = vst.msk [vmem:[%s235 + $0x20] sm:$0xf] %vm1377, %v1353
      %1387 = vst.msk [vmem:[%s235 + $0x24] sm:$0xf] %vm1377, %v1354
      %1388 = vst.msk [vmem:[%s235 + $0x28] sm:$0xf] %vm1377, %v1355
      %1389 = vst.msk [vmem:[%s235 + $0x2c] sm:$0xf] %vm1377, %v1356
      %1390 = vst.msk [vmem:[%s235 + $0x30] sm:$0xf] %vm1377, %v1357
      %1391 = vst.msk [vmem:[%s235 + $0x34] sm:$0xf] %vm1377, %v1358
      %1392 = vst.msk [vmem:[%s235 + $0x38] sm:$0xf] %vm1377, %v1359
      %1393 = vst.msk [vmem:[%s235 + $0x3c] sm:$0xf] %vm1377, %v1360
      %vm1394 = vcmask 31744
      %v1395 = vsel %vm1394, %v1297, 0.0
      %v1396 = vsel %vm1394, %v1298, 0.0
      %v1397 = vadd.f32 %v1395, %v1396
      %v1398 = vsel %vm1394, %v1299, 0.0
      %v1399 = vadd.f32 %v1397, %v1398
      %v1400 = vsel %vm1394, %v1300, 0.0
      %v1401 = vadd.f32 %v1399, %v1400
      %v1402 = vsel %vm1394, %v1301, 0.0
      %v1403 = vadd.f32 %v1401, %v1402
      %v1404 = vsel %vm1394, %v1302, 0.0
      %v1405 = vadd.f32 %v1403, %v1404
      %v1406 = vsel %vm1394, %v1303, 0.0
      %v1407 = vadd.f32 %v1405, %v1406
      %v1408 = vsel %vm1394, %v1304, 0.0
      %v1409 = vadd.f32 %v1407, %v1408
      %v1410 = vsel %vm1394, %v1305, 0.0
      %v1411 = vadd.f32 %v1409, %v1410
      %v1412 = vsel %vm1394, %v1306, 0.0
      %v1413 = vadd.f32 %v1411, %v1412
      %v1414 = vsel %vm1394, %v1307, 0.0
      %v1415 = vadd.f32 %v1413, %v1414
      %v1416 = vsel %vm1394, %v1308, 0.0
      %v1417 = vadd.f32 %v1415, %v1416
      %v1418 = vsel %vm1394, %v1309, 0.0
      %v1419 = vadd.f32 %v1417, %v1418
      %v1420 = vsel %vm1394, %v1310, 0.0
      %v1421 = vadd.f32 %v1419, %v1420
      %v1422 = vsel %vm1394, %v1311, 0.0
      %v1423 = vadd.f32 %v1421, %v1422
      %v1424 = vsel %vm1394, %v1312, 0.0
      %v1425 = vadd.f32 %v1423, %v1424
      %v1426 = vrot.slane %v1425, 4
      %v1427 = vadd.f32 %v1425, %v1426
      %v1428 = vrot.slane %v1427, 2
      %v1429 = vadd.f32 %v1427, %v1428
      %v1430 = vrot.slane %v1429, 1
      %v1431 = vadd.f32 %v1429, %v1430
      %v1432 = vmul.f32 %v1431, 0.0078125
      %v1433 = vsub.f32 %v1297, %v1432
      %v1434 = vsub.f32 %v1298, %v1432
      %v1435 = vsub.f32 %v1299, %v1432
      %v1436 = vsub.f32 %v1300, %v1432
      %v1437 = vsub.f32 %v1301, %v1432
      %v1438 = vsub.f32 %v1302, %v1432
      %v1439 = vsub.f32 %v1303, %v1432
      %v1440 = vsub.f32 %v1304, %v1432
      %v1441 = vsub.f32 %v1305, %v1432
      %v1442 = vsub.f32 %v1306, %v1432
      %v1443 = vsub.f32 %v1307, %v1432
      %v1444 = vsub.f32 %v1308, %v1432
      %v1445 = vsub.f32 %v1309, %v1432
      %v1446 = vsub.f32 %v1310, %v1432
      %v1447 = vsub.f32 %v1311, %v1432
      %v1448 = vsub.f32 %v1312, %v1432
      %vm1449 = vcmask 24576
      %1450 = vst.msk [vmem:[%s238] sm:$0x1] %vm1449, %v1431
      %v1451 = vmul.f32 %v1433, %v1433
      %v1452 = vmul.f32 %v1434, %v1434
      %v1453 = vmul.f32 %v1435, %v1435
      %v1454 = vmul.f32 %v1436, %v1436
      %v1455 = vmul.f32 %v1437, %v1437
      %v1456 = vmul.f32 %v1438, %v1438
      %v1457 = vmul.f32 %v1439, %v1439
      %v1458 = vmul.f32 %v1440, %v1440
      %v1459 = vmul.f32 %v1441, %v1441
      %v1460 = vmul.f32 %v1442, %v1442
      %v1461 = vmul.f32 %v1443, %v1443
      %v1462 = vmul.f32 %v1444, %v1444
      %v1463 = vmul.f32 %v1445, %v1445
      %v1464 = vmul.f32 %v1446, %v1446
      %v1465 = vmul.f32 %v1447, %v1447
      %v1466 = vmul.f32 %v1448, %v1448
      %v1467 = vsel %vm1394, %v1451, 0.0
      %v1468 = vsel %vm1394, %v1452, 0.0
      %v1469 = vadd.f32 %v1467, %v1468
      %v1470 = vsel %vm1394, %v1453, 0.0
      %v1471 = vadd.f32 %v1469, %v1470
      %v1472 = vsel %vm1394, %v1454, 0.0
      %v1473 = vadd.f32 %v1471, %v1472
      %v1474 = vsel %vm1394, %v1455, 0.0
      %v1475 = vadd.f32 %v1473, %v1474
      %v1476 = vsel %vm1394, %v1456, 0.0
      %v1477 = vadd.f32 %v1475, %v1476
      %v1478 = vsel %vm1394, %v1457, 0.0
      %v1479 = vadd.f32 %v1477, %v1478
      %v1480 = vsel %vm1394, %v1458, 0.0
      %v1481 = vadd.f32 %v1479, %v1480
      %v1482 = vsel %vm1394, %v1459, 0.0
      %v1483 = vadd.f32 %v1481, %v1482
      %v1484 = vsel %vm1394, %v1460, 0.0
      %v1485 = vadd.f32 %v1483, %v1484
      %v1486 = vsel %vm1394, %v1461, 0.0
      %v1487 = vadd.f32 %v1485, %v1486
      %v1488 = vsel %vm1394, %v1462, 0.0
      %v1489 = vadd.f32 %v1487, %v1488
      %v1490 = vsel %vm1394, %v1463, 0.0
      %v1491 = vadd.f32 %v1489, %v1490
      %v1492 = vsel %vm1394, %v1464, 0.0
      %v1493 = vadd.f32 %v1491, %v1492
      %v1494 = vsel %vm1394, %v1465, 0.0
      %v1495 = vadd.f32 %v1493, %v1494
      %v1496 = vsel %vm1394, %v1466, 0.0
      %v1497 = vadd.f32 %v1495, %v1496
      %v1498 = vrot.slane %v1497, 4
      %v1499 = vadd.f32 %v1497, %v1498
      %v1500 = vrot.slane %v1499, 2
      %v1501 = vadd.f32 %v1499, %v1500
      %v1502 = vrot.slane %v1501, 1
      %v1503 = vadd.f32 %v1501, %v1502
      %1504 = vst.msk [vmem:[%s241] sm:$0x1] %vm1449, %v1503
      %p1505 = scmp.lt.s32.totalorder %s17, 3
      %s1506 = scalar_select %p1505, %s17, 3
      %s1507 = smul.addr %s1506, 16
      %s1508 = smul.addr %s1507, 4
      %s1509 = scalar_lea.vmem %s3, %s1508
      %p1510 = scmp.lt.s32.totalorder %s17, 3
      %s1511 = scalar_select %p1510, %s17, 3
      %s1512 = scalar_lea.vmem %s4, %s1511
      %p1513 = scmp.lt.s32.totalorder %s17, 3
      %s1514 = scalar_select %p1513, %s17, 3
      %s1515 = scalar_lea.vmem %s5, %s1514
      // Predicated region
      $region33: #{_forward.4} parent=31 // pred_check
        %p1516 = pneg %p103
      $region34: #{_forward.4} parent=31 // pred_check_branch
        %1518 = sbr.rel (%p1516) target = $region36
      $region35: #{_forward.4} parent=31 // pred_region
        _
      $region36: #{_forward.4} parent=31 // pred_fallthru
        _
      // Predicated region
      $region37: #{_forward.4} parent=31 // pred_check
        %p1519 = pneg %p129
      $region38: #{_forward.4} parent=31 // pred_check_branch
        %1521 = sbr.rel (%p1519) target = $region40
      $region39: #{_forward.4} parent=31 // pred_region
        _
      $region40: #{_forward.4} parent=31 // pred_fallthru
        _
      // Predicated region
      $region41: #{_forward.4} parent=31 // pred_check
        %p1522 = pneg %p155
      $region42: #{_forward.4} parent=31 // pred_check_branch
        %1524 = sbr.rel (%p1522) target = $region44
      $region43: #{_forward.4} parent=31 // pred_region
        _
      $region44: #{_forward.4} parent=31 // pred_fallthru
        _
    $region32: #{_forward.4} parent=5 // pred_fallthru
      _
    %p1525 = scmp.le.s32.totalorder 2, %s12
    // Predicated region
    $region45: #{_forward.4} parent=5 // pred_check
      %p1526 = pneg %p1525
    $region46: #{_forward.4} parent=5 // pred_check_branch
      %1528 = sbr.rel (%p1526) target = $region48
    $region47: #{_forward.4} parent=5 // pred_region
      %s1529 = ssub.s32 %s12, 2
      // Predicated region
      $region49: #{_forward.4} parent=47 // pred_check
        %p1530 = pneg %p109
      $region50: #{_forward.4} parent=47 // pred_check_branch
        %1532 = sbr.rel (%p1530) target = $region52
      $region51: #{_forward.4} parent=47 // pred_region
        %p1533 = scmp.lt.s32.totalorder %s18, 3
        %s1534 = scalar_select %p1533, %s18, 3
        %s1535 = smul.addr %s1534, 16
        %s1536 = smul.addr %s1535, 4
        %s1537 = scalar_lea.vmem %s3, %s1536
      $region52: #{_forward.4} parent=47 // pred_fallthru
        _
      // Predicated region
      $region53: #{_forward.4} parent=47 // pred_check
        %p1538 = pneg %p135
      $region54: #{_forward.4} parent=47 // pred_check_branch
        %1540 = sbr.rel (%p1538) target = $region56
      $region55: #{_forward.4} parent=47 // pred_region
        %p1541 = scmp.lt.s32.totalorder %s18, 3
        %s1542 = scalar_select %p1541, %s18, 3
        %s1543 = scalar_lea.vmem %s4, %s1542
      $region56: #{_forward.4} parent=47 // pred_fallthru
        _
      // Predicated region
      $region57: #{_forward.4} parent=47 // pred_check
        %p1544 = pneg %p161
      $region58: #{_forward.4} parent=47 // pred_check_branch
        %1546 = sbr.rel (%p1544) target = $region60
      $region59: #{_forward.4} parent=47 // pred_region
        %p1547 = scmp.lt.s32.totalorder %s18, 3
        %s1548 = scalar_select %p1547, %s18, 3
        %s1549 = scalar_lea.vmem %s5, %s1548
      $region60: #{_forward.4} parent=47 // pred_fallthru
        _
    $region48: #{_forward.4} parent=5 // pred_fallthru
      _
  $region6: #{_forward.4} parent=0 // loop_footer
    %s16 = sadd.s32 1, %s12
  $region7: #{_forward.4} parent=0 // loop_footer_branch
    %11 = sbr.rel target = $region3
  $region8: #{_forward.4} parent=0 // loop_exit
    _

// kernel: _forward.5
$region0: #{_forward.5}
  #allocation0 [shape = 'u32[]', space=smem, size = 0x4, offset = 0x4, fixed_abs, tag = 'smem constant byte address 0x4 - core index']
  #allocation1 [shape = 'u32[144,128]{1,0:T(1,128)}', space=vmem, size = 0x12000, scoped, tag = 'internal scratch']
  #allocation2 [shape = 'bf16[10,16,12]{2,1,0:T(16,128)(2,1)}', space=vmem, size = 0xa000, scoped, tag = 'scratch operand']
  %s0 = inlined_call_operand.vmem [shape: bf16[4,10,18,4], index: 0, kind: input, shape index: {}]
  %s1 = inlined_call_operand.vmem [shape: bf16[3,12,4], index: 1, kind: input, shape index: {}]
  %s2 = inlined_call_operand.vmem [shape: f32[1,4], index: 2, kind: input, shape index: {}]
  %s3 = inlined_call_operand.vmem [shape: bf16[4,128,4], index: 3, kind: output, shape index: {0}]
  %s4 = inlined_call_operand.vmem [shape: f32[4,1,4], index: 4, kind: output, shape index: {1}]
  %s5 = inlined_call_operand.vmem [shape: f32[4,1,4], index: 5, kind: output, shape index: {2}]
  %6 = xla_tuple %s3, %s4, %s5
  %s7 = sld [smem:[#allocation0]]
  $region61: #{_forward.5} parent=0
    _
  %s9 = ssub.s32 1, %s7
  %s10 = scalar_select 0, %s9, %s7
  loop: start=0, step=1, limit=6
  $region2: #{_forward.5} parent=0 // loop_pre_header
    _
  $region3: #{_forward.5} parent=0 // loop_header
    %s12 = sphi 0, %s16
    %p13 = scmp.ge.s32.totalorder %s12, 6
    %s22 = sphi 0, %s24
    %s25 = sphi 0, %s22
    %s26 = sphi 0, %s25
    %s42 = sphi 0, %s26
    %s46 = sphi 0, %s46
    %s48 = sphi 0, %s46
    %s49 = sphi 0, %s48
    %s63 = sphi 0, %s49
    %s67 = sphi 0, %s67
    %s69 = sphi 0, %s67
    %s70 = sphi 0, %s69
    %s84 = sphi 0, %s70
    %s90 = sphi 0, %s92
    %s93 = sphi 0, %s90
    %s94 = sphi 0, %s93
    %s110 = sphi 0, %s94
    %s116 = sphi 0, %s118
    %s119 = sphi 0, %s116
    %s120 = sphi 0, %s119
    %s136 = sphi 0, %s120
    %s142 = sphi 0, %s144
    %s145 = sphi 0, %s142
    %s146 = sphi 0, %s145
    %s162 = sphi 0, %s146
  $region4: #{_forward.5} parent=0 // loop_header_branch
    %15 = sbr.rel (%p13) target = $region8
  $region5: #{_forward.5} parent=0 // loop_body
    %s17 = ssub.s32 %s12, 1
    %s18 = ssub.s32 %s12, 2
    %s19 = sadd.s32 %s12, 1
    %s20 = ssub.s32 %s12, %s19
    %p21 = scmp.eq.s32.totalorder %s20, 0
    %s23 = sadd.s32 %s22, 1
    %s24 = scalar_select %p21, %s22, %s23
    %p27 = pneg %p21
    %p28 = scmp.eq.s32.totalorder %s12, 3
    %p29 = por %p27, %p28
    %p30 = scmp.ne.s32.totalorder %s22, %s25
    %p31 = scmp.eq.s32.totalorder %s12, 0
    %p32 = por %p30, %p31
    %p33 = scmp.ne.s32.totalorder %s22, %s25
    %p34 = scmp.eq.s32.totalorder %s17, 3
    %p35 = por %p33, %p34
    %p36 = scmp.ne.s32.totalorder %s25, %s26
    %p37 = scmp.eq.s32.totalorder %s17, 0
    %p38 = por %p36, %p37
    %p39 = scmp.ne.s32.totalorder %s25, %s26
    %p40 = scmp.eq.s32.totalorder %s18, 3
    %p41 = por %p39, %p40
    %p43 = scmp.ne.s32.totalorder %s26, %s42
    %p44 = scmp.eq.s32.totalorder %s18, 0
    %p45 = por %p43, %p44
    %s47 = sadd.s32 %s46, 1
    %p50 = scmp.eq.s32.totalorder %s12, 3
    %p51 = scmp.ne.s32.totalorder %s46, %s48
    %p52 = scmp.eq.s32.totalorder %s12, 0
    %p53 = por %p51, %p52
    %p54 = scmp.ne.s32.totalorder %s46, %s48
    %p55 = scmp.eq.s32.totalorder %s17, 3
    %p56 = por %p54, %p55
    %p57 = scmp.ne.s32.totalorder %s48, %s49
    %p58 = scmp.eq.s32.totalorder %s17, 0
    %p59 = por %p57, %p58
    %p60 = scmp.ne.s32.totalorder %s48, %s49
    %p61 = scmp.eq.s32.totalorder %s18, 3
    %p62 = por %p60, %p61
    %p64 = scmp.ne.s32.totalorder %s49, %s63
    %p65 = scmp.eq.s32.totalorder %s18, 0
    %p66 = por %p64, %p65
    %s68 = sadd.s32 %s67, 1
    %p71 = scmp.eq.s32.totalorder %s12, 3
    %p72 = scmp.ne.s32.totalorder %s67, %s69
    %p73 = scmp.eq.s32.totalorder %s12, 0
    %p74 = por %p72, %p73
    %p75 = scmp.ne.s32.totalorder %s67, %s69
    %p76 = scmp.eq.s32.totalorder %s17, 3
    %p77 = por %p75, %p76
    %p78 = scmp.ne.s32.totalorder %s69, %s70
    %p79 = scmp.eq.s32.totalorder %s17, 0
    %p80 = por %p78, %p79
    %p81 = scmp.ne.s32.totalorder %s69, %s70
    %p82 = scmp.eq.s32.totalorder %s18, 3
    %p83 = por %p81, %p82
    %p85 = scmp.ne.s32.totalorder %s70, %s84
    %p86 = scmp.eq.s32.totalorder %s18, 0
    %p87 = por %p85, %p86
    %s88 = ssub.s32 %s12, %s19
    %p89 = scmp.eq.s32.totalorder %s88, 0
    %s91 = sadd.s32 %s90, 1
    %s92 = scalar_select %p89, %s90, %s91
    %p95 = pneg %p89
    %p96 = scmp.eq.s32.totalorder %s12, 3
    %p97 = por %p95, %p96
    %p98 = scmp.ne.s32.totalorder %s90, %s93
    %p99 = scmp.eq.s32.totalorder %s12, 0
    %p100 = por %p98, %p99
    %p101 = scmp.ne.s32.totalorder %s90, %s93
    %p102 = scmp.eq.s32.totalorder %s17, 3
    %p103 = por %p101, %p102
    %p104 = scmp.ne.s32.totalorder %s93, %s94
    %p105 = scmp.eq.s32.totalorder %s17, 0
    %p106 = por %p104, %p105
    %p107 = scmp.ne.s32.totalorder %s93, %s94
    %p108 = scmp.eq.s32.totalorder %s18, 3
    %p109 = por %p107, %p108
    %p111 = scmp.ne.s32.totalorder %s94, %s110
    %p112 = scmp.eq.s32.totalorder %s18, 0
    %p113 = por %p111, %p112
    %s114 = ssub.s32 %s12, %s19
    %p115 = scmp.eq.s32.totalorder %s114, 0
    %s117 = sadd.s32 %s116, 1
    %s118 = scalar_select %p115, %s116, %s117
    %p121 = pneg %p115
    %p122 = scmp.eq.s32.totalorder %s12, 3
    %p123 = por %p121, %p122
    %p124 = scmp.ne.s32.totalorder %s116, %s119
    %p125 = scmp.eq.s32.totalorder %s12, 0
    %p126 = por %p124, %p125
    %p127 = scmp.ne.s32.totalorder %s116, %s119
    %p128 = scmp.eq.s32.totalorder %s17, 3
    %p129 = por %p127, %p128
    %p130 = scmp.ne.s32.totalorder %s119, %s120
    %p131 = scmp.eq.s32.totalorder %s17, 0
    %p132 = por %p130, %p131
    %p133 = scmp.ne.s32.totalorder %s119, %s120
    %p134 = scmp.eq.s32.totalorder %s18, 3
    %p135 = por %p133, %p134
    %p137 = scmp.ne.s32.totalorder %s120, %s136
    %p138 = scmp.eq.s32.totalorder %s18, 0
    %p139 = por %p137, %p138
    %s140 = ssub.s32 %s12, %s19
    %p141 = scmp.eq.s32.totalorder %s140, 0
    %s143 = sadd.s32 %s142, 1
    %s144 = scalar_select %p141, %s142, %s143
    %p147 = pneg %p141
    %p148 = scmp.eq.s32.totalorder %s12, 3
    %p149 = por %p147, %p148
    %p150 = scmp.ne.s32.totalorder %s142, %s145
    %p151 = scmp.eq.s32.totalorder %s12, 0
    %p152 = por %p150, %p151
    %p153 = scmp.ne.s32.totalorder %s142, %s145
    %p154 = scmp.eq.s32.totalorder %s17, 3
    %p155 = por %p153, %p154
    %p156 = scmp.ne.s32.totalorder %s145, %s146
    %p157 = scmp.eq.s32.totalorder %s17, 0
    %p158 = por %p156, %p157
    %p159 = scmp.ne.s32.totalorder %s145, %s146
    %p160 = scmp.eq.s32.totalorder %s18, 3
    %p161 = por %p159, %p160
    %p163 = scmp.ne.s32.totalorder %s146, %s162
    %p164 = scmp.eq.s32.totalorder %s18, 0
    %p165 = por %p163, %p164
    %p166 = scmp.le.s32.totalorder 1, %s12
    %p167 = scmp.lt.s32.totalorder %s12, 5
    %p168 = pnand %p166, %p167
    %p169 = pneg %p168
    // Predicated region
    $region9: #{_forward.5} parent=5 // pred_check
      _
    $region10: #{_forward.5} parent=5 // pred_check_branch
      %171 = sbr.rel (%p168) target = $region12
    $region11: #{_forward.5} parent=5 // pred_region
      %s172 = ssub.s32 %s12, 1
      // Predicated region
      $region13: #{_forward.5} parent=11 // pred_check
        %p173 = pneg %p59
      $region14: #{_forward.5} parent=11 // pred_check_branch
        %175 = sbr.rel (%p173) target = $region16
      $region15: #{_forward.5} parent=11 // pred_region
        _
      $region16: #{_forward.5} parent=11 // pred_fallthru
        _
      // Predicated region
      $region17: #{_forward.5} parent=11 // pred_check
        %p176 = pneg %p80
      $region18: #{_forward.5} parent=11 // pred_check_branch
        %178 = sbr.rel (%p176) target = $region20
      $region19: #{_forward.5} parent=11 // pred_region
        _
      $region20: #{_forward.5} parent=11 // pred_fallthru
        _
    $region12: #{_forward.5} parent=5 // pred_fallthru
      _
    %p179 = scmp.lt.s32.totalorder %s12, 4
    // Predicated region
    $region21: #{_forward.5} parent=5 // pred_check
      %p180 = pneg %p179
    $region22: #{_forward.5} parent=5 // pred_check_branch
      %182 = sbr.rel (%p180) target = $region24
    $region23: #{_forward.5} parent=5 // pred_region
      // Predicated region
      $region25: #{_forward.5} parent=23 // pred_check
        %p183 = pneg %p32
      $region26: #{_forward.5} parent=23 // pred_check_branch
        %185 = sbr.rel (%p183) target = $region28
      $region27: #{_forward.5} parent=23 // pred_region
        %p186 = scmp.lt.s32.totalorder %s12, 3
        %s187 = scalar_select %p186, %s12, 3
        %s188 = smul.addr %s187, 30
        %s189 = smul.addr %s188, 4
        %s190 = scalar_lea.vmem %s0, %s189
      $region28: #{_forward.5} parent=23 // pred_fallthru
        _
    $region24: #{_forward.5} parent=5 // pred_fallthru
      _
    %p191 = scmp.le.s32.totalorder 1, %s12
    %p192 = scmp.lt.s32.totalorder %s12, 5
    %p193 = pnand %p191, %p192
    %p194 = pneg %p193
    // Predicated region
    $region29: #{_forward.5} parent=5 // pred_check
      _
    $region30: #{_forward.5} parent=5 // pred_check_branch
      %196 = sbr.rel (%p193) target = $region32
    $region31: #{_forward.5} parent=5 // pred_region
      %s197 = ssub.s32 %s12, 1
      %p198 = scmp.lt.s32.totalorder %s17, 3
      %s199 = scalar_select %p198, %s17, 3
      %s200 = smul.addr %s199, 30
      %s201 = smul.addr %s200, 4
      %s202 = scalar_lea.vmem %s0, %s201
      %p203 = pneg %p38
      %p204 = pneg %p35
      %p205 = pneg %p59
      %p206 = pneg %p56
      %p207 = pneg %p80
      %p208 = pneg %p77
      %p209 = pneg %p106
      %p210 = pneg %p103
      %p211 = scmp.lt.s32.totalorder %s17, 3
      %s212 = scalar_select %p211, %s17, 3
      %s213 = smul.addr %s212, 16
      %s214 = smul.addr %s213, 4
      %s215 = scalar_lea.vmem %s3, %s214
      %p216 = pneg %p132
      %p217 = pneg %p129
      %p218 = scmp.lt.s32.totalorder %s17, 3
      %s219 = scalar_select %p218, %s17, 3
      %s220 = scalar_lea.vmem %s4, %s219
      %p221 = pneg %p158
      %p222 = pneg %p155
      %p223 = scmp.lt.s32.totalorder %s17, 3
      %s224 = scalar_select %p223, %s17, 3
      %s225 = scalar_lea.vmem %s5, %s224
      %p226 = scmp.lt.s32.totalorder %s17, 3
      %s227 = scalar_select %p226, %s17, 3
      %s228 = smul.addr %s227, 30
      %s229 = smul.addr %s228, 4
      %s230 = scalar_lea.vmem %s0, %s229
      %p231 = scmp.lt.s32.totalorder %s17, 3
      %s232 = scalar_select %p231, %s17, 3
      %s233 = smul.addr %s232, 16
      %s234 = smul.addr %s233, 4
      %s235 = scalar_lea.vmem %s3, %s234
      %p236 = scmp.lt.s32.totalorder %s17, 3
      %s237 = scalar_select %p236, %s17, 3
      %s238 = scalar_lea.vmem %s4, %s237
      %p239 = scmp.lt.s32.totalorder %s17, 3
      %s240 = scalar_select %p239, %s17, 3
      %s241 = scalar_lea.vmem %s5, %s240
      %v243 = vld [vmem:[%s230] sm:$0xf]
      %v244 = vld [vmem:[%s230 + $0x4] sm:$0xf]
      %v245 = vld [vmem:[%s230 + $0xc] sm:$0xf]
      %v246 = vld [vmem:[%s230 + $0x10] sm:$0xf]
      %v247 = vld [vmem:[%s230 + $0x18] sm:$0xf]
      %v248 = vld [vmem:[%s230 + $0x1c] sm:$0xf]
      %v249 = vld [vmem:[%s230 + $0x24] sm:$0xf]
      %v250 = vld [vmem:[%s230 + $0x28] sm:$0xf]
      %v251 = vld [vmem:[%s230 + $0x30] sm:$0xf]
      %v252 = vld [vmem:[%s230 + $0x34] sm:$0xf]
      %v253 = vld [vmem:[%s230 + $0x3c] sm:$0xf]
      %v254 = vld [vmem:[%s230 + $0x40] sm:$0xf]
      %v255 = vld [vmem:[%s230 + $0x48] sm:$0xf]
      %v256 = vld [vmem:[%s230 + $0x4c] sm:$0xf]
      %v257 = vld [vmem:[%s230 + $0x54] sm:$0xf]
      %v258 = vld [vmem:[%s230 + $0x58] sm:$0xf]
      %v259 = vld [vmem:[%s230 + $0x60] sm:$0xf]
      %v260 = vld [vmem:[%s230 + $0x64] sm:$0xf]
      %v261 = vld [vmem:[%s230 + $0x6c] sm:$0xf]
      %v262 = vld [vmem:[%s230 + $0x70] sm:$0xf]
      %v283 = vunpack.c.l.b16 %v243
      %v284 = vunpack.c.l.b16 %v244
      %v285 = vunpack.c.l.b16 %v245
      %v286 = vunpack.c.l.b16 %v246
      %v287 = vunpack.c.l.b16 %v247
      %v288 = vunpack.c.l.b16 %v248
      %v289 = vunpack.c.l.b16 %v249
      %v290 = vunpack.c.l.b16 %v250
      %v291 = vunpack.c.l.b16 %v251
      %v292 = vunpack.c.l.b16 %v252
      %v293 = vunpack.c.l.b16 %v253
      %v294 = vunpack.c.l.b16 %v254
      %v295 = vunpack.c.l.b16 %v255
      %v296 = vunpack.c.l.b16 %v256
      %v297 = vunpack.c.l.b16 %v257
      %v298 = vunpack.c.l.b16 %v258
      %v299 = vunpack.c.l.b16 %v259
      %v300 = vunpack.c.l.b16 %v260
      %v301 = vunpack.c.l.b16 %v261
      %v302 = vunpack.c.l.b16 %v262
      %v303 = vpack.c.b16 %v284, %v283
      %v304 = vpack.c.b16 %v286, %v285
      %v305 = vpack.c.b16 %v288, %v287
      %v306 = vpack.c.b16 %v290, %v289
      %v307 = vpack.c.b16 %v292, %v291
      %v308 = vpack.c.b16 %v294, %v293
      %v309 = vpack.c.b16 %v296, %v295
      %v310 = vpack.c.b16 %v298, %v297
      %v311 = vpack.c.b16 %v300, %v299
      %v312 = vpack.c.b16 %v302, %v301
      %vm323 = vcmask 31744
      %324 = vst.msk [vmem:[#allocation2] sm:$0xff] %vm323, %v303
      %325 = vst.msk [vmem:[#allocation2 + $0x8] sm:$0xff] %vm323, %v304
      %326 = vst.msk [vmem:[#allocation2 + $0x10] sm:$0xff] %vm323, %v305
      %327 = vst.msk [vmem:[#allocation2 + $0x18] sm:$0xff] %vm323, %v306
      %328 = vst.msk [vmem:[#allocation2 + $0x20] sm:$0xff] %vm323, %v307
      %329 = vst.msk [vmem:[#allocation2 + $0x28] sm:$0xff] %vm323, %v308
      %330 = vst.msk [vmem:[#allocation2 + $0x30] sm:$0xff] %vm323, %v309
      %331 = vst.msk [vmem:[#allocation2 + $0x38] sm:$0xff] %vm323, %v310
      %332 = vst.msk [vmem:[#allocation2 + $0x40] sm:$0xff] %vm323, %v311
      %333 = vst.msk [vmem:[#allocation2 + $0x48] sm:$0xff] %vm323, %v312
      %v334 = vld [vmem:[%s230] sm:$0xf]
      %v335 = vld [vmem:[%s230 + $0x4] sm:$0xf]
      %v336 = vld [vmem:[%s230 + $0x8] sm:$0x1]
      %v337 = vld [vmem:[%s230 + $0xc] sm:$0xf]
      %v338 = vld [vmem:[%s230 + $0x10] sm:$0xf]
      %v339 = vld [vmem:[%s230 + $0x14] sm:$0x1]
      %v340 = vld [vmem:[%s230 + $0x18] sm:$0xf]
      %v341 = vld [vmem:[%s230 + $0x1c] sm:$0xf]
      %v342 = vld [vmem:[%s230 + $0x20] sm:$0x1]
      %v343 = vld [vmem:[%s230 + $0x24] sm:$0xf]
      %v344 = vld [vmem:[%s230 + $0x28] sm:$0xf]
      %v345 = vld [vmem:[%s230 + $0x2c] sm:$0x1]
      %v346 = vld [vmem:[%s230 + $0x30] sm:$0xf]
      %v347 = vld [vmem:[%s230 + $0x34] sm:$0xf]
      %v348 = vld [vmem:[%s230 + $0x38] sm:$0x1]
      %v349 = vld [vmem:[%s230 + $0x3c] sm:$0xf]
      %v350 = vld [vmem:[%s230 + $0x40] sm:$0xf]
      %v351 = vld [vmem:[%s230 + $0x44] sm:$0x1]
      %v352 = vld [vmem:[%s230 + $0x48] sm:$0xf]
      %v353 = vld [vmem:[%s230 + $0x4c] sm:$0xf]
      %v354 = vld [vmem:[%s230 + $0x50] sm:$0x1]
      %v355 = vld [vmem:[%s230 + $0x54] sm:$0xf]
      %v356 = vld [vmem:[%s230 + $0x58] sm:$0xf]
      %v357 = vld [vmem:[%s230 + $0x5c] sm:$0x1]
      %v358 = vld [vmem:[%s230 + $0x60] sm:$0xf]
      %v359 = vld [vmem:[%s230 + $0x64] sm:$0xf]
      %v360 = vld [vmem:[%s230 + $0x68] sm:$0x1]
      %v361 = vld [vmem:[%s230 + $0x6c] sm:$0xf]
      %v362 = vld [vmem:[%s230 + $0x70] sm:$0xf]
      %v363 = vld [vmem:[%s230 + $0x74] sm:$0x1]
      %v394 = vunpack.c.l.b16 %v334
      %v395 = vunpack.c.l.b16 %v335
      %v396 = vunpack.c.l.b16 %v336
      %v397 = vunpack.c.l.b16 %v337
      %v398 = vunpack.c.l.b16 %v338
      %v399 = vunpack.c.l.b16 %v339
      %v400 = vunpack.c.l.b16 %v340
      %v401 = vunpack.c.l.b16 %v341
      %v402 = vunpack.c.l.b16 %v342
      %v403 = vunpack.c.l.b16 %v343
      %v404 = vunpack.c.l.b16 %v344
      %v405 = vunpack.c.l.b16 %v345
      %v406 = vunpack.c.l.b16 %v346
      %v407 = vunpack.c.l.b16 %v347
      %v408 = vunpack.c.l.b16 %v348
      %v409 = vunpack.c.l.b16 %v349
      %v410 = vunpack.c.l.b16 %v350
      %v411 = vunpack.c.l.b16 %v351
      %v412 = vunpack.c.l.b16 %v352
      %v413 = vunpack.c.l.b16 %v353
      %v414 = vunpack.c.l.b16 %v354
      %v415 = vunpack.c.l.b16 %v355
      %v416 = vunpack.c.l.b16 %v356
      %v417 = vunpack.c.l.b16 %v357
      %v418 = vunpack.c.l.b16 %v358
      %v419 = vunpack.c.l.b16 %v359
      %v420 = vunpack.c.l.b16 %v360
      %v421 = vunpack.c.l.b16 %v361
      %v422 = vunpack.c.l.b16 %v362
      %v423 = vunpack.c.l.b16 %v363
      %v424 = vpack.c.b16 %v395, %v394
      %v425 = vpack.c.b16 %v396, %v396
      %v426 = vpack.c.b16 %v398, %v397
      %v427 = vpack.c.b16 %v399, %v399
      %v428 = vpack.c.b16 %v401, %v400
      %v429 = vpack.c.b16 %v402, %v402
      %v430 = vpack.c.b16 %v404, %v403
      %v431 = vpack.c.b16 %v405, %v405
      %v432 = vpack.c.b16 %v407, %v406
      %v433 = vpack.c.b16 %v408, %v408
      %v434 = vpack.c.b16 %v410, %v409
      %v435 = vpack.c.b16 %v411, %v411
      %v436 = vpack.c.b16 %v413, %v412
      %v437 = vpack.c.b16 %v414, %v414
      %v438 = vpack.c.b16 %v416, %v415
      %v439 = vpack.c.b16 %v417, %v417
      %v440 = vpack.c.b16 %v419, %v418
      %v441 = vpack.c.b16 %v420, %v420
      %v442 = vpack.c.b16 %v422, %v421
      %v443 = vpack.c.b16 %v423, %v423
      %vm444 = vsmask.f32 7424
      %v446 = vshrl.u32 %v424, 16
      %v448 = vshll.u32 %v424, 16
      %v450 = vrot.slane %v448, 1
      %v451 = vor.u32 %v446, %v450
      %v453 = vshll.u32 %v425, 16
      %v455 = vrot.slane %v453, 1
      %v456 = vsel %vm444, %v451, %v455
      %v458 = vshrl.u32 %v426, 16
      %v460 = vshll.u32 %v426, 16
      %v462 = vrot.slane %v460, 1
      %v463 = vor.u32 %v458, %v462
      %v465 = vshll.u32 %v427, 16
      %v467 = vrot.slane %v465, 1
      %v468 = vsel %vm444, %v463, %v467
      %v470 = vshrl.u32 %v428, 16
      %v472 = vshll.u32 %v428, 16
      %v474 = vrot.slane %v472, 1
      %v475 = vor.u32 %v470, %v474
      %v477 = vshll.u32 %v429, 16
      %v479 = vrot.slane %v477, 1
      %v480 = vsel %vm444, %v475, %v479
      %v482 = vshrl.u32 %v430, 16
      %v484 = vshll.u32 %v430, 16
      %v486 = vrot.slane %v484, 1
      %v487 = vor.u32 %v482, %v486
      %v489 = vshll.u32 %v431, 16
      %v491 = vrot.slane %v489, 1
      %v492 = vsel %vm444, %v487, %v491
      %v494 = vshrl.u32 %v432, 16
      %v496 = vshll.u32 %v432, 16
      %v498 = vrot.slane %v496, 1
      %v499 = vor.u32 %v494, %v498
      %v501 = vshll.u32 %v433, 16
      %v503 = vrot.slane %v501, 1
      %v504 = vsel %vm444, %v499, %v503
      %v506 = vshrl.u32 %v434, 16
      %v508 = vshll.u32 %v434, 16
      %v510 = vrot.slane %v508, 1
      %v511 = vor.u32 %v506, %v510
      %v513 = vshll.u32 %v435, 16
      %v515 = vrot.slane %v513, 1
      %v516 = vsel %vm444, %v511, %v515
      %v518 = vshrl.u32 %v436, 16
      %v520 = vshll.u32 %v436, 16
      %v522 = vrot.slane %v520, 1
      %v523 = vor.u32 %v518, %v522
      %v525 = vshll.u32 %v437, 16
      %v527 = vrot.slane %v525, 1
      %v528 = vsel %vm444, %v523, %v527
      %v530 = vshrl.u32 %v438, 16
      %v532 = vshll.u32 %v438, 16
      %v534 = vrot.slane %v532, 1
      %v535 = vor.u32 %v530, %v534
      %v537 = vshll.u32 %v439, 16
      %v539 = vrot.slane %v537, 1
      %v540 = vsel %vm444, %v535, %v539
      %v542 = vshrl.u32 %v440, 16
      %v544 = vshll.u32 %v440, 16
      %v546 = vrot.slane %v544, 1
      %v547 = vor.u32 %v542, %v546
      %v549 = vshll.u32 %v441, 16
      %v551 = vrot.slane %v549, 1
      %v552 = vsel %vm444, %v547, %v551
      %v554 = vshrl.u32 %v442, 16
      %v556 = vshll.u32 %v442, 16
      %v558 = vrot.slane %v556, 1
      %v559 = vor.u32 %v554, %v558
      %v561 = vshll.u32 %v443, 16
      %v563 = vrot.slane %v561, 1
      %v564 = vsel %vm444, %v559, %v563
      %565 = vrot.lane.b32.xlu0 %v456, 4
      %v566 = vpop.permute.xlu0 %565
      %567 = vrot.lane.b32.xlu0 %v468, 4
      %v568 = vpop.permute.xlu0 %567
      %569 = vrot.lane.b32.xlu0 %v480, 4
      %v570 = vpop.permute.xlu0 %569
      %571 = vrot.lane.b32.xlu0 %v492, 4
      %v572 = vpop.permute.xlu0 %571
      %573 = vrot.lane.b32.xlu0 %v504, 4
      %v574 = vpop.permute.xlu0 %573
      %575 = vrot.lane.b32.xlu0 %v516, 4
      %v576 = vpop.permute.xlu0 %575
      %577 = vrot.lane.b32.xlu0 %v528, 4
      %v578 = vpop.permute.xlu0 %577
      %579 = vrot.lane.b32.xlu0 %v540, 4
      %v580 = vpop.permute.xlu0 %579
      %581 = vrot.lane.b32.xlu0 %v552, 4
      %v582 = vpop.permute.xlu0 %581
      %583 = vrot.lane.b32.xlu0 %v564, 4
      %v584 = vpop.permute.xlu0 %583
      %vm595 = vcmask 64544
      %596 = vst.msk [vmem:[#allocation2] sm:$0xff] %vm595, %v566
      %597 = vst.msk [vmem:[#allocation2 + $0x8] sm:$0xff] %vm595, %v568
      %598 = vst.msk [vmem:[#allocation2 + $0x10] sm:$0xff] %vm595, %v570
      %599 = vst.msk [vmem:[#allocation2 + $0x18] sm:$0xff] %vm595, %v572
      %600 = vst.msk [vmem:[#allocation2 + $0x20] sm:$0xff] %vm595, %v574
      %601 = vst.msk [vmem:[#allocation2 + $0x28] sm:$0xff] %vm595, %v576
      %602 = vst.msk [vmem:[#allocation2 + $0x30] sm:$0xff] %vm595, %v578
      %603 = vst.msk [vmem:[#allocation2 + $0x38] sm:$0xff] %vm595, %v580
      %604 = vst.msk [vmem:[#allocation2 + $0x40] sm:$0xff] %vm595, %v582
      %605 = vst.msk [vmem:[#allocation2 + $0x48] sm:$0xff] %vm595, %v584
      %v606 = vld [vmem:[%s230] sm:$0xe]
      %v607 = vld [vmem:[%s230 + $0x4] sm:$0xf]
      %v608 = vld [vmem:[%s230 + $0x8] sm:$0x1]
      %v609 = vld [vmem:[%s230 + $0xc] sm:$0xe]
      %v610 = vld [vmem:[%s230 + $0x10] sm:$0xf]
      %v611 = vld [vmem:[%s230 + $0x14] sm:$0x1]
      %v612 = vld [vmem:[%s230 + $0x18] sm:$0xe]
      %v613 = vld [vmem:[%s230 + $0x1c] sm:$0xf]
      %v614 = vld [vmem:[%s230 + $0x20] sm:$0x1]
      %v615 = vld [vmem:[%s230 + $0x24] sm:$0xe]
      %v616 = vld [vmem:[%s230 + $0x28] sm:$0xf]
      %v617 = vld [vmem:[%s230 + $0x2c] sm:$0x1]
      %v618 = vld [vmem:[%s230 + $0x30] sm:$0xe]
      %v619 = vld [vmem:[%s230 + $0x34] sm:$0xf]
      %v620 = vld [vmem:[%s230 + $0x38] sm:$0x1]
      %v621 = vld [vmem:[%s230 + $0x3c] sm:$0xe]
      %v622 = vld [vmem:[%s230 + $0x40] sm:$0xf]
      %v623 = vld [vmem:[%s230 + $0x44] sm:$0x1]
      %v624 = vld [vmem:[%s230 + $0x48] sm:$0xe]
      %v625 = vld [vmem:[%s230 + $0x4c] sm:$0xf]
      %v626 = vld [vmem:[%s230 + $0x50] sm:$0x1]
      %v627 = vld [vmem:[%s230 + $0x54] sm:$0xe]
      %v628 = vld [vmem:[%s230 + $0x58] sm:$0xf]
      %v629 = vld [vmem:[%s230 + $0x5c] sm:$0x1]
      %v630 = vld [vmem:[%s230 + $0x60] sm:$0xe]
      %v631 = vld [vmem:[%s230 + $0x64] sm:$0xf]
      %v632 = vld [vmem:[%s230 + $0x68] sm:$0x1]
      %v633 = vld [vmem:[%s230 + $0x6c] sm:$0xe]
      %v634 = vld [vmem:[%s230 + $0x70] sm:$0xf]
      %v635 = vld [vmem:[%s230 + $0x74] sm:$0x1]
      %v666 = vunpack.c.l.b16 %v606
      %v667 = vunpack.c.l.b16 %v607
      %v668 = vunpack.c.l.b16 %v608
      %v669 = vunpack.c.l.b16 %v609
      %v670 = vunpack.c.l.b16 %v610
      %v671 = vunpack.c.l.b16 %v611
      %v672 = vunpack.c.l.b16 %v612
      %v673 = vunpack.c.l.b16 %v613
      %v674 = vunpack.c.l.b16 %v614
      %v675 = vunpack.c.l.b16 %v615
      %v676 = vunpack.c.l.b16 %v616
      %v677 = vunpack.c.l.b16 %v617
      %v678 = vunpack.c.l.b16 %v618
      %v679 = vunpack.c.l.b16 %v619
      %v680 = vunpack.c.l.b16 %v620
      %v681 = vunpack.c.l.b16 %v621
      %v682 = vunpack.c.l.b16 %v622
      %v683 = vunpack.c.l.b16 %v623
      %v684 = vunpack.c.l.b16 %v624
      %v685 = vunpack.c.l.b16 %v625
      %v686 = vunpack.c.l.b16 %v626
      %v687 = vunpack.c.l.b16 %v627
      %v688 = vunpack.c.l.b16 %v628
      %v689 = vunpack.c.l.b16 %v629
      %v690 = vunpack.c.l.b16 %v630
      %v691 = vunpack.c.l.b16 %v631
      %v692 = vunpack.c.l.b16 %v632
      %v693 = vunpack.c.l.b16 %v633
      %v694 = vunpack.c.l.b16 %v634
      %v695 = vunpack.c.l.b16 %v635
      %v696 = vpack.c.b16 %v667, %v666
      %v697 = vpack.c.b16 %v668, %v668
      %v698 = vpack.c.b16 %v670, %v669
      %v699 = vpack.c.b16 %v671, %v671
      %v700 = vpack.c.b16 %v673, %v672
      %v701 = vpack.c.b16 %v674, %v674
      %v702 = vpack.c.b16 %v676, %v675
      %v703 = vpack.c.b16 %v677, %v677
      %v704 = vpack.c.b16 %v679, %v678
      %v705 = vpack.c.b16 %v680, %v680
      %v706 = vpack.c.b16 %v682, %v681
      %v707 = vpack.c.b16 %v683, %v683
      %v708 = vpack.c.b16 %v685, %v684
      %v709 = vpack.c.b16 %v686, %v686
      %v710 = vpack.c.b16 %v688, %v687
      %v711 = vpack.c.b16 %v689, %v689
      %v712 = vpack.c.b16 %v691, %v690
      %v713 = vpack.c.b16 %v692, %v692
      %v714 = vpack.c.b16 %v694, %v693
      %v715 = vpack.c.b16 %v695, %v695
      %vm716 = vcmask 1046528
      %v717 = vrot.slane %v696, 1
      %v718 = vrot.slane %v697, 1
      %v719 = vsel %vm716, %v717, %v718
      %v720 = vrot.slane %v698, 1
      %v721 = vrot.slane %v699, 1
      %v722 = vsel %vm716, %v720, %v721
      %v723 = vrot.slane %v700, 1
      %v724 = vrot.slane %v701, 1
      %v725 = vsel %vm716, %v723, %v724
      %v726 = vrot.slane %v702, 1
      %v727 = vrot.slane %v703, 1
      %v728 = vsel %vm716, %v726, %v727
      %v729 = vrot.slane %v704, 1
      %v730 = vrot.slane %v705, 1
      %v731 = vsel %vm716, %v729, %v730
      %v732 = vrot.slane %v706, 1
      %v733 = vrot.slane %v707, 1
      %v734 = vsel %vm716, %v732, %v733
      %v735 = vrot.slane %v708, 1
      %v736 = vrot.slane %v709, 1
      %v737 = vsel %vm716, %v735, %v736
      %v738 = vrot.slane %v710, 1
      %v739 = vrot.slane %v711, 1
      %v740 = vsel %vm716, %v738, %v739
      %v741 = vrot.slane %v712, 1
      %v742 = vrot.slane %v713, 1
      %v743 = vsel %vm716, %v741, %v742
      %v744 = vrot.slane %v714, 1
      %v745 = vrot.slane %v715, 1
      %v746 = vsel %vm716, %v744, %v745
      %747 = vrot.lane.b32.xlu0 %v719, 8
      %v748 = vpop.permute.xlu0 %747
      %749 = vrot.lane.b32.xlu0 %v722, 8
      %v750 = vpop.permute.xlu0 %749
      %751 = vrot.lane.b32.xlu0 %v725, 8
      %v752 = vpop.permute.xlu0 %751
      %753 = vrot.lane.b32.xlu0 %v728, 8
      %v754 = vpop.permute.xlu0 %753
      %755 = vrot.lane.b32.xlu0 %v731, 8
      %v756 = vpop.permute.xlu0 %755
      %757 = vrot.lane.b32.xlu0 %v734, 8
      %v758 = vpop.permute.xlu0 %757
      %759 = vrot.lane.b32.xlu0 %v737, 8
      %v760 = vpop.permute.xlu0 %759
      %761 = vrot.lane.b32.xlu0 %v740, 8
      %v762 = vpop.permute.xlu0 %761
      %763 = vrot.lane.b32.xlu0 %v743, 8
      %v764 = vpop.permute.xlu0 %763
      %765 = vrot.lane.b32.xlu0 %v746, 8
      %v766 = vpop.permute.xlu0 %765
      %vm777 = vcmask 97344
      %778 = vst.msk [vmem:[#allocation2] sm:$0xff] %vm777, %v748
      %779 = vst.msk [vmem:[#allocation2 + $0x8] sm:$0xff] %vm777, %v750
      %780 = vst.msk [vmem:[#allocation2 + $0x10] sm:$0xff] %vm777, %v752
      %781 = vst.msk [vmem:[#allocation2 + $0x18] sm:$0xff] %vm777, %v754
      %782 = vst.msk [vmem:[#allocation2 + $0x20] sm:$0xff] %vm777, %v756
      %783 = vst.msk [vmem:[#allocation2 + $0x28] sm:$0xff] %vm777, %v758
      %784 = vst.msk [vmem:[#allocation2 + $0x30] sm:$0xff] %vm777, %v760
      %785 = vst.msk [vmem:[#allocation2 + $0x38] sm:$0xff] %vm777, %v762
      %786 = vst.msk [vmem:[#allocation2 + $0x40] sm:$0xff] %vm777, %v764
      %787 = vst.msk [vmem:[#allocation2 + $0x48] sm:$0xff] %vm777, %v766
      %v788 = vld [vmem:[#allocation2] sm:$0xff]
      %v789 = vld [vmem:[#allocation2 + $0x8] sm:$0xff]
      %v790 = vld [vmem:[#allocation2 + $0x10] sm:$0xff]
      %v791 = vld [vmem:[#allocation2 + $0x18] sm:$0xff]
      %v792 = vld [vmem:[#allocation2 + $0x20] sm:$0xff]
      %v793 = vld [vmem:[#allocation2 + $0x28] sm:$0xff]
      %v794 = vld [vmem:[#allocation2 + $0x30] sm:$0xff]
      %v795 = vld [vmem:[#allocation2 + $0x38] sm:$0xff]
      %v796 = vld [vmem:[%s1] sm:$0xf]
      %v797 = vld [vmem:[%s1 + $0x4] sm:$0x3]
      %s798 = scalar_lea.vmem [#allocation2], 8
      %v799 = vld [vmem:[%s798] sm:$0xff]
      %v800 = vld [vmem:[%s798 + $0x8] sm:$0xff]
      %v801 = vld [vmem:[%s798 + $0x10] sm:$0xff]
      %v802 = vld [vmem:[%s798 + $0x18] sm:$0xff]
      %v803 = vld [vmem:[%s798 + $0x20] sm:$0xff]
      %v804 = vld [vmem:[%s798 + $0x28] sm:$0xff]
      %v805 = vld [vmem:[%s798 + $0x30] sm:$0xff]
      %v806 = vld [vmem:[%s798 + $0x38] sm:$0xff]
      %s807 = scalar_lea.vmem %s1, 8
      %v808 = vld [vmem:[%s807] sm:$0xf]
      %v809 = vld [vmem:[%s807 + $0x4] sm:$0x3]
      %v812 = vunpack.c.l.b16 %v808
      %v813 = vunpack.c.l.b16 %v809
      %v814 = vpack.c.b16 %v813, %v812
      %vm815 = vcmask 97280
      %v817 = vsel %vm815, %v799, 0
      %v820 = vsel %vm815, %v800, 0
      %v823 = vsel %vm815, %v801, 0
      %v826 = vsel %vm815, %v802, 0
      %v829 = vsel %vm815, %v803, 0
      %v832 = vsel %vm815, %v804, 0
      %v835 = vsel %vm815, %v805, 0
      %v838 = vsel %vm815, %v806, 0
      %vm840 = vcmask 1045504
      %v842 = vsel %vm840, %v814, 0
      %844 = vmatprep.subr.bf16.mxu0 0
      %845 = vmatpush1.bf16.msra.mxu0 %v842
      %846 = vmatprep.subr.bf16.mxu0 0
      %847 = vmatpush1.bf16.msra.mxu0 0
      %848 = vmatprep.subr.bf16.mxu0 0
      %849 = vmatpush1.bf16.msra.mxu0 0
      %850 = vmatprep.subr.bf16.mxu0 0
      %851 = vmatpush1.bf16.msra.mxu0 0
      %852 = vmatprep.subr.bf16.mxu0 0
      %853 = vmatpush1.bf16.msra.mxu0 0
      %854 = vmatprep.subr.bf16.mxu0 0
      %855 = vmatpush1.bf16.msra.mxu0 0
      %856 = vmatprep.subr.bf16.mxu0 0
      %857 = vmatpush1.bf16.msra.mxu0 0
      %858 = vmatprep.subr.bf16.mxu0 0
      %859 = vmatpush1.bf16.msra.mxu0 0
      %860 = vmatprep.subr.bf16.mxu0 0
      %861 = vmatpush1.bf16.msra.mxu0 0
      %862 = vmatprep.subr.bf16.mxu0 0
      %863 = vmatpush1.bf16.msra.mxu0 0
      %864 = vmatprep.subr.bf16.mxu0 0
      %865 = vmatpush1.bf16.msra.mxu0 0
      %866 = vmatprep.subr.bf16.mxu0 0
      %867 = vmatpush1.bf16.msra.mxu0 0
      %868 = vmatprep.subr.bf16.mxu0 0
      %869 = vmatpush1.bf16.msra.mxu0 0
      %870 = vmatprep.subr.bf16.mxu0 0
      %871 = vmatpush1.bf16.msra.mxu0 0
      %872 = vmatprep.subr.bf16.mxu0 0
      %873 = vmatpush1.bf16.msra.mxu0 0
      %874 = vmatprep.subr.bf16.mxu0 0
      %875 = vmatpush1.bf16.msra.mxu0 0
      %876 = vmatprep.mubr.bf16.mxu0 0
      %877 = vmatmul.mubr.bf16.gmra.mrb[0].mxu0 %v817
      %v878 = vpop.f32.mrb[0].mxu0
      %v879 = vadd.f32 0.0, %v878
      %v880 = vpop.f32.mrb[0].mxu0
      %v881 = vpop.f32.mrb[0].mxu0
      %v882 = vadd.f32 0.0, %v881
      %v883 = vpop.f32.mrb[0].mxu0
      %884 = vmatprep.mubr.bf16.mxu0 0
      %885 = vmatmul.mubr.bf16.gmra.mrb[0].mxu0 %v820
      %v886 = vpop.f32.mrb[0].mxu0
      %v887 = vadd.f32 0.0, %v886
      %v888 = vpop.f32.mrb[0].mxu0
      %v889 = vpop.f32.mrb[0].mxu0
      %v890 = vadd.f32 0.0, %v889
      %v891 = vpop.f32.mrb[0].mxu0
      %892 = vmatprep.mubr.bf16.mxu0 0
      %893 = vmatmul.mubr.bf16.gmra.mrb[0].mxu0 %v823
      %v894 = vpop.f32.mrb[0].mxu0
      %v895 = vadd.f32 0.0, %v894
      %v896 = vpop.f32.mrb[0].mxu0
      %v897 = vpop.f32.mrb[0].mxu0
      %v898 = vadd.f32 0.0, %v897
      %v899 = vpop.f32.mrb[0].mxu0
      %900 = vmatprep.mubr.bf16.mxu0 0
      %901 = vmatmul.mubr.bf16.gmra.mrb[0].mxu0 %v826
      %v902 = vpop.f32.mrb[0].mxu0
      %v903 = vadd.f32 0.0, %v902
      %v904 = vpop.f32.mrb[0].mxu0
      %v905 = vpop.f32.mrb[0].mxu0
      %v906 = vadd.f32 0.0, %v905
      %v907 = vpop.f32.mrb[0].mxu0
      %908 = vmatprep.mubr.bf16.mxu0 0
      %909 = vmatmul.mubr.bf16.gmra.mrb[0].mxu0 %v829
      %v910 = vpop.f32.mrb[0].mxu0
      %v911 = vadd.f32 0.0, %v910
      %v912 = vpop.f32.mrb[0].mxu0
      %v913 = vpop.f32.mrb[0].mxu0
      %v914 = vadd.f32 0.0, %v913
      %v915 = vpop.f32.mrb[0].mxu0
      %916 = vmatprep.mubr.bf16.mxu0 0
      %917 = vmatmul.mubr.bf16.gmra.mrb[0].mxu0 %v832
      %v918 = vpop.f32.mrb[0].mxu0
      %v919 = vadd.f32 0.0, %v918
      %v920 = vpop.f32.mrb[0].mxu0
      %v921 = vpop.f32.mrb[0].mxu0
      %v922 = vadd.f32 0.0, %v921
      %v923 = vpop.f32.mrb[0].mxu0
      %924 = vmatprep.mubr.bf16.mxu0 0
      %925 = vmatmul.mubr.bf16.gmra.mrb[0].mxu0 %v835
      %v926 = vpop.f32.mrb[0].mxu0
      %v927 = vadd.f32 0.0, %v926
      %v928 = vpop.f32.mrb[0].mxu0
      %v929 = vpop.f32.mrb[0].mxu0
      %v930 = vadd.f32 0.0, %v929
      %v931 = vpop.f32.mrb[0].mxu0
      %932 = vmatprep.mubr.bf16.mxu0 0
      %933 = vmatmul.mubr.bf16.gmra.mrb[0].mxu0 %v838
      %v934 = vpop.f32.mrb[0].mxu0
      %v935 = vadd.f32 0.0, %v934
      %v936 = vpop.f32.mrb[0].mxu0
      %v937 = vpop.f32.mrb[0].mxu0
      %v938 = vadd.f32 0.0, %v937
      %v939 = vpop.f32.mrb[0].mxu0
      %940 = vdwg.mxu0
      %v943 = vunpack.c.l.b16 %v796
      %v944 = vunpack.c.l.b16 %v797
      %v945 = vpack.c.b16 %v944, %v943
      %v947 = vsel %vm815, %v788, 0
      %v950 = vsel %vm815, %v789, 0
      %v953 = vsel %vm815, %v790, 0
      %v956 = vsel %vm815, %v791, 0
      %v959 = vsel %vm815, %v792, 0
      %v962 = vsel %vm815, %v793, 0
      %v965 = vsel %vm815, %v794, 0
      %v968 = vsel %vm815, %v795, 0
      %v971 = vsel %vm840, %v945, 0
      %973 = vmatprep.subr.bf16.mxu0 0
      %974 = vmatpush1.bf16.msra.mxu0 %v971
      %975 = vmatprep.subr.bf16.mxu0 0
      %976 = vmatpush1.bf16.msra.mxu0 0
      %977 = vmatprep.subr.bf16.mxu0 0
      %978 = vmatpush1.bf16.msra.mxu0 0
      %979 = vmatprep.subr.bf16.mxu0 0
      %980 = vmatpush1.bf16.msra.mxu0 0
      %981 = vmatprep.subr.bf16.mxu0 0
      %982 = vmatpush1.bf16.msra.mxu0 0
      %983 = vmatprep.subr.bf16.mxu0 0
      %984 = vmatpush1.bf16.msra.mxu0 0
      %985 = vmatprep.subr.bf16.mxu0 0
      %986 = vmatpush1.bf16.msra.mxu0 0
      %987 = vmatprep.subr.bf16.mxu0 0
      %988 = vmatpush1.bf16.msra.mxu0 0
      %989 = vmatprep.subr.bf16.mxu0 0
      %990 = vmatpush1.bf16.msra.mxu0 0
      %991 = vmatprep.subr.bf16.mxu0 0
      %992 = vmatpush1.bf16.msra.mxu0 0
      %993 = vmatprep.subr.bf16.mxu0 0
      %994 = vmatpush1.bf16.msra.mxu0 0
      %995 = vmatprep.subr.bf16.mxu0 0
      %996 = vmatpush1.bf16.msra.mxu0 0
      %997 = vmatprep.subr.bf16.mxu0 0
      %998 = vmatpush1.bf16.msra.mxu0 0
      %999 = vmatprep.subr.bf16.mxu0 0
      %1000 = vmatpush1.bf16.msra.mxu0 0
      %1001 = vmatprep.subr.bf16.mxu0 0
      %1002 = vmatpush1.bf16.msra.mxu0 0
      %1003 = vmatprep.subr.bf16.mxu0 0
      %1004 = vmatpush1.bf16.msra.mxu0 0
      %1005 = vmatprep.mubr.bf16.mxu0 0
      %1006 = vmatmul.mubr.bf16.gmra.mrb[0].mxu0 %v947
      %v1007 = vpop.f32.mrb[0].mxu0
      %v1008 = vadd.f32 %v879, %v1007
      %v1009 = vpop.f32.mrb[0].mxu0
      %v1010 = vpop.f32.mrb[0].mxu0
      %v1011 = vadd.f32 %v882, %v1010
      %v1012 = vpop.f32.mrb[0].mxu0
      %1013 = vmatprep.mubr.bf16.mxu0 0
      %1014 = vmatmul.mubr.bf16.gmra.mrb[0].mxu0 %v950
      %v1015 = vpop.f32.mrb[0].mxu0
      %v1016 = vadd.f32 %v887, %v1015
      %v1017 = vpop.f32.mrb[0].mxu0
      %v1018 = vpop.f32.mrb[0].mxu0
      %v1019 = vadd.f32 %v890, %v1018
      %v1020 = vpop.f32.mrb[0].mxu0
      %1021 = vmatprep.mubr.bf16.mxu0 0
      %1022 = vmatmul.mubr.bf16.gmra.mrb[0].mxu0 %v953
      %v1023 = vpop.f32.mrb[0].mxu0
      %v1024 = vadd.f32 %v895, %v1023
      %v1025 = vpop.f32.mrb[0].mxu0
      %v1026 = vpop.f32.mrb[0].mxu0
      %v1027 = vadd.f32 %v898, %v1026
      %v1028 = vpop.f32.mrb[0].mxu0
      %1029 = vmatprep.mubr.bf16.mxu0 0
      %1030 = vmatmul.mubr.bf16.gmra.mrb[0].mxu0 %v956
      %v1031 = vpop.f32.mrb[0].mxu0
      %v1032 = vadd.f32 %v903, %v1031
      %v1033 = vpop.f32.mrb[0].mxu0
      %v1034 = vpop.f32.mrb[0].mxu0
      %v1035 = vadd.f32 %v906, %v1034
      %v1036 = vpop.f32.mrb[0].mxu0
      %1037 = vmatprep.mubr.bf16.mxu0 0
      %1038 = vmatmul.mubr.bf16.gmra.mrb[0].mxu0 %v959
      %v1039 = vpop.f32.mrb[0].mxu0
      %v1040 = vadd.f32 %v911, %v1039
      %v1041 = vpop.f32.mrb[0].mxu0
      %v1042 = vpop.f32.mrb[0].mxu0
      %v1043 = vadd.f32 %v914, %v1042
      %v1044 = vpop.f32.mrb[0].mxu0
      %1045 = vmatprep.mubr.bf16.mxu0 0
      %1046 = vmatmul.mubr.bf16.gmra.mrb[0].mxu0 %v962
      %v1047 = vpop.f32.mrb[0].mxu0
      %v1048 = vadd.f32 %v919, %v1047
      %v1049 = vpop.f32.mrb[0].mxu0
      %v1050 = vpop.f32.mrb[0].mxu0
      %v1051 = vadd.f32 %v922, %v1050
      %v1052 = vpop.f32.mrb[0].mxu0
      %1053 = vmatprep.mubr.bf16.mxu0 0
      %1054 = vmatmul.mubr.bf16.gmra.mrb[0].mxu0 %v965
      %v1055 = vpop.f32.mrb[0].mxu0
      %v1056 = vadd.f32 %v927, %v1055
      %v1057 = vpop.f32.mrb[0].mxu0
      %v1058 = vpop.f32.mrb[0].mxu0
      %v1059 = vadd.f32 %v930, %v1058
      %v1060 = vpop.f32.mrb[0].mxu0
      %1061 = vmatprep.mubr.bf16.mxu0 0
      %1062 = vmatmul.mubr.bf16.gmra.mrb[0].mxu0 %v968
      %v1063 = vpop.f32.mrb[0].mxu0
      %v1064 = vadd.f32 %v935, %v1063
      %v1065 = vpop.f32.mrb[0].mxu0
      %v1066 = vpop.f32.mrb[0].mxu0
      %v1067 = vadd.f32 %v938, %v1066
      %v1068 = vpop.f32.mrb[0].mxu0
      %1069 = vdwg.mxu0
      %s1070 = scalar_lea.vmem [#allocation2], 16
      %v1071 = vld [vmem:[%s1070] sm:$0xff]
      %v1072 = vld [vmem:[%s1070 + $0x8] sm:$0xff]
      %v1073 = vld [vmem:[%s1070 + $0x10] sm:$0xff]
      %v1074 = vld [vmem:[%s1070 + $0x18] sm:$0xff]
      %v1075 = vld [vmem:[%s1070 + $0x20] sm:$0xff]
      %v1076 = vld [vmem:[%s1070 + $0x28] sm:$0xff]
      %v1077 = vld [vmem:[%s1070 + $0x30] sm:$0xff]
      %v1078 = vld [vmem:[%s1070 + $0x38] sm:$0xff]
      %s1079 = scalar_lea.vmem %s1, 16
      %v1080 = vld [vmem:[%s1079] sm:$0xf]
      %v1081 = vld [vmem:[%s1079 + $0x4] sm:$0x3]
      %v1084 = vunpack.c.l.b16 %v1080
      %v1085 = vunpack.c.l.b16 %v1081
      %v1086 = vpack.c.b16 %v1085, %v1084
      %v1088 = vsel %vm815, %v1071, 0
      %v1091 = vsel %vm815, %v1072, 0
      %v1094 = vsel %vm815, %v1073, 0
      %v1097 = vsel %vm815, %v1074, 0
      %v1100 = vsel %vm815, %v1075, 0
      %v1103 = vsel %vm815, %v1076, 0
      %v1106 = vsel %vm815, %v1077, 0
      %v1109 = vsel %vm815, %v1078, 0
      %v1112 = vsel %vm840, %v1086, 0
      %1114 = vmatprep.subr.bf16.mxu0 0
      %1115 = vmatpush1.bf16.msra.mxu0 %v1112
      %1116 = vmatprep.subr.bf16.mxu0 0
      %1117 = vmatpush1.bf16.msra.mxu0 0
      %1118 = vmatprep.subr.bf16.mxu0 0
      %1119 = vmatpush1.bf16.msra.mxu0 0
      %1120 = vmatprep.subr.bf16.mxu0 0
      %1121 = vmatpush1.bf16.msra.mxu0 0
      %1122 = vmatprep.subr.bf16.mxu0 0
      %1123 = vmatpush1.bf16.msra.mxu0 0
      %1124 = vmatprep.subr.bf16.mxu0 0
      %1125 = vmatpush1.bf16.msra.mxu0 0
      %1126 = vmatprep.subr.bf16.mxu0 0
      %1127 = vmatpush1.bf16.msra.mxu0 0
      %1128 = vmatprep.subr.bf16.mxu0 0
      %1129 = vmatpush1.bf16.msra.mxu0 0
      %1130 = vmatprep.subr.bf16.mxu0 0
      %1131 = vmatpush1.bf16.msra.mxu0 0
      %1132 = vmatprep.subr.bf16.mxu0 0
      %1133 = vmatpush1.bf16.msra.mxu0 0
      %1134 = vmatprep.subr.bf16.mxu0 0
      %1135 = vmatpush1.bf16.msra.mxu0 0
      %1136 = vmatprep.subr.bf16.mxu0 0
      %1137 = vmatpush1.bf16.msra.mxu0 0
      %1138 = vmatprep.subr.bf16.mxu0 0
      %1139 = vmatpush1.bf16.msra.mxu0 0
      %1140 = vmatprep.subr.bf16.mxu0 0
      %1141 = vmatpush1.bf16.msra.mxu0 0
      %1142 = vmatprep.subr.bf16.mxu0 0
      %1143 = vmatpush1.bf16.msra.mxu0 0
      %1144 = vmatprep.subr.bf16.mxu0 0
      %1145 = vmatpush1.bf16.msra.mxu0 0
      %1146 = vmatprep.mubr.bf16.mxu0 0
      %1147 = vmatmul.mubr.bf16.gmra.mrb[0].mxu0 %v1088
      %v1148 = vpop.f32.mrb[0].mxu0
      %v1149 = vadd.f32 0.0, %v1148
      %v1150 = vpop.f32.mrb[0].mxu0
      %v1151 = vpop.f32.mrb[0].mxu0
      %v1152 = vadd.f32 0.0, %v1151
      %v1153 = vpop.f32.mrb[0].mxu0
      %1154 = vmatprep.mubr.bf16.mxu0 0
      %1155 = vmatmul.mubr.bf16.gmra.mrb[0].mxu0 %v1091
      %v1156 = vpop.f32.mrb[0].mxu0
      %v1157 = vadd.f32 0.0, %v1156
      %v1158 = vpop.f32.mrb[0].mxu0
      %v1159 = vpop.f32.mrb[0].mxu0
      %v1160 = vadd.f32 0.0, %v1159
      %v1161 = vpop.f32.mrb[0].mxu0
      %1162 = vmatprep.mubr.bf16.mxu0 0
      %1163 = vmatmul.mubr.bf16.gmra.mrb[0].mxu0 %v1094
      %v1164 = vpop.f32.mrb[0].mxu0
      %v1165 = vadd.f32 0.0, %v1164
      %v1166 = vpop.f32.mrb[0].mxu0
      %v1167 = vpop.f32.mrb[0].mxu0
      %v1168 = vadd.f32 0.0, %v1167
      %v1169 = vpop.f32.mrb[0].mxu0
      %1170 = vmatprep.mubr.bf16.mxu0 0
      %1171 = vmatmul.mubr.bf16.gmra.mrb[0].mxu0 %v1097
      %v1172 = vpop.f32.mrb[0].mxu0
      %v1173 = vadd.f32 0.0, %v1172
      %v1174 = vpop.f32.mrb[0].mxu0
      %v1175 = vpop.f32.mrb[0].mxu0
      %v1176 = vadd.f32 0.0, %v1175
      %v1177 = vpop.f32.mrb[0].mxu0
      %1178 = vmatprep.mubr.bf16.mxu0 0
      %1179 = vmatmul.mubr.bf16.gmra.mrb[0].mxu0 %v1100
      %v1180 = vpop.f32.mrb[0].mxu0
      %v1181 = vadd.f32 0.0, %v1180
      %v1182 = vpop.f32.mrb[0].mxu0
      %v1183 = vpop.f32.mrb[0].mxu0
      %v1184 = vadd.f32 0.0, %v1183
      %v1185 = vpop.f32.mrb[0].mxu0
      %1186 = vmatprep.mubr.bf16.mxu0 0
      %1187 = vmatmul.mubr.bf16.gmra.mrb[0].mxu0 %v1103
      %v1188 = vpop.f32.mrb[0].mxu0
      %v1189 = vadd.f32 0.0, %v1188
      %v1190 = vpop.f32.mrb[0].mxu0
      %v1191 = vpop.f32.mrb[0].mxu0
      %v1192 = vadd.f32 0.0, %v1191
      %v1193 = vpop.f32.mrb[0].mxu0
      %1194 = vmatprep.mubr.bf16.mxu0 0
      %1195 = vmatmul.mubr.bf16.gmra.mrb[0].mxu0 %v1106
      %v1196 = vpop.f32.mrb[0].mxu0
      %v1197 = vadd.f32 0.0, %v1196
      %v1198 = vpop.f32.mrb[0].mxu0
      %v1199 = vpop.f32.mrb[0].mxu0
      %v1200 = vadd.f32 0.0, %v1199
      %v1201 = vpop.f32.mrb[0].mxu0
      %1202 = vmatprep.mubr.bf16.mxu0 0
      %1203 = vmatmul.mubr.bf16.gmra.mrb[0].mxu0 %v1109
      %v1204 = vpop.f32.mrb[0].mxu0
      %v1205 = vadd.f32 0.0, %v1204
      %v1206 = vpop.f32.mrb[0].mxu0
      %v1207 = vpop.f32.mrb[0].mxu0
      %v1208 = vadd.f32 0.0, %v1207
      %v1209 = vpop.f32.mrb[0].mxu0
      %1210 = vdwg.mxu0
      %v1211 = vadd.f32 %v1008, %v1149
      %v1212 = vadd.f32 %v1011, %v1152
      %v1213 = vadd.f32 %v1016, %v1157
      %v1214 = vadd.f32 %v1019, %v1160
      %v1215 = vadd.f32 %v1024, %v1165
      %v1216 = vadd.f32 %v1027, %v1168
      %v1217 = vadd.f32 %v1032, %v1173
      %v1218 = vadd.f32 %v1035, %v1176
      %v1219 = vadd.f32 %v1040, %v1181
      %v1220 = vadd.f32 %v1043, %v1184
      %v1221 = vadd.f32 %v1048, %v1189
      %v1222 = vadd.f32 %v1051, %v1192
      %v1223 = vadd.f32 %v1056, %v1197
      %v1224 = vadd.f32 %v1059, %v1200
      %v1225 = vadd.f32 %v1064, %v1205
      %v1226 = vadd.f32 %v1067, %v1208
      %v1227 = vld [vmem:[%s2] sm:$0x1]
      %v1229 = vlaneseq
      %v1230 = vshrl.u32 %v1229, 7
      %v1231 = vsub.s32 0, %v1230
      %v1232 = vrot.slane %v1227, %v1231
      %v1234 = vadd.f32 %v1211, %v1232
      %v1235 = vadd.f32 %v1212, %v1232
      %v1236 = vadd.f32 %v1213, %v1232
      %v1237 = vadd.f32 %v1214, %v1232
      %v1238 = vadd.f32 %v1215, %v1232
      %v1239 = vadd.f32 %v1216, %v1232
      %v1240 = vadd.f32 %v1217, %v1232
      %v1241 = vadd.f32 %v1218, %v1232
      %v1242 = vadd.f32 %v1219, %v1232
      %v1243 = vadd.f32 %v1220, %v1232
      %v1244 = vadd.f32 %v1221, %v1232
      %v1245 = vadd.f32 %v1222, %v1232
      %v1246 = vadd.f32 %v1223, %v1232
      %v1247 = vadd.f32 %v1224, %v1232
      %v1248 = vadd.f32 %v1225, %v1232
      %v1249 = vadd.f32 %v1226, %v1232
      %vm1250 = vcmp.gt.f32.partialorder %v1234, 0.0
      %vm1251 = vcmp.gt.f32.partialorder %v1235, 0.0
      %vm1252 = vcmp.gt.f32.partialorder %v1236, 0.0
      %vm1253 = vcmp.gt.f32.partialorder %v1237, 0.0
      %vm1254 = vcmp.gt.f32.partialorder %v1238, 0.0
      %vm1255 = vcmp.gt.f32.partialorder %v1239, 0.0
      %vm1256 = vcmp.gt.f32.partialorder %v1240, 0.0
      %vm1257 = vcmp.gt.f32.partialorder %v1241, 0.0
      %vm1258 = vcmp.gt.f32.partialorder %v1242, 0.0
      %vm1259 = vcmp.gt.f32.partialorder %v1243, 0.0
      %vm1260 = vcmp.gt.f32.partialorder %v1244, 0.0
      %vm1261 = vcmp.gt.f32.partialorder %v1245, 0.0
      %vm1262 = vcmp.gt.f32.partialorder %v1246, 0.0
      %vm1263 = vcmp.gt.f32.partialorder %v1247, 0.0
      %vm1264 = vcmp.gt.f32.partialorder %v1248, 0.0
      %vm1265 = vcmp.gt.f32.partialorder %v1249, 0.0
      %v1266 = vmul.f32 %v1234, 0.01
      %v1267 = vmul.f32 %v1235, 0.01
      %v1268 = vmul.f32 %v1236, 0.01
      %v1269 = vmul.f32 %v1237, 0.01
      %v1270 = vmul.f32 %v1238, 0.01
      %v1271 = vmul.f32 %v1239, 0.01
      %v1272 = vmul.f32 %v1240, 0.01
      %v1273 = vmul.f32 %v1241, 0.01
      %v1274 = vmul.f32 %v1242, 0.01
      %v1275 = vmul.f32 %v1243, 0.01
      %v1276 = vmul.f32 %v1244, 0.01
      %v1277 = vmul.f32 %v1245, 0.01
      %v1278 = vmul.f32 %v1246, 0.01
      %v1279 = vmul.f32 %v1247, 0.01
      %v1280 = vmul.f32 %v1248, 0.01
      %v1281 = vmul.f32 %v1249, 0.01
      %v1282 = vsel %vm1250, %v1234, %v1266
      %v1283 = vsel %vm1251, %v1235, %v1267
      %v1284 = vsel %vm1252, %v1236, %v1268
      %v1285 = vsel %vm1253, %v1237, %v1269
      %v1286 = vsel %vm1254, %v1238, %v1270
      %v1287 = vsel %vm1255, %v1239, %v1271
      %v1288 = vsel %vm1256, %v1240, %v1272
      %v1289 = vsel %vm1257, %v1241, %v1273
      %v1290 = vsel %vm1258, %v1242, %v1274
      %v1291 = vsel %vm1259, %v1243, %v1275
      %v1292 = vsel %vm1260, %v1244, %v1276
      %v1293 = vsel %vm1261, %v1245, %v1277
      %v1294 = vsel %vm1262, %v1246, %v1278
      %v1295 = vsel %vm1263, %v1247, %v1279
      %v1296 = vsel %vm1264, %v1248, %v1280
      %v1297 = vsel %vm1265, %v1249, %v1281
      %v1298 = vpack.c.bf16 %v1283, %v1282
      %v1299 = vpack.c.bf16 %v1285, %v1284
      %v1300 = vpack.c.bf16 %v1287, %v1286
      %v1301 = vpack.c.bf16 %v1289, %v1288
      %v1302 = vpack.c.bf16 %v1291, %v1290
      %v1303 = vpack.c.bf16 %v1293, %v1292
      %v1304 = vpack.c.bf16 %v1295, %v1294
      %v1305 = vpack.c.bf16 %v1297, %v1296
      %v1314 = vunpack.c.l.b16 %v1298
      %v1315 = vunpack.c.h.b16 %v1298
      %v1316 = vunpack.c.l.b16 %v1299
      %v1317 = vunpack.c.h.b16 %v1299
      %v1318 = vunpack.c.l.b16 %v1300
      %v1319 = vunpack.c.h.b16 %v1300
      %v1320 = vunpack.c.l.b16 %v1301
      %v1321 = vunpack.c.h.b16 %v1301
      %v1322 = vunpack.c.l.b16 %v1302
      %v1323 = vunpack.c.h.b16 %v1302
      %v1324 = vunpack.c.l.b16 %v1303
      %v1325 = vunpack.c.h.b16 %v1303
      %v1326 = vunpack.c.l.b16 %v1304
      %v1327 = vunpack.c.h.b16 %v1304
      %v1328 = vunpack.c.l.b16 %v1305
      %v1329 = vunpack.c.h.b16 %v1305
      %v1330 = vpack.c.b16 %v1314, %v1314
      %v1331 = vpack.c.b16 %v1315, %v1315
      %v1332 = vpack.c.b16 %v1316, %v1316
      %v1333 = vpack.c.b16 %v1317, %v1317
      %v1334 = vpack.c.b16 %v1318, %v1318
      %v1335 = vpack.c.b16 %v1319, %v1319
      %v1336 = vpack.c.b16 %v1320, %v1320
      %v1337 = vpack.c.b16 %v1321, %v1321
      %v1338 = vpack.c.b16 %v1322, %v1322
      %v1339 = vpack.c.b16 %v1323, %v1323
      %v1340 = vpack.c.b16 %v1324, %v1324
      %v1341 = vpack.c.b16 %v1325, %v1325
      %v1342 = vpack.c.b16 %v1326, %v1326
      %v1343 = vpack.c.b16 %v1327, %v1327
      %v1344 = vpack.c.b16 %v1328, %v1328
      %v1345 = vpack.c.b16 %v1329, %v1329
      %vm1362 = vcmask 27648
      %1363 = vst.msk [vmem:[%s235] sm:$0xf] %vm1362, %v1330
      %1364 = vst.msk [vmem:[%s235 + $0x4] sm:$0xf] %vm1362, %v1331
      %1365 = vst.msk [vmem:[%s235 + $0x8] sm:$0xf] %vm1362, %v1332
      %1366 = vst.msk [vmem:[%s235 + $0xc] sm:$0xf] %vm1362, %v1333
      %1367 = vst.msk [vmem:[%s235 + $0x10] sm:$0xf] %vm1362, %v1334
      %1368 = vst.msk [vmem:[%s235 + $0x14] sm:$0xf] %vm1362, %v1335
      %1369 = vst.msk [vmem:[%s235 + $0x18] sm:$0xf] %vm1362, %v1336
      %1370 = vst.msk [vmem:[%s235 + $0x1c] sm:$0xf] %vm1362, %v1337
      %1371 = vst.msk [vmem:[%s235 + $0x20] sm:$0xf] %vm1362, %v1338
      %1372 = vst.msk [vmem:[%s235 + $0x24] sm:$0xf] %vm1362, %v1339
      %1373 = vst.msk [vmem:[%s235 + $0x28] sm:$0xf] %vm1362, %v1340
      %1374 = vst.msk [vmem:[%s235 + $0x2c] sm:$0xf] %vm1362, %v1341
      %1375 = vst.msk [vmem:[%s235 + $0x30] sm:$0xf] %vm1362, %v1342
      %1376 = vst.msk [vmem:[%s235 + $0x34] sm:$0xf] %vm1362, %v1343
      %1377 = vst.msk [vmem:[%s235 + $0x38] sm:$0xf] %vm1362, %v1344
      %1378 = vst.msk [vmem:[%s235 + $0x3c] sm:$0xf] %vm1362, %v1345
      %v1379 = vsel %vm323, %v1282, 0.0
      %v1380 = vsel %vm323, %v1283, 0.0
      %v1381 = vadd.f32 %v1379, %v1380
      %v1382 = vsel %vm323, %v1284, 0.0
      %v1383 = vadd.f32 %v1381, %v1382
      %v1384 = vsel %vm323, %v1285, 0.0
      %v1385 = vadd.f32 %v1383, %v1384
      %v1386 = vsel %vm323, %v1286, 0.0
      %v1387 = vadd.f32 %v1385, %v1386
      %v1388 = vsel %vm323, %v1287, 0.0
      %v1389 = vadd.f32 %v1387, %v1388
      %v1390 = vsel %vm323, %v1288, 0.0
      %v1391 = vadd.f32 %v1389, %v1390
      %v1392 = vsel %vm323, %v1289, 0.0
      %v1393 = vadd.f32 %v1391, %v1392
      %v1394 = vsel %vm323, %v1290, 0.0
      %v1395 = vadd.f32 %v1393, %v1394
      %v1396 = vsel %vm323, %v1291, 0.0
      %v1397 = vadd.f32 %v1395, %v1396
      %v1398 = vsel %vm323, %v1292, 0.0
      %v1399 = vadd.f32 %v1397, %v1398
      %v1400 = vsel %vm323, %v1293, 0.0
      %v1401 = vadd.f32 %v1399, %v1400
      %v1402 = vsel %vm323, %v1294, 0.0
      %v1403 = vadd.f32 %v1401, %v1402
      %v1404 = vsel %vm323, %v1295, 0.0
      %v1405 = vadd.f32 %v1403, %v1404
      %v1406 = vsel %vm323, %v1296, 0.0
      %v1407 = vadd.f32 %v1405, %v1406
      %v1408 = vsel %vm323, %v1297, 0.0
      %v1409 = vadd.f32 %v1407, %v1408
      %v1410 = vrot.slane %v1409, 4
      %v1411 = vadd.f32 %v1409, %v1410
      %v1412 = vrot.slane %v1411, 2
      %v1413 = vadd.f32 %v1411, %v1412
      %v1414 = vrot.slane %v1413, 1
      %v1415 = vadd.f32 %v1413, %v1414
      %v1416 = vmul.f32 %v1415, 0.0078125
      %v1417 = vsub.f32 %v1282, %v1416
      %v1418 = vsub.f32 %v1283, %v1416
      %v1419 = vsub.f32 %v1284, %v1416
      %v1420 = vsub.f32 %v1285, %v1416
      %v1421 = vsub.f32 %v1286, %v1416
      %v1422 = vsub.f32 %v1287, %v1416
      %v1423 = vsub.f32 %v1288, %v1416
      %v1424 = vsub.f32 %v1289, %v1416
      %v1425 = vsub.f32 %v1290, %v1416
      %v1426 = vsub.f32 %v1291, %v1416
      %v1427 = vsub.f32 %v1292, %v1416
      %v1428 = vsub.f32 %v1293, %v1416
      %v1429 = vsub.f32 %v1294, %v1416
      %v1430 = vsub.f32 %v1295, %v1416
      %v1431 = vsub.f32 %v1296, %v1416
      %v1432 = vsub.f32 %v1297, %v1416
      %vm1433 = vcmask 24576
      %1434 = vst.msk [vmem:[%s238] sm:$0x1] %vm1433, %v1415
      %v1435 = vmul.f32 %v1417, %v1417
      %v1436 = vmul.f32 %v1418, %v1418
      %v1437 = vmul.f32 %v1419, %v1419
      %v1438 = vmul.f32 %v1420, %v1420
      %v1439 = vmul.f32 %v1421, %v1421
      %v1440 = vmul.f32 %v1422, %v1422
      %v1441 = vmul.f32 %v1423, %v1423
      %v1442 = vmul.f32 %v1424, %v1424
      %v1443 = vmul.f32 %v1425, %v1425
      %v1444 = vmul.f32 %v1426, %v1426
      %v1445 = vmul.f32 %v1427, %v1427
      %v1446 = vmul.f32 %v1428, %v1428
      %v1447 = vmul.f32 %v1429, %v1429
      %v1448 = vmul.f32 %v1430, %v1430
      %v1449 = vmul.f32 %v1431, %v1431
      %v1450 = vmul.f32 %v1432, %v1432
      %v1451 = vsel %vm323, %v1435, 0.0
      %v1452 = vsel %vm323, %v1436, 0.0
      %v1453 = vadd.f32 %v1451, %v1452
      %v1454 = vsel %vm323, %v1437, 0.0
      %v1455 = vadd.f32 %v1453, %v1454
      %v1456 = vsel %vm323, %v1438, 0.0
      %v1457 = vadd.f32 %v1455, %v1456
      %v1458 = vsel %vm323, %v1439, 0.0
      %v1459 = vadd.f32 %v1457, %v1458
      %v1460 = vsel %vm323, %v1440, 0.0
      %v1461 = vadd.f32 %v1459, %v1460
      %v1462 = vsel %vm323, %v1441, 0.0
      %v1463 = vadd.f32 %v1461, %v1462
      %v1464 = vsel %vm323, %v1442, 0.0
      %v1465 = vadd.f32 %v1463, %v1464
      %v1466 = vsel %vm323, %v1443, 0.0
      %v1467 = vadd.f32 %v1465, %v1466
      %v1468 = vsel %vm323, %v1444, 0.0
      %v1469 = vadd.f32 %v1467, %v1468
      %v1470 = vsel %vm323, %v1445, 0.0
      %v1471 = vadd.f32 %v1469, %v1470
      %v1472 = vsel %vm323, %v1446, 0.0
      %v1473 = vadd.f32 %v1471, %v1472
      %v1474 = vsel %vm323, %v1447, 0.0
      %v1475 = vadd.f32 %v1473, %v1474
      %v1476 = vsel %vm323, %v1448, 0.0
      %v1477 = vadd.f32 %v1475, %v1476
      %v1478 = vsel %vm323, %v1449, 0.0
      %v1479 = vadd.f32 %v1477, %v1478
      %v1480 = vsel %vm323, %v1450, 0.0
      %v1481 = vadd.f32 %v1479, %v1480
      %v1482 = vrot.slane %v1481, 4
      %v1483 = vadd.f32 %v1481, %v1482
      %v1484 = vrot.slane %v1483, 2
      %v1485 = vadd.f32 %v1483, %v1484
      %v1486 = vrot.slane %v1485, 1
      %v1487 = vadd.f32 %v1485, %v1486
      %1488 = vst.msk [vmem:[%s241] sm:$0x1] %vm1433, %v1487
      %p1489 = scmp.lt.s32.totalorder %s17, 3
      %s1490 = scalar_select %p1489, %s17, 3
      %s1491 = smul.addr %s1490, 16
      %s1492 = smul.addr %s1491, 4
      %s1493 = scalar_lea.vmem %s3, %s1492
      %p1494 = scmp.lt.s32.totalorder %s17, 3
      %s1495 = scalar_select %p1494, %s17, 3
      %s1496 = scalar_lea.vmem %s4, %s1495
      %p1497 = scmp.lt.s32.totalorder %s17, 3
      %s1498 = scalar_select %p1497, %s17, 3
      %s1499 = scalar_lea.vmem %s5, %s1498
      // Predicated region
      $region33: #{_forward.5} parent=31 // pred_check
        %p1500 = pneg %p103
      $region34: #{_forward.5} parent=31 // pred_check_branch
        %1502 = sbr.rel (%p1500) target = $region36
      $region35: #{_forward.5} parent=31 // pred_region
        _
      $region36: #{_forward.5} parent=31 // pred_fallthru
        _
      // Predicated region
      $region37: #{_forward.5} parent=31 // pred_check
        %p1503 = pneg %p129
      $region38: #{_forward.5} parent=31 // pred_check_branch
        %1505 = sbr.rel (%p1503) target = $region40
      $region39: #{_forward.5} parent=31 // pred_region
        _
      $region40: #{_forward.5} parent=31 // pred_fallthru
        _
      // Predicated region
      $region41: #{_forward.5} parent=31 // pred_check
        %p1506 = pneg %p155
      $region42: #{_forward.5} parent=31 // pred_check_branch
        %1508 = sbr.rel (%p1506) target = $region44
      $region43: #{_forward.5} parent=31 // pred_region
        _
      $region44: #{_forward.5} parent=31 // pred_fallthru
        _
    $region32: #{_forward.5} parent=5 // pred_fallthru
      _
    %p1509 = scmp.le.s32.totalorder 2, %s12
    // Predicated region
    $region45: #{_forward.5} parent=5 // pred_check
      %p1510 = pneg %p1509
    $region46: #{_forward.5} parent=5 // pred_check_branch
      %1512 = sbr.rel (%p1510) target = $region48
    $region47: #{_forward.5} parent=5 // pred_region
      %s1513 = ssub.s32 %s12, 2
      // Predicated region
      $region49: #{_forward.5} parent=47 // pred_check
        %p1514 = pneg %p109
      $region50: #{_forward.5} parent=47 // pred_check_branch
        %1516 = sbr.rel (%p1514) target = $region52
      $region51: #{_forward.5} parent=47 // pred_region
        %p1517 = scmp.lt.s32.totalorder %s18, 3
        %s1518 = scalar_select %p1517, %s18, 3
        %s1519 = smul.addr %s1518, 16
        %s1520 = smul.addr %s1519, 4
        %s1521 = scalar_lea.vmem %s3, %s1520
      $region52: #{_forward.5} parent=47 // pred_fallthru
        _
      // Predicated region
      $region53: #{_forward.5} parent=47 // pred_check
        %p1522 = pneg %p135
      $region54: #{_forward.5} parent=47 // pred_check_branch
        %1524 = sbr.rel (%p1522) target = $region56
      $region55: #{_forward.5} parent=47 // pred_region
        %p1525 = scmp.lt.s32.totalorder %s18, 3
        %s1526 = scalar_select %p1525, %s18, 3
        %s1527 = scalar_lea.vmem %s4, %s1526
      $region56: #{_forward.5} parent=47 // pred_fallthru
        _
      // Predicated region
      $region57: #{_forward.5} parent=47 // pred_check
        %p1528 = pneg %p161
      $region58: #{_forward.5} parent=47 // pred_check_branch
        %1530 = sbr.rel (%p1528) target = $region60
      $region59: #{_forward.5} parent=47 // pred_region
        %p1531 = scmp.lt.s32.totalorder %s18, 3
        %s1532 = scalar_select %p1531, %s18, 3
        %s1533 = scalar_lea.vmem %s5, %s1532
      $region60: #{_forward.5} parent=47 // pred_fallthru
        _
    $region48: #{_forward.5} parent=5 // pred_fallthru
      _
  $region6: #{_forward.5} parent=0 // loop_footer
    %s16 = sadd.s32 1, %s12
  $region7: #{_forward.5} parent=0 // loop_footer_branch
    %11 = sbr.rel target = $region3
  $region8: #{_forward.5} parent=0 // loop_exit
    _

</llo_original>
